<compile_context>
chip_gen: v5e
topology: v5e:2x2
jax: 0.10.0
libtpu: 0.0.40
codegen_flags: <defaults>
</compile_context>

<pallas_src>
import functools

import numpy as np
import jax
import jax.numpy as jnp
from jax.experimental import pallas as pl
from jax.experimental.pallas import tpu as pltpu

C_PAD = 256                      # every channel dim padded to 256 lanes
NUM_LAYERS = 10                  # stem + 8 blocks + final linear
BLOCK_STRIDES = (1, 2, 1, 2, 1, 2, 1, 2)   # hidden_layer_num=[2,2,2,2]


# ---------------------------------------------------------------------------
# Fused kernel: one grid step == one batch element, whole network in VMEM.
# ---------------------------------------------------------------------------
def _fused_kernel(x_ref, w_ref, b_ref, o_ref, *, hw):
    # x_ref : (1, HW, 256)  bf16   rows pre-permuted (see wrapper)
    # w_ref : (10, 256, 256) bf16  zero-padded weight stack (resident)
    # b_ref : (10, 1, 256)  f32    zero-padded bias stack   (resident)
    # o_ref : (1, 8, 256)   f32    sigmoid(logits) broadcast over 8 sublanes
    x = x_ref[0]                                              # (HW, 256) bf16

    # stem: nn.Conv2d(in_ch, 16, 1, 1, 0) -> 1x1 conv == matmul, no activation
    y = jnp.dot(x, w_ref[0], preferred_element_type=jnp.float32) + b_ref[0]

    rows = hw
    for i, stride in enumerate(BLOCK_STRIDES, start=1):
        if stride == 2:
            # stride-2 1x1 conv: keep the (::2, ::2) spatial grid, which is the
            # leading quarter of the rows thanks to the wrapper-side permutation.
            rows //= 4
            y = y[:rows, :]
        y = jnp.dot(y.astype(jnp.bfloat16), w_ref[i],
                    preferred_element_type=jnp.float32) + b_ref[i]
        y = jnp.maximum(y, 0.0)                               # ReLU in f32

    # adaptive_avg_pool2d((1,1)): mean over the surviving spatial positions
    pooled = jnp.mean(y, axis=0, keepdims=True)               # (1, 256) f32

    # sigmoid(linear(x))
    logits = jnp.dot(pooled.astype(jnp.bfloat16), w_ref[NUM_LAYERS - 1],
                     preferred_element_type=jnp.float32) + b_ref[NUM_LAYERS - 1]
    probs = jax.nn.sigmoid(logits)                            # f32 epilogue

    o_ref[0] = jnp.broadcast_to(probs, (8, C_PAD)).astype(o_ref.dtype)


# ---------------------------------------------------------------------------
# Row permutation so that every stride-2 subsample is a contiguous prefix.
# Key = bits of (h, w) interleaved, least-significant bits most significant:
# first 1/4 of rows  <=> h%2==0 & w%2==0, recursively at every level.
# ---------------------------------------------------------------------------
def _subsample_friendly_perm(h, w):
    nb = h.bit_length() - 1
    assert (1 << nb) == h and h == w, "spatial dims must be equal powers of two"
    hh, ww = np.meshgrid(np.arange(h), np.arange(w), indexing="ij")
    key = np.zeros((h, w), dtype=np.int64)
    for t in range(nb):
        shift = 2 * (nb - 1 - t)
        key |= (((hh >> t) & 1) << (shift + 1)) | (((ww >> t) & 1) << shift)
    return np.argsort(key.reshape(-1), kind="stable").astype(np.int32)


# ---------------------------------------------------------------------------
# Parameters: logical channel plan, zero-padded and stacked to (10, 256, 256).
#   stem: in_ch->16 | blocks: 16->16,16->32,32->32,32->64,64->64,64->128,
#   128->128,128->256 | linear: 256->classes
# ---------------------------------------------------------------------------
def init_params(in_channel, classes, key):
    chan_plan = [(in_channel, 16)]
    cin = 16
    for s in BLOCK_STRIDES:
        cout = cin * 2 if s == 2 else cin
        chan_plan.append((cin, cout))
        cin = cout
    chan_plan.append((256, classes))
    assert len(chan_plan) == NUM_LAYERS

    keys = jax.random.split(key, NUM_LAYERS)
    w_stack = np.zeros((NUM_LAYERS, C_PAD, C_PAD), np.float32)
    b_stack = np.zeros((NUM_LAYERS, 1, C_PAD), np.float32)
    for i, ((ci, co), k) in enumerate(zip(chan_plan, keys)):
        kw, kb = jax.random.split(k)
        scale = 1.0 / np.sqrt(ci)
        w = jax.random.normal(kw, (ci, co), jnp.float32) * scale
        b = jax.random.uniform(kb, (co,), jnp.float32, -scale, scale)
        w_stack[i, :ci, :co] = np.asarray(w)
        b_stack[i, 0, :co] = np.asarray(b)
    return jnp.asarray(w_stack, jnp.bfloat16), jnp.asarray(b_stack, jnp.float32)


# ---------------------------------------------------------------------------
# Forward pass (matches EasyModel.forward).
# ---------------------------------------------------------------------------
def easy_model_forward(x_nchw, params, classes):
    n, c_in, h, w = x_nchw.shape
    hw = h * w
    num_s2 = sum(1 for s in BLOCK_STRIDES if s == 2)
    assert hw % (4 ** num_s2) == 0 and hw >= 4 ** num_s2

    # NCHW -> (N, HW, C) in the subsample-friendly row order, channel-padded bf16
    x = jnp.transpose(x_nchw, (0, 2, 3, 1)).reshape(n, hw, c_in)
    perm = jnp.asarray(_subsample_friendly_perm(h, w))
    x = jnp.take(x, perm, axis=1)
    x = jnp.pad(x, ((0, 0), (0, 0), (0, C_PAD - c_in))).astype(jnp.bfloat16)

    w_stack, b_stack = params
    kern = functools.partial(_fused_kernel, hw=hw)

    out = pl.pallas_call(
        kern,
        out_shape=jax.ShapeDtypeStruct((n, 8, C_PAD), jnp.float32),
        grid=(n,),
        in_specs=[
            pl.BlockSpec((1, hw, C_PAD), lambda i: (i, 0, 0)),
            pl.BlockSpec((NUM_LAYERS, C_PAD, C_PAD), lambda i: (0, 0, 0)),
            pl.BlockSpec((NUM_LAYERS, 1, C_PAD), lambda i: (0, 0, 0)),
        ],
        out_specs=pl.BlockSpec((1, 8, C_PAD), lambda i: (i, 0, 0)),
        compiler_params=pltpu.CompilerParams(
            dimension_semantics=("parallel",),
            vmem_limit_bytes=32 * 1024 * 1024,
        ),
    )(x, w_stack, b_stack)
    return out[:, 0, :classes]


# ---------------------------------------------------------------------------
# Pure-JAX reference (same bf16-in / f32-accumulate math, real spatial slicing)
# ---------------------------------------------------------------------------
def reference_forward(x_nchw, params, classes):
    w_stack, b_stack = params
    x = jnp.transpose(x_nchw, (0, 2, 3, 1))
    x = jnp.pad(x, ((0, 0), (0, 0), (0, 0), (0, C_PAD - x.shape[-1])))
    x = x.astype(jnp.bfloat16)
    y = jnp.einsum("nhwc,cd->nhwd", x, w_stack[0],
                   preferred_element_type=jnp.float32) + b_stack[0, 0]
    for i, s in enumerate(BLOCK_STRIDES, start=1):
        if s == 2:
            y = y[:, ::2, ::2, :]
        y = jnp.einsum("nhwc,cd->nhwd", y.astype(jnp.bfloat16), w_stack[i],
                       preferred_element_type=jnp.float32) + b_stack[i, 0]
        y = jnp.maximum(y, 0.0)
    pooled = jnp.mean(y, axis=(1, 2))
    logits = jnp.dot(pooled.astype(jnp.bfloat16), w_stack[NUM_LAYERS - 1],
                     preferred_element_type=jnp.float32) + b_stack[NUM_LAYERS - 1, 0]
    return jax.nn.sigmoid(logits)[:, :classes]


if __name__ == "__main__":
    in_channel = 4
    classes = 10
    batch, spatial = 2, 16   # 16x16 -> four stride-2 blocks -> 1x1 spatial

    key = jax.random.PRNGKey(0)
    kx, kp = jax.random.split(key)
    x = jax.random.normal(kx, (batch, in_channel, spatial, spatial), jnp.float32)
    params = init_params(in_channel, classes, kp)

    out = jax.block_until_ready(easy_model_forward(x, params, classes))
    assert out.shape == (batch, classes), out.shape
    assert bool(jnp.all(jnp.isfinite(out)))
    assert bool(jnp.all((out >= 0.0) & (out <= 1.0)))

    ref = jax.block_until_ready(reference_forward(x, params, classes))
    np.testing.assert_allclose(np.asarray(out), np.asarray(ref), atol=1e-2)

    print("KERNEL_OK")
</pallas_src>

<mosaic_0001>
module attributes {stable_mosaic.version = 11 : i64} {
  func.func @_fused_kernel(%arg0: i32, %arg1: memref<1x256x256xbf16, #tpu.memory_space<vmem>>, %arg2: memref<10x256x256xbf16, #tpu.memory_space<vmem>>, %arg3: memref<10x1x256xf32, #tpu.memory_space<vmem>>, %arg4: memref<1x8x256xf32, #tpu.memory_space<vmem>>) attributes {dimension_semantics = [#tpu.dimension_semantics<parallel>], iteration_bounds = array<i64: 2>, scalar_prefetch = 0 : i64, scratch_operands = 0 : i64, tpu.core_type = #tpu.core_type<tc>, window_params = [{transform_indices = @transform_0, window_bounds = array<i64: 1, 256, 256>}, {pipeline_mode = #tpu.pipeline_mode<synchronous>, transform_indices = @transform_1, window_bounds = array<i64: 10, 256, 256>}, {pipeline_mode = #tpu.pipeline_mode<synchronous>, transform_indices = @transform_2, window_bounds = array<i64: 10, 1, 256>}, {transform_indices = @transform_3, window_bounds = array<i64: 1, 8, 256>}]} {
    %c0 = arith.constant 0 : index
    %c0_0 = arith.constant 0 : index
    %c0_1 = arith.constant 0 : index
    %0 = vector.load %arg1[%c0, %c0_0, %c0_1] : memref<1x256x256xbf16, #tpu.memory_space<vmem>>, vector<1x256x256xbf16>
    %1 = vector.shape_cast %0 : vector<1x256x256xbf16> to vector<256x256xbf16>
    %c0_2 = arith.constant 0 : index
    %c0_3 = arith.constant 0 : index
    %c0_4 = arith.constant 0 : index
    %2 = vector.load %arg2[%c0_2, %c0_3, %c0_4] : memref<10x256x256xbf16, #tpu.memory_space<vmem>>, vector<1x256x256xbf16>
    %3 = vector.shape_cast %2 : vector<1x256x256xbf16> to vector<256x256xbf16>
    %cst = arith.constant dense<0.000000e+00> : vector<256x256xf32>
    %4 = tpu.matmul %1, %3, %cst {dimension_numbers = #tpu.dot_dimension_numbers<[1], [0], [0], [1], [0, 0, 1, 1], [], []>} : vector<256x256xbf16>, vector<256x256xbf16>, vector<256x256xf32> -> vector<256x256xf32>
    %c0_5 = arith.constant 0 : index
    %c0_6 = arith.constant 0 : index
    %c0_7 = arith.constant 0 : index
    %5 = vector.load %arg3[%c0_5, %c0_6, %c0_7] : memref<10x1x256xf32, #tpu.memory_space<vmem>>, vector<1x1x256xf32>
    %6 = vector.shape_cast %5 : vector<1x1x256xf32> to vector<1x256xf32>
    %7 = vector.broadcast %6 : vector<1x256xf32> to vector<256x256xf32>
    %8 = arith.addf %4, %7 : vector<256x256xf32>
    %9 = arith.truncf %8 : vector<256x256xf32> to vector<256x256xbf16>
    %c1 = arith.constant 1 : index
    %c0_8 = arith.constant 0 : index
    %c0_9 = arith.constant 0 : index
    %10 = vector.load %arg2[%c1, %c0_8, %c0_9] : memref<10x256x256xbf16, #tpu.memory_space<vmem>>, vector<1x256x256xbf16>
    %11 = vector.shape_cast %10 : vector<1x256x256xbf16> to vector<256x256xbf16>
    %cst_10 = arith.constant dense<0.000000e+00> : vector<256x256xf32>
    %12 = tpu.matmul %9, %11, %cst_10 {dimension_numbers = #tpu.dot_dimension_numbers<[1], [0], [0], [1], [0, 0, 1, 1], [], []>} : vector<256x256xbf16>, vector<256x256xbf16>, vector<256x256xf32> -> vector<256x256xf32>
    %c1_11 = arith.constant 1 : index
    %c0_12 = arith.constant 0 : index
    %c0_13 = arith.constant 0 : index
    %13 = vector.load %arg3[%c1_11, %c0_12, %c0_13] : memref<10x1x256xf32, #tpu.memory_space<vmem>>, vector<1x1x256xf32>
    %14 = vector.shape_cast %13 : vector<1x1x256xf32> to vector<1x256xf32>
    %15 = vector.broadcast %14 : vector<1x256xf32> to vector<256x256xf32>
    %16 = arith.addf %12, %15 : vector<256x256xf32>
    %cst_14 = arith.constant 0.000000e+00 : f32
    %17 = vector.broadcast %cst_14 : f32 to vector<256x256xf32>
    %18 = arith.maximumf %16, %17 : vector<256x256xf32>
    %19 = vector.extract_strided_slice %18 {offsets = [0, 0], sizes = [64, 256], strides = [1, 1]} : vector<256x256xf32> to vector<64x256xf32>
    %20 = arith.truncf %19 : vector<64x256xf32> to vector<64x256xbf16>
    %c2 = arith.constant 2 : index
    %c0_15 = arith.constant 0 : index
    %c0_16 = arith.constant 0 : index
    %21 = vector.load %arg2[%c2, %c0_15, %c0_16] : memref<10x256x256xbf16, #tpu.memory_space<vmem>>, vector<1x256x256xbf16>
    %22 = vector.shape_cast %21 : vector<1x256x256xbf16> to vector<256x256xbf16>
    %cst_17 = arith.constant dense<0.000000e+00> : vector<64x256xf32>
    %23 = tpu.matmul %20, %22, %cst_17 {dimension_numbers = #tpu.dot_dimension_numbers<[1], [0], [0], [1], [0, 0, 1, 1], [], []>} : vector<64x256xbf16>, vector<256x256xbf16>, vector<64x256xf32> -> vector<64x256xf32>
    %c2_18 = arith.constant 2 : index
    %c0_19 = arith.constant 0 : index
    %c0_20 = arith.constant 0 : index
    %24 = vector.load %arg3[%c2_18, %c0_19, %c0_20] : memref<10x1x256xf32, #tpu.memory_space<vmem>>, vector<1x1x256xf32>
    %25 = vector.shape_cast %24 : vector<1x1x256xf32> to vector<1x256xf32>
    %26 = vector.broadcast %25 : vector<1x256xf32> to vector<64x256xf32>
    %27 = arith.addf %23, %26 : vector<64x256xf32>
    %cst_21 = arith.constant 0.000000e+00 : f32
    %28 = vector.broadcast %cst_21 : f32 to vector<64x256xf32>
    %29 = arith.maximumf %27, %28 : vector<64x256xf32>
    %30 = arith.truncf %29 : vector<64x256xf32> to vector<64x256xbf16>
    %c3 = arith.constant 3 : index
    %c0_22 = arith.constant 0 : index
    %c0_23 = arith.constant 0 : index
    %31 = vector.load %arg2[%c3, %c0_22, %c0_23] : memref<10x256x256xbf16, #tpu.memory_space<vmem>>, vector<1x256x256xbf16>
    %32 = vector.shape_cast %31 : vector<1x256x256xbf16> to vector<256x256xbf16>
    %cst_24 = arith.constant dense<0.000000e+00> : vector<64x256xf32>
    %33 = tpu.matmul %30, %32, %cst_24 {dimension_numbers = #tpu.dot_dimension_numbers<[1], [0], [0], [1], [0, 0, 1, 1], [], []>} : vector<64x256xbf16>, vector<256x256xbf16>, vector<64x256xf32> -> vector<64x256xf32>
    %c3_25 = arith.constant 3 : index
    %c0_26 = arith.constant 0 : index
    %c0_27 = arith.constant 0 : index
    %34 = vector.load %arg3[%c3_25, %c0_26, %c0_27] : memref<10x1x256xf32, #tpu.memory_space<vmem>>, vector<1x1x256xf32>
    %35 = vector.shape_cast %34 : vector<1x1x256xf32> to vector<1x256xf32>
    %36 = vector.broadcast %35 : vector<1x256xf32> to vector<64x256xf32>
    %37 = arith.addf %33, %36 : vector<64x256xf32>
    %cst_28 = arith.constant 0.000000e+00 : f32
    %38 = vector.broadcast %cst_28 : f32 to vector<64x256xf32>
    %39 = arith.maximumf %37, %38 : vector<64x256xf32>
    %40 = vector.extract_strided_slice %39 {offsets = [0, 0], sizes = [16, 256], strides = [1, 1]} : vector<64x256xf32> to vector<16x256xf32>
    %41 = arith.truncf %40 : vector<16x256xf32> to vector<16x256xbf16>
    %c4 = arith.constant 4 : index
    %c0_29 = arith.constant 0 : index
    %c0_30 = arith.constant 0 : index
    %42 = vector.load %arg2[%c4, %c0_29, %c0_30] : memref<10x256x256xbf16, #tpu.memory_space<vmem>>, vector<1x256x256xbf16>
    %43 = vector.shape_cast %42 : vector<1x256x256xbf16> to vector<256x256xbf16>
    %cst_31 = arith.constant dense<0.000000e+00> : vector<16x256xf32>
    %44 = tpu.matmul %41, %43, %cst_31 {dimension_numbers = #tpu.dot_dimension_numbers<[1], [0], [0], [1], [0, 0, 1, 1], [], []>} : vector<16x256xbf16>, vector<256x256xbf16>, vector<16x256xf32> -> vector<16x256xf32>
    %c4_32 = arith.constant 4 : index
    %c0_33 = arith.constant 0 : index
    %c0_34 = arith.constant 0 : index
    %45 = vector.load %arg3[%c4_32, %c0_33, %c0_34] : memref<10x1x256xf32, #tpu.memory_space<vmem>>, vector<1x1x256xf32>
    %46 = vector.shape_cast %45 : vector<1x1x256xf32> to vector<1x256xf32>
    %47 = vector.broadcast %46 : vector<1x256xf32> to vector<16x256xf32>
    %48 = arith.addf %44, %47 : vector<16x256xf32>
    %cst_35 = arith.constant 0.000000e+00 : f32
    %49 = vector.broadcast %cst_35 : f32 to vector<16x256xf32>
    %50 = arith.maximumf %48, %49 : vector<16x256xf32>
    %51 = arith.truncf %50 : vector<16x256xf32> to vector<16x256xbf16>
    %c5 = arith.constant 5 : index
    %c0_36 = arith.constant 0 : index
    %c0_37 = arith.constant 0 : index
    %52 = vector.load %arg2[%c5, %c0_36, %c0_37] : memref<10x256x256xbf16, #tpu.memory_space<vmem>>, vector<1x256x256xbf16>
    %53 = vector.shape_cast %52 : vector<1x256x256xbf16> to vector<256x256xbf16>
    %cst_38 = arith.constant dense<0.000000e+00> : vector<16x256xf32>
    %54 = tpu.matmul %51, %53, %cst_38 {dimension_numbers = #tpu.dot_dimension_numbers<[1], [0], [0], [1], [0, 0, 1, 1], [], []>} : vector<16x256xbf16>, vector<256x256xbf16>, vector<16x256xf32> -> vector<16x256xf32>
    %c5_39 = arith.constant 5 : index
    %c0_40 = arith.constant 0 : index
    %c0_41 = arith.constant 0 : index
    %55 = vector.load %arg3[%c5_39, %c0_40, %c0_41] : memref<10x1x256xf32, #tpu.memory_space<vmem>>, vector<1x1x256xf32>
    %56 = vector.shape_cast %55 : vector<1x1x256xf32> to vector<1x256xf32>
    %57 = vector.broadcast %56 : vector<1x256xf32> to vector<16x256xf32>
    %58 = arith.addf %54, %57 : vector<16x256xf32>
    %cst_42 = arith.constant 0.000000e+00 : f32
    %59 = vector.broadcast %cst_42 : f32 to vector<16x256xf32>
    %60 = arith.maximumf %58, %59 : vector<16x256xf32>
    %61 = vector.extract_strided_slice %60 {offsets = [0, 0], sizes = [4, 256], strides = [1, 1]} : vector<16x256xf32> to vector<4x256xf32>
    %62 = arith.truncf %61 : vector<4x256xf32> to vector<4x256xbf16>
    %c6 = arith.constant 6 : index
    %c0_43 = arith.constant 0 : index
    %c0_44 = arith.constant 0 : index
    %63 = vector.load %arg2[%c6, %c0_43, %c0_44] : memref<10x256x256xbf16, #tpu.memory_space<vmem>>, vector<1x256x256xbf16>
    %64 = vector.shape_cast %63 : vector<1x256x256xbf16> to vector<256x256xbf16>
    %cst_45 = arith.constant dense<0.000000e+00> : vector<4x256xf32>
    %65 = tpu.matmul %62, %64, %cst_45 {dimension_numbers = #tpu.dot_dimension_numbers<[1], [0], [0], [1], [0, 0, 1, 1], [], []>} : vector<4x256xbf16>, vector<256x256xbf16>, vector<4x256xf32> -> vector<4x256xf32>
    %c6_46 = arith.constant 6 : index
    %c0_47 = arith.constant 0 : index
    %c0_48 = arith.constant 0 : index
    %66 = vector.load %arg3[%c6_46, %c0_47, %c0_48] : memref<10x1x256xf32, #tpu.memory_space<vmem>>, vector<1x1x256xf32>
    %67 = vector.shape_cast %66 : vector<1x1x256xf32> to vector<1x256xf32>
    %68 = vector.broadcast %67 : vector<1x256xf32> to vector<4x256xf32>
    %69 = arith.addf %65, %68 : vector<4x256xf32>
    %cst_49 = arith.constant 0.000000e+00 : f32
    %70 = vector.broadcast %cst_49 : f32 to vector<4x256xf32>
    %71 = arith.maximumf %69, %70 : vector<4x256xf32>
    %72 = arith.truncf %71 : vector<4x256xf32> to vector<4x256xbf16>
    %c7 = arith.constant 7 : index
    %c0_50 = arith.constant 0 : index
    %c0_51 = arith.constant 0 : index
    %73 = vector.load %arg2[%c7, %c0_50, %c0_51] : memref<10x256x256xbf16, #tpu.memory_space<vmem>>, vector<1x256x256xbf16>
    %74 = vector.shape_cast %73 : vector<1x256x256xbf16> to vector<256x256xbf16>
    %cst_52 = arith.constant dense<0.000000e+00> : vector<4x256xf32>
    %75 = tpu.matmul %72, %74, %cst_52 {dimension_numbers = #tpu.dot_dimension_numbers<[1], [0], [0], [1], [0, 0, 1, 1], [], []>} : vector<4x256xbf16>, vector<256x256xbf16>, vector<4x256xf32> -> vector<4x256xf32>
    %c7_53 = arith.constant 7 : index
    %c0_54 = arith.constant 0 : index
    %c0_55 = arith.constant 0 : index
    %76 = vector.load %arg3[%c7_53, %c0_54, %c0_55] : memref<10x1x256xf32, #tpu.memory_space<vmem>>, vector<1x1x256xf32>
    %77 = vector.shape_cast %76 : vector<1x1x256xf32> to vector<1x256xf32>
    %78 = vector.broadcast %77 : vector<1x256xf32> to vector<4x256xf32>
    %79 = arith.addf %75, %78 : vector<4x256xf32>
    %cst_56 = arith.constant 0.000000e+00 : f32
    %80 = vector.broadcast %cst_56 : f32 to vector<4x256xf32>
    %81 = arith.maximumf %79, %80 : vector<4x256xf32>
    %82 = vector.extract_strided_slice %81 {offsets = [0, 0], sizes = [1, 256], strides = [1, 1]} : vector<4x256xf32> to vector<1x256xf32>
    %83 = arith.truncf %82 : vector<1x256xf32> to vector<1x256xbf16>
    %c8 = arith.constant 8 : index
    %c0_57 = arith.constant 0 : index
    %c0_58 = arith.constant 0 : index
    %84 = vector.load %arg2[%c8, %c0_57, %c0_58] : memref<10x256x256xbf16, #tpu.memory_space<vmem>>, vector<1x256x256xbf16>
    %85 = vector.shape_cast %84 : vector<1x256x256xbf16> to vector<256x256xbf16>
    %cst_59 = arith.constant dense<0.000000e+00> : vector<1x256xf32>
    %86 = tpu.matmul %83, %85, %cst_59 {dimension_numbers = #tpu.dot_dimension_numbers<[1], [0], [0], [1], [0, 0, 1, 1], [], []>} : vector<1x256xbf16>, vector<256x256xbf16>, vector<1x256xf32> -> vector<1x256xf32>
    %c8_60 = arith.constant 8 : index
    %c0_61 = arith.constant 0 : index
    %c0_62 = arith.constant 0 : index
    %87 = vector.load %arg3[%c8_60, %c0_61, %c0_62] : memref<10x1x256xf32, #tpu.memory_space<vmem>>, vector<1x1x256xf32>
    %88 = vector.shape_cast %87 : vector<1x1x256xf32> to vector<1x256xf32>
    %89 = arith.addf %86, %88 : vector<1x256xf32>
    %cst_63 = arith.constant 0.000000e+00 : f32
    %90 = vector.broadcast %cst_63 : f32 to vector<1x256xf32>
    %91 = arith.maximumf %89, %90 : vector<1x256xf32>
    %cst_64 = arith.constant dense<0.000000e+00> : vector<256xf32>
    %92 = vector.multi_reduction <add>, %91, %cst_64 [0] : vector<1x256xf32> to vector<256xf32>
    %93 = vector.shape_cast %92 : vector<256xf32> to vector<1x256xf32>
    %cst_65 = arith.constant 1.000000e+00 : f32
    %94 = vector.broadcast %cst_65 : f32 to vector<1x256xf32>
    %95 = arith.divf %93, %94 : vector<1x256xf32>
    %96 = arith.truncf %95 : vector<1x256xf32> to vector<1x256xbf16>
    %c9 = arith.constant 9 : index
    %c0_66 = arith.constant 0 : index
    %c0_67 = arith.constant 0 : index
    %97 = vector.load %arg2[%c9, %c0_66, %c0_67] : memref<10x256x256xbf16, #tpu.memory_space<vmem>>, vector<1x256x256xbf16>
    %98 = vector.shape_cast %97 : vector<1x256x256xbf16> to vector<256x256xbf16>
    %cst_68 = arith.constant dense<0.000000e+00> : vector<1x256xf32>
    %99 = tpu.matmul %96, %98, %cst_68 {dimension_numbers = #tpu.dot_dimension_numbers<[1], [0], [0], [1], [0, 0, 1, 1], [], []>} : vector<1x256xbf16>, vector<256x256xbf16>, vector<1x256xf32> -> vector<1x256xf32>
    %c9_69 = arith.constant 9 : index
    %c0_70 = arith.constant 0 : index
    %c0_71 = arith.constant 0 : index
    %100 = vector.load %arg3[%c9_69, %c0_70, %c0_71] : memref<10x1x256xf32, #tpu.memory_space<vmem>>, vector<1x1x256xf32>
    %101 = vector.shape_cast %100 : vector<1x1x256xf32> to vector<1x256xf32>
    %102 = arith.addf %99, %101 : vector<1x256xf32>
    %103 = arith.negf %102 : vector<1x256xf32>
    %104 = math.exp %103 : vector<1x256xf32>
    %cst_72 = arith.constant 1.000000e+00 : f32
    %105 = vector.broadcast %cst_72 : f32 to vector<1x256xf32>
    %106 = arith.addf %105, %104 : vector<1x256xf32>
    %107 = arith.divf %105, %106 : vector<1x256xf32>
    %108 = vector.shape_cast %107 : vector<1x256xf32> to vector<1x256xf32>
    %109 = vector.broadcast %108 : vector<1x256xf32> to vector<8x256xf32>
    %c0_73 = arith.constant 0 : index
    %c0_74 = arith.constant 0 : index
    %c0_75 = arith.constant 0 : index
    %110 = vector.load %arg4[%c0_73, %c0_74, %c0_75] : memref<1x8x256xf32, #tpu.memory_space<vmem>>, vector<1x8x256xf32>
    %111 = vector.shape_cast %110 : vector<1x8x256xf32> to vector<8x256xf32>
    %112 = vector.shape_cast %109 : vector<8x256xf32> to vector<1x8x256xf32>
    tpu.vector_store %arg4[%c0_73, %c0_74, %c0_75], %112 {strides = array<i32>} : memref<1x8x256xf32, #tpu.memory_space<vmem>>, vector<1x8x256xf32>,
    return
  }
  func.func @transform_0(%arg0: i32) -> (i32, i32, i32) {
    %c0_i32 = arith.constant 0 : i32
    %c0_i32_0 = arith.constant 0 : i32
    %c0_i32_1 = arith.constant 0 : i32
    return %arg0, %c0_i32, %c0_i32_0 : i32, i32, i32
  }
  func.func @transform_1(%arg0: i32) -> (i32, i32, i32) {
    %c0_i32 = arith.constant 0 : i32
    %c0_i32_0 = arith.constant 0 : i32
    %c0_i32_1 = arith.constant 0 : i32
    %c0_i32_2 = arith.constant 0 : i32
    return %c0_i32, %c0_i32_0, %c0_i32_1 : i32, i32, i32
  }
  func.func @transform_2(%arg0: i32) -> (i32, i32, i32) {
    %c0_i32 = arith.constant 0 : i32
    %c0_i32_0 = arith.constant 0 : i32
    %c0_i32_1 = arith.constant 0 : i32
    %c0_i32_2 = arith.constant 0 : i32
    return %c0_i32, %c0_i32_0, %c0_i32_1 : i32, i32, i32
  }
  func.func @transform_3(%arg0: i32) -> (i32, i32, i32) {
    %c0_i32 = arith.constant 0 : i32
    %c0_i32_0 = arith.constant 0 : i32
    %c0_i32_1 = arith.constant 0 : i32
    return %arg0, %c0_i32, %c0_i32_0 : i32, i32, i32
  }
}

</mosaic_0001>

<llo_original>
// kernel: tpu_custom_call.1
$region0: #{tpu_custom_call.1}
  #allocation0 [shape = 'u32[]', space=smem, size = 0x4, offset = 0x4, fixed_abs, tag = 'smem constant byte address 0x4 - core index']
  #allocation1 [shape = 'u32[72,128]{1,0:T(1,128)}', space=vmem, size = 0x9000, scoped, tag = 'internal scratch']
  %s0 = inlined_call_operand.hbm [shape: bf16[2,256,256], index: 0, kind: input, shape index: {}]
  %s1 = inlined_call_operand.hbm [shape: bf16[10,256,256], index: 1, kind: input, shape index: {}]
  %s2 = inlined_call_operand.hbm [shape: f32[10,1,256], index: 2, kind: input, shape index: {}]
  %s3 = inlined_call_operand.hbm [shape: f32[2,8,256], index: 3, kind: output, shape index: {}]
  %s4 = sld [smem:[#allocation0]]
  $region57: #{tpu_custom_call.1} parent=0
    _
  %s6 = ssub.s32 1, %s4
  %s7 = scalar_select 0, %s6, %s4
  $region1: #{tpu_custom_call.1} parent=0
    #allocation2 [shape = 'u8[262144]{0}', space=vmem, size = 0x40000, scoped, tag = 'input window, operand 0']
    #allocation3 [shape = 's32[2]{0}', space=sflag, size = 0x8, scoped, tag = 'scoped memory for tpu_custom_call.1']
    #allocation4 [shape = 's32[2]{0}', space=sflag, size = 0x8, scoped, tag = 'scoped memory for tpu_custom_call.1']
    #allocation5 [shape = 'u8[1310720]{0}', space=vmem, size = 0x140000, scoped, tag = 'input window, operand 1, single buffered']
    #allocation6 [shape = 's32[1]{0}', space=sflag, size = 0x4, scoped, tag = 'scoped memory for tpu_custom_call.1']
    #allocation7 [shape = 'u8[10240]{0}', space=vmem, size = 0x2800, scoped, tag = 'input window, operand 2, single buffered']
    #allocation8 [shape = 'u8[16384]{0}', space=vmem, size = 0x4000, scoped, tag = 'output window, operand 0']
    %8 = vsyncpa [#allocation3], 0
    %s9 = scalar_lea.sflag [#allocation3], 1
    %10 = vsyncpa %s9, 0
    %11 = vsyncpa [#allocation6], 0
    %12 = vsyncpa [#allocation4], 0
    %s13 = scalar_lea.sflag [#allocation4], 1
    %14 = vsyncpa %s13, 0
    loop: start=0, step=1, limit=4
    $region2: #{tpu_custom_call.1} parent=1 // loop_pre_header
      _
    $region3: #{tpu_custom_call.1} parent=1 // loop_header
      %s16 = sphi 0, %s20
      %p17 = scmp.ge.s32.totalorder %s16, 4
      %s26 = sphi 0, %s28
      %s29 = sphi 0, %s26
      %s30 = sphi 0, %s29
      %s46 = sphi 0, %s30
      %s50 = sphi 0, %s50
      %s52 = sphi 0, %s50
      %s53 = sphi 0, %s52
      %s67 = sphi 0, %s53
      %s71 = sphi 0, %s71
      %s73 = sphi 0, %s71
      %s74 = sphi 0, %s73
      %s88 = sphi 0, %s74
      %s94 = sphi 0, %s96
      %s97 = sphi 0, %s94
      %s98 = sphi 0, %s97
      %s114 = sphi 0, %s98
    $region4: #{tpu_custom_call.1} parent=1 // loop_header_branch
      %19 = sbr.rel (%p17) target = $region8
    $region5: #{tpu_custom_call.1} parent=1 // loop_body
      %s21 = ssub.s32 %s16, 1
      %s22 = ssub.s32 %s16, 2
      %s23 = sadd.s32 %s16, 1
      %s24 = ssub.s32 %s16, %s23
      %p25 = scmp.eq.s32.totalorder %s24, 0
      %s27 = sadd.s32 %s26, 1
      %s28 = scalar_select %p25, %s26, %s27
      %p31 = pneg %p25
      %p32 = scmp.eq.s32.totalorder %s16, 1
      %p33 = por %p31, %p32
      %p34 = scmp.ne.s32.totalorder %s26, %s29
      %p35 = scmp.eq.s32.totalorder %s16, 0
      %p36 = por %p34, %p35
      %p37 = scmp.ne.s32.totalorder %s26, %s29
      %p38 = scmp.eq.s32.totalorder %s21, 1
      %p39 = por %p37, %p38
      %p40 = scmp.ne.s32.totalorder %s29, %s30
      %p41 = scmp.eq.s32.totalorder %s21, 0
      %p42 = por %p40, %p41
      %p43 = scmp.ne.s32.totalorder %s29, %s30
      %p44 = scmp.eq.s32.totalorder %s22, 1
      %p45 = por %p43, %p44
      %p47 = scmp.ne.s32.totalorder %s30, %s46
      %p48 = scmp.eq.s32.totalorder %s22, 0
      %p49 = por %p47, %p48
      %s51 = sadd.s32 %s50, 1
      %p54 = scmp.eq.s32.totalorder %s16, 1
      %p55 = scmp.ne.s32.totalorder %s50, %s52
      %p56 = scmp.eq.s32.totalorder %s16, 0
      %p57 = por %p55, %p56
      %p58 = scmp.ne.s32.totalorder %s50, %s52
      %p59 = scmp.eq.s32.totalorder %s21, 1
      %p60 = por %p58, %p59
      %p61 = scmp.ne.s32.totalorder %s52, %s53
      %p62 = scmp.eq.s32.totalorder %s21, 0
      %p63 = por %p61, %p62
      %p64 = scmp.ne.s32.totalorder %s52, %s53
      %p65 = scmp.eq.s32.totalorder %s22, 1
      %p66 = por %p64, %p65
      %p68 = scmp.ne.s32.totalorder %s53, %s67
      %p69 = scmp.eq.s32.totalorder %s22, 0
      %p70 = por %p68, %p69
      %s72 = sadd.s32 %s71, 1
      %p75 = scmp.eq.s32.totalorder %s16, 1
      %p76 = scmp.ne.s32.totalorder %s71, %s73
      %p77 = scmp.eq.s32.totalorder %s16, 0
      %p78 = por %p76, %p77
      %p79 = scmp.ne.s32.totalorder %s71, %s73
      %p80 = scmp.eq.s32.totalorder %s21, 1
      %p81 = por %p79, %p80
      %p82 = scmp.ne.s32.totalorder %s73, %s74
      %p83 = scmp.eq.s32.totalorder %s21, 0
      %p84 = por %p82, %p83
      %p85 = scmp.ne.s32.totalorder %s73, %s74
      %p86 = scmp.eq.s32.totalorder %s22, 1
      %p87 = por %p85, %p86
      %p89 = scmp.ne.s32.totalorder %s74, %s88
      %p90 = scmp.eq.s32.totalorder %s22, 0
      %p91 = por %p89, %p90
      %s92 = ssub.s32 %s16, %s23
      %p93 = scmp.eq.s32.totalorder %s92, 0
      %s95 = sadd.s32 %s94, 1
      %s96 = scalar_select %p93, %s94, %s95
      %p99 = pneg %p93
      %p100 = scmp.eq.s32.totalorder %s16, 1
      %p101 = por %p99, %p100
      %p102 = scmp.ne.s32.totalorder %s94, %s97
      %p103 = scmp.eq.s32.totalorder %s16, 0
      %p104 = por %p102, %p103
      %p105 = scmp.ne.s32.totalorder %s94, %s97
      %p106 = scmp.eq.s32.totalorder %s21, 1
      %p107 = por %p105, %p106
      %p108 = scmp.ne.s32.totalorder %s97, %s98
      %p109 = scmp.eq.s32.totalorder %s21, 0
      %p110 = por %p108, %p109
      %p111 = scmp.ne.s32.totalorder %s97, %s98
      %p112 = scmp.eq.s32.totalorder %s22, 1
      %p113 = por %p111, %p112
      %p115 = scmp.ne.s32.totalorder %s98, %s114
      %p116 = scmp.eq.s32.totalorder %s22, 0
      %p117 = por %p115, %p116
      %p118 = scmp.le.s32.totalorder 1, %s16
      %p119 = scmp.lt.s32.totalorder %s16, 3
      %p120 = pnand %p118, %p119
      %p121 = pneg %p120
      // Predicated region
      $region9: #{tpu_custom_call.1} parent=5 // pred_check
        _
      $region10: #{tpu_custom_call.1} parent=5 // pred_check_branch
        %123 = sbr.rel (%p120) target = $region12
      $region11: #{tpu_custom_call.1} parent=5 // pred_region
        %s124 = ssub.s32 %s16, 1
        // Predicated region
        $region13: #{tpu_custom_call.1} parent=11 // pred_check
          %p125 = pneg %p63
        $region14: #{tpu_custom_call.1} parent=11 // pred_check_branch
          %127 = sbr.rel (%p125) target = $region16
        $region15: #{tpu_custom_call.1} parent=11 // pred_region
          %129 = vsyncadd [#allocation6], 0
          %s130 = sshll.u32 %s1, 4
          %s131 = int_to_ptr.hbm [resolvable:$true] %s130
          %s132 = sshll.u32 [#allocation5], 4
          %s133 = int_to_ptr.vmem [resolvable:$true] %s132
          %138 = dma.hbm_to_vmem [thread:$0]  %s131, 40960, %s133, [#allocation6], 128, 128, 8
        $region16: #{tpu_custom_call.1} parent=11 // pred_fallthru
          _
        // Predicated region
        $region17: #{tpu_custom_call.1} parent=11 // pred_check
          %p139 = pneg %p84
        $region18: #{tpu_custom_call.1} parent=11 // pred_check_branch
          %141 = sbr.rel (%p139) target = $region20
        $region19: #{tpu_custom_call.1} parent=11 // pred_region
          %143 = vsyncadd [#allocation6], 0
          %s144 = sshll.u32 %s2, 4
          %s145 = int_to_ptr.hbm [resolvable:$true] %s144
          %s146 = sshll.u32 [#allocation7], 4
          %s147 = int_to_ptr.vmem [resolvable:$true] %s146
          %152 = dma.hbm_to_vmem [thread:$0]  %s145, 320, %s147, [#allocation6], 32, 32, 2
        $region20: #{tpu_custom_call.1} parent=11 // pred_fallthru
          _
      $region12: #{tpu_custom_call.1} parent=5 // pred_fallthru
        _
      %p153 = scmp.lt.s32.totalorder %s16, 2
      // Predicated region
      $region21: #{tpu_custom_call.1} parent=5 // pred_check
        %p154 = pneg %p153
      $region22: #{tpu_custom_call.1} parent=5 // pred_check_branch
        %156 = sbr.rel (%p154) target = $region24
      $region23: #{tpu_custom_call.1} parent=5 // pred_region
        // Predicated region
        $region25: #{tpu_custom_call.1} parent=23 // pred_check
          %p157 = pneg %p36
        $region26: #{tpu_custom_call.1} parent=23 // pred_check_branch
          %159 = sbr.rel (%p157) target = $region28
        $region27: #{tpu_custom_call.1} parent=23 // pred_region
          %s160 = sand.u32 %s26, 1
          %s161 = scalar_lea.sflag [#allocation3], %s160
          %s162 = sand.u32 %s26, 1
          %s163 = smul.addr %s162, 256
          %s164 = scalar_lea.vmem [#allocation2], %s163
          %166 = vsyncadd %s161, 0
          %s167 = smul.addr %s16, 64
          %s168 = smul.addr %s167, 4
          %s169 = scalar_lea.hbm %s0, %s168
          %s170 = sshll.u32 %s169, 4
          %s171 = int_to_ptr.hbm [resolvable:$true] %s170
          %s172 = sshll.u32 %s164, 4
          %s173 = int_to_ptr.vmem [resolvable:$true] %s172
          %178 = dma.hbm_to_vmem [thread:$0]  %s171, 4096, %s173, %s161, 128, 128, 8
        $region28: #{tpu_custom_call.1} parent=23 // pred_fallthru
          _
      $region24: #{tpu_custom_call.1} parent=5 // pred_fallthru
        _
      %p179 = scmp.le.s32.totalorder 1, %s16
      %p180 = scmp.lt.s32.totalorder %s16, 3
      %p181 = pnand %p179, %p180
      %p182 = pneg %p181
      // Predicated region
      $region29: #{tpu_custom_call.1} parent=5 // pred_check
        _
      $region30: #{tpu_custom_call.1} parent=5 // pred_check_branch
        %184 = sbr.rel (%p181) target = $region32
      $region31: #{tpu_custom_call.1} parent=5 // pred_region
        %s185 = ssub.s32 %s16, 1
        %s186 = sand.u32 %s29, 1
        %s187 = scalar_lea.sflag [#allocation3], %s186
        %s188 = sand.u32 %s29, 1
        %s189 = smul.addr %s188, 256
        %s190 = scalar_lea.vmem [#allocation2], %s189
        // Predicated region
        $region33: #{tpu_custom_call.1} parent=31 // pred_check
          %p191 = pneg %p42
        $region34: #{tpu_custom_call.1} parent=31 // pred_check_branch
          %193 = sbr.rel (%p191) target = $region36
        $region35: #{tpu_custom_call.1} parent=31 // pred_region
          %195 = dma.done %s187, 4096
        $region36: #{tpu_custom_call.1} parent=31 // pred_fallthru
          _
        // Predicated region
        $region37: #{tpu_custom_call.1} parent=31 // pred_check
          %p196 = pneg %p63
        $region38: #{tpu_custom_call.1} parent=31 // pred_check_branch
          %198 = sbr.rel (%p196) target = $region40
        $region39: #{tpu_custom_call.1} parent=31 // pred_region
          %200 = dma.done [#allocation6], 40960
        $region40: #{tpu_custom_call.1} parent=31 // pred_fallthru
          _
        // Predicated region
        $region41: #{tpu_custom_call.1} parent=31 // pred_check
          %p201 = pneg %p84
        $region42: #{tpu_custom_call.1} parent=31 // pred_check_branch
          %203 = sbr.rel (%p201) target = $region44
        $region43: #{tpu_custom_call.1} parent=31 // pred_region
          %205 = dma.done [#allocation6], 320
        $region44: #{tpu_custom_call.1} parent=31 // pred_fallthru
          _
        %s206 = sand.u32 %s29, 1
        %s207 = scalar_lea.sflag [#allocation3], %s206
        %s208 = sand.u32 %s29, 1
        %s209 = smul.addr %s208, 256
        %s210 = scalar_lea.vmem [#allocation2], %s209
        %p211 = pneg %p42
        %p212 = pneg %p39
        %p213 = pneg %p63
        %p214 = pneg %p60
        %p215 = pneg %p84
        %p216 = pneg %p81
        %p217 = pneg %p110
        %p218 = pneg %p107
        %s219 = sand.u32 %s97, 1
        %s220 = scalar_lea.sflag [#allocation4], %s219
        %s221 = sand.u32 %s97, 1
        %s222 = smul.addr %s221, 16
        %s223 = scalar_lea.vmem [#allocation8], %s222
        %v224 = vld [vmem:[%s190] sm:$0xff]
        %v225 = vld [vmem:[%s190 + $0x8] sm:$0xff]
        %v226 = vld [vmem:[%s190 + $0x10] sm:$0xff]
        %v227 = vld [vmem:[%s190 + $0x18] sm:$0xff]
        %v228 = vld [vmem:[%s190 + $0x20] sm:$0xff]
        %v229 = vld [vmem:[%s190 + $0x28] sm:$0xff]
        %v230 = vld [vmem:[%s190 + $0x30] sm:$0xff]
        %v231 = vld [vmem:[%s190 + $0x38] sm:$0xff]
        %v232 = vld [vmem:[%s190 + $0x40] sm:$0xff]
        %v233 = vld [vmem:[%s190 + $0x48] sm:$0xff]
        %v234 = vld [vmem:[%s190 + $0x50] sm:$0xff]
        %v235 = vld [vmem:[%s190 + $0x58] sm:$0xff]
        %v236 = vld [vmem:[%s190 + $0x60] sm:$0xff]
        %v237 = vld [vmem:[%s190 + $0x68] sm:$0xff]
        %v238 = vld [vmem:[%s190 + $0x70] sm:$0xff]
        %v239 = vld [vmem:[%s190 + $0x78] sm:$0xff]
        %v240 = vld [vmem:[%s190 + $0x80] sm:$0xff]
        %v241 = vld [vmem:[%s190 + $0x88] sm:$0xff]
        %v242 = vld [vmem:[%s190 + $0x90] sm:$0xff]
        %v243 = vld [vmem:[%s190 + $0x98] sm:$0xff]
        %v244 = vld [vmem:[%s190 + $0xa0] sm:$0xff]
        %v245 = vld [vmem:[%s190 + $0xa8] sm:$0xff]
        %v246 = vld [vmem:[%s190 + $0xb0] sm:$0xff]
        %v247 = vld [vmem:[%s190 + $0xb8] sm:$0xff]
        %v248 = vld [vmem:[%s190 + $0xc0] sm:$0xff]
        %v249 = vld [vmem:[%s190 + $0xc8] sm:$0xff]
        %v250 = vld [vmem:[%s190 + $0xd0] sm:$0xff]
        %v251 = vld [vmem:[%s190 + $0xd8] sm:$0xff]
        %v252 = vld [vmem:[%s190 + $0xe0] sm:$0xff]
        %v253 = vld [vmem:[%s190 + $0xe8] sm:$0xff]
        %v254 = vld [vmem:[%s190 + $0xf0] sm:$0xff]
        %v255 = vld [vmem:[%s190 + $0xf8] sm:$0xff]
        %v256 = vld [vmem:[#allocation5] sm:$0xff]
        %v257 = vld [vmem:[#allocation5 + $0x8] sm:$0xff]
        %v258 = vld [vmem:[#allocation5 + $0x10] sm:$0xff]
        %v259 = vld [vmem:[#allocation5 + $0x18] sm:$0xff]
        %v260 = vld [vmem:[#allocation5 + $0x20] sm:$0xff]
        %v261 = vld [vmem:[#allocation5 + $0x28] sm:$0xff]
        %v262 = vld [vmem:[#allocation5 + $0x30] sm:$0xff]
        %v263 = vld [vmem:[#allocation5 + $0x38] sm:$0xff]
        %v264 = vld [vmem:[#allocation5 + $0x40] sm:$0xff]
        %v265 = vld [vmem:[#allocation5 + $0x48] sm:$0xff]
        %v266 = vld [vmem:[#allocation5 + $0x50] sm:$0xff]
        %v267 = vld [vmem:[#allocation5 + $0x58] sm:$0xff]
        %v268 = vld [vmem:[#allocation5 + $0x60] sm:$0xff]
        %v269 = vld [vmem:[#allocation5 + $0x68] sm:$0xff]
        %v270 = vld [vmem:[#allocation5 + $0x70] sm:$0xff]
        %v271 = vld [vmem:[#allocation5 + $0x78] sm:$0xff]
        %v272 = vld [vmem:[#allocation5 + $0x80] sm:$0xff]
        %v273 = vld [vmem:[#allocation5 + $0x88] sm:$0xff]
        %v274 = vld [vmem:[#allocation5 + $0x90] sm:$0xff]
        %v275 = vld [vmem:[#allocation5 + $0x98] sm:$0xff]
        %v276 = vld [vmem:[#allocation5 + $0xa0] sm:$0xff]
        %v277 = vld [vmem:[#allocation5 + $0xa8] sm:$0xff]
        %v278 = vld [vmem:[#allocation5 + $0xb0] sm:$0xff]
        %v279 = vld [vmem:[#allocation5 + $0xb8] sm:$0xff]
        %v280 = vld [vmem:[#allocation5 + $0xc0] sm:$0xff]
        %v281 = vld [vmem:[#allocation5 + $0xc8] sm:$0xff]
        %v282 = vld [vmem:[#allocation5 + $0xd0] sm:$0xff]
        %v283 = vld [vmem:[#allocation5 + $0xd8] sm:$0xff]
        %v284 = vld [vmem:[#allocation5 + $0xe0] sm:$0xff]
        %v285 = vld [vmem:[#allocation5 + $0xe8] sm:$0xff]
        %v286 = vld [vmem:[#allocation5 + $0xf0] sm:$0xff]
        %v287 = vld [vmem:[#allocation5 + $0xf8] sm:$0xff]
        %v288 = vld [vmem:[#allocation7] sm:$0x3]
        %v290 = vperm.slane %v288, 0
        %v291 = vperm.slane %v288, 1
        %v326 = vunpack.c.l.b16 %v224
        %v327 = vunpack.c.h.b16 %v224
        %v328 = vunpack.c.l.b16 %v225
        %v329 = vunpack.c.h.b16 %v225
        %v330 = vunpack.c.l.b16 %v226
        %v331 = vunpack.c.h.b16 %v226
        %v332 = vunpack.c.l.b16 %v227
        %v333 = vunpack.c.h.b16 %v227
        %v334 = vunpack.c.l.b16 %v228
        %v335 = vunpack.c.h.b16 %v228
        %v336 = vunpack.c.l.b16 %v229
        %v337 = vunpack.c.h.b16 %v229
        %v338 = vunpack.c.l.b16 %v230
        %v339 = vunpack.c.h.b16 %v230
        %v340 = vunpack.c.l.b16 %v231
        %v341 = vunpack.c.h.b16 %v231
        %v342 = vunpack.c.l.b16 %v232
        %v343 = vunpack.c.h.b16 %v232
        %v344 = vunpack.c.l.b16 %v233
        %v345 = vunpack.c.h.b16 %v233
        %v346 = vunpack.c.l.b16 %v234
        %v347 = vunpack.c.h.b16 %v234
        %v348 = vunpack.c.l.b16 %v235
        %v349 = vunpack.c.h.b16 %v235
        %v350 = vunpack.c.l.b16 %v236
        %v351 = vunpack.c.h.b16 %v236
        %v352 = vunpack.c.l.b16 %v237
        %v353 = vunpack.c.h.b16 %v237
        %v354 = vunpack.c.l.b16 %v238
        %v355 = vunpack.c.h.b16 %v238
        %v356 = vunpack.c.l.b16 %v239
        %v357 = vunpack.c.h.b16 %v239
        %v358 = vunpack.c.l.b16 %v240
        %v359 = vunpack.c.h.b16 %v240
        %v360 = vunpack.c.l.b16 %v241
        %v361 = vunpack.c.h.b16 %v241
        %v362 = vunpack.c.l.b16 %v242
        %v363 = vunpack.c.h.b16 %v242
        %v364 = vunpack.c.l.b16 %v243
        %v365 = vunpack.c.h.b16 %v243
        %v366 = vunpack.c.l.b16 %v244
        %v367 = vunpack.c.h.b16 %v244
        %v368 = vunpack.c.l.b16 %v245
        %v369 = vunpack.c.h.b16 %v245
        %v370 = vunpack.c.l.b16 %v246
        %v371 = vunpack.c.h.b16 %v246
        %v372 = vunpack.c.l.b16 %v247
        %v373 = vunpack.c.h.b16 %v247
        %v374 = vunpack.c.l.b16 %v248
        %v375 = vunpack.c.h.b16 %v248
        %v376 = vunpack.c.l.b16 %v249
        %v377 = vunpack.c.h.b16 %v249
        %v378 = vunpack.c.l.b16 %v250
        %v379 = vunpack.c.h.b16 %v250
        %v380 = vunpack.c.l.b16 %v251
        %v381 = vunpack.c.h.b16 %v251
        %v382 = vunpack.c.l.b16 %v252
        %v383 = vunpack.c.h.b16 %v252
        %v384 = vunpack.c.l.b16 %v253
        %v385 = vunpack.c.h.b16 %v253
        %v386 = vunpack.c.l.b16 %v254
        %v387 = vunpack.c.h.b16 %v254
        %v388 = vunpack.c.l.b16 %v255
        %v389 = vunpack.c.h.b16 %v255
        %v390 = vpack.c.b16 %v328, %v326
        %v391 = vpack.c.b16 %v329, %v327
        %v392 = vpack.c.b16 %v332, %v330
        %v393 = vpack.c.b16 %v333, %v331
        %v394 = vpack.c.b16 %v336, %v334
        %v395 = vpack.c.b16 %v337, %v335
        %v396 = vpack.c.b16 %v340, %v338
        %v397 = vpack.c.b16 %v341, %v339
        %v398 = vpack.c.b16 %v344, %v342
        %v399 = vpack.c.b16 %v345, %v343
        %v400 = vpack.c.b16 %v348, %v346
        %v401 = vpack.c.b16 %v349, %v347
        %v402 = vpack.c.b16 %v352, %v350
        %v403 = vpack.c.b16 %v353, %v351
        %v404 = vpack.c.b16 %v356, %v354
        %v405 = vpack.c.b16 %v357, %v355
        %v406 = vpack.c.b16 %v360, %v358
        %v407 = vpack.c.b16 %v361, %v359
        %v408 = vpack.c.b16 %v364, %v362
        %v409 = vpack.c.b16 %v365, %v363
        %v410 = vpack.c.b16 %v368, %v366
        %v411 = vpack.c.b16 %v369, %v367
        %v412 = vpack.c.b16 %v372, %v370
        %v413 = vpack.c.b16 %v373, %v371
        %v414 = vpack.c.b16 %v376, %v374
        %v415 = vpack.c.b16 %v377, %v375
        %v416 = vpack.c.b16 %v380, %v378
        %v417 = vpack.c.b16 %v381, %v379
        %v418 = vpack.c.b16 %v384, %v382
        %v419 = vpack.c.b16 %v385, %v383
        %v420 = vpack.c.b16 %v388, %v386
        %v421 = vpack.c.b16 %v389, %v387
        %v486 = vunpack.c.l.b16 %v256
        %v487 = vunpack.c.h.b16 %v256
        %v488 = vunpack.c.l.b16 %v257
        %v489 = vunpack.c.h.b16 %v257
        %v490 = vunpack.c.l.b16 %v258
        %v491 = vunpack.c.h.b16 %v258
        %v492 = vunpack.c.l.b16 %v259
        %v493 = vunpack.c.h.b16 %v259
        %v494 = vunpack.c.l.b16 %v260
        %v495 = vunpack.c.h.b16 %v260
        %v496 = vunpack.c.l.b16 %v261
        %v497 = vunpack.c.h.b16 %v261
        %v498 = vunpack.c.l.b16 %v262
        %v499 = vunpack.c.h.b16 %v262
        %v500 = vunpack.c.l.b16 %v263
        %v501 = vunpack.c.h.b16 %v263
        %v502 = vunpack.c.l.b16 %v264
        %v503 = vunpack.c.h.b16 %v264
        %v504 = vunpack.c.l.b16 %v265
        %v505 = vunpack.c.h.b16 %v265
        %v506 = vunpack.c.l.b16 %v266
        %v507 = vunpack.c.h.b16 %v266
        %v508 = vunpack.c.l.b16 %v267
        %v509 = vunpack.c.h.b16 %v267
        %v510 = vunpack.c.l.b16 %v268
        %v511 = vunpack.c.h.b16 %v268
        %v512 = vunpack.c.l.b16 %v269
        %v513 = vunpack.c.h.b16 %v269
        %v514 = vunpack.c.l.b16 %v270
        %v515 = vunpack.c.h.b16 %v270
        %v516 = vunpack.c.l.b16 %v271
        %v517 = vunpack.c.h.b16 %v271
        %v518 = vunpack.c.l.b16 %v272
        %v519 = vunpack.c.h.b16 %v272
        %v520 = vunpack.c.l.b16 %v273
        %v521 = vunpack.c.h.b16 %v273
        %v522 = vunpack.c.l.b16 %v274
        %v523 = vunpack.c.h.b16 %v274
        %v524 = vunpack.c.l.b16 %v275
        %v525 = vunpack.c.h.b16 %v275
        %v526 = vunpack.c.l.b16 %v276
        %v527 = vunpack.c.h.b16 %v276
        %v528 = vunpack.c.l.b16 %v277
        %v529 = vunpack.c.h.b16 %v277
        %v530 = vunpack.c.l.b16 %v278
        %v531 = vunpack.c.h.b16 %v278
        %v532 = vunpack.c.l.b16 %v279
        %v533 = vunpack.c.h.b16 %v279
        %v534 = vunpack.c.l.b16 %v280
        %v535 = vunpack.c.h.b16 %v280
        %v536 = vunpack.c.l.b16 %v281
        %v537 = vunpack.c.h.b16 %v281
        %v538 = vunpack.c.l.b16 %v282
        %v539 = vunpack.c.h.b16 %v282
        %v540 = vunpack.c.l.b16 %v283
        %v541 = vunpack.c.h.b16 %v283
        %v542 = vunpack.c.l.b16 %v284
        %v543 = vunpack.c.h.b16 %v284
        %v544 = vunpack.c.l.b16 %v285
        %v545 = vunpack.c.h.b16 %v285
        %v546 = vunpack.c.l.b16 %v286
        %v547 = vunpack.c.h.b16 %v286
        %v548 = vunpack.c.l.b16 %v287
        %v549 = vunpack.c.h.b16 %v287
        %v550 = vpack.c.b16 %v488, %v486
        %v551 = vpack.c.b16 %v489, %v487
        %v552 = vpack.c.b16 %v492, %v490
        %v553 = vpack.c.b16 %v493, %v491
        %v554 = vpack.c.b16 %v496, %v494
        %v555 = vpack.c.b16 %v497, %v495
        %v556 = vpack.c.b16 %v500, %v498
        %v557 = vpack.c.b16 %v501, %v499
        %v558 = vpack.c.b16 %v504, %v502
        %v559 = vpack.c.b16 %v505, %v503
        %v560 = vpack.c.b16 %v508, %v506
        %v561 = vpack.c.b16 %v509, %v507
        %v562 = vpack.c.b16 %v512, %v510
        %v563 = vpack.c.b16 %v513, %v511
        %v564 = vpack.c.b16 %v516, %v514
        %v565 = vpack.c.b16 %v517, %v515
        %v566 = vpack.c.b16 %v520, %v518
        %v567 = vpack.c.b16 %v521, %v519
        %v568 = vpack.c.b16 %v524, %v522
        %v569 = vpack.c.b16 %v525, %v523
        %v570 = vpack.c.b16 %v528, %v526
        %v571 = vpack.c.b16 %v529, %v527
        %v572 = vpack.c.b16 %v532, %v530
        %v573 = vpack.c.b16 %v533, %v531
        %v574 = vpack.c.b16 %v536, %v534
        %v575 = vpack.c.b16 %v537, %v535
        %v576 = vpack.c.b16 %v540, %v538
        %v577 = vpack.c.b16 %v541, %v539
        %v578 = vpack.c.b16 %v544, %v542
        %v579 = vpack.c.b16 %v545, %v543
        %v580 = vpack.c.b16 %v548, %v546
        %v581 = vpack.c.b16 %v549, %v547
        %614 = vmatpush.bf16.msra.mxu0 %v564
        %615 = vmatpush.bf16.msra.mxu0 %v562
        %616 = vmatpush.bf16.msra.mxu0 %v560
        %617 = vmatpush.bf16.msra.mxu0 %v558
        %618 = vmatpush.bf16.msra.mxu0 %v556
        %619 = vmatpush.bf16.msra.mxu0 %v554
        %620 = vmatpush.bf16.msra.mxu0 %v552
        %621 = vmatpush.bf16.msra.mxu0 %v550
        %622 = vmatmul.bf16.gmra.mxu0 %v390
        %v623 = vpop.f32.mrf.mxu0
        %v624 = vadd.f32 %v290, %v623
        %v625 = vpop.f32.mrf.mxu0
        %v626 = vadd.f32 %v290, %v625
        %627 = vmatmul.bf16.gmra.mxu0 %v392
        %v628 = vpop.f32.mrf.mxu0
        %v629 = vadd.f32 %v290, %v628
        %v630 = vpop.f32.mrf.mxu0
        %v631 = vadd.f32 %v290, %v630
        %632 = vmatmul.bf16.gmra.mxu0 %v394
        %v633 = vpop.f32.mrf.mxu0
        %v634 = vadd.f32 %v290, %v633
        %v635 = vpop.f32.mrf.mxu0
        %v636 = vadd.f32 %v290, %v635
        %637 = vmatmul.bf16.gmra.mxu0 %v396
        %v638 = vpop.f32.mrf.mxu0
        %v639 = vadd.f32 %v290, %v638
        %v640 = vpop.f32.mrf.mxu0
        %v641 = vadd.f32 %v290, %v640
        %642 = vmatmul.bf16.gmra.mxu0 %v398
        %v643 = vpop.f32.mrf.mxu0
        %v644 = vadd.f32 %v290, %v643
        %v645 = vpop.f32.mrf.mxu0
        %v646 = vadd.f32 %v290, %v645
        %647 = vmatmul.bf16.gmra.mxu0 %v400
        %v648 = vpop.f32.mrf.mxu0
        %v649 = vadd.f32 %v290, %v648
        %v650 = vpop.f32.mrf.mxu0
        %v651 = vadd.f32 %v290, %v650
        %652 = vmatmul.bf16.gmra.mxu0 %v402
        %v653 = vpop.f32.mrf.mxu0
        %v654 = vadd.f32 %v290, %v653
        %v655 = vpop.f32.mrf.mxu0
        %v656 = vadd.f32 %v290, %v655
        %657 = vmatmul.bf16.gmra.mxu0 %v404
        %v658 = vpop.f32.mrf.mxu0
        %v659 = vadd.f32 %v290, %v658
        %v660 = vpop.f32.mrf.mxu0
        %v661 = vadd.f32 %v290, %v660
        %662 = vmatmul.bf16.gmra.mxu0 %v406
        %v663 = vpop.f32.mrf.mxu0
        %v664 = vadd.f32 %v290, %v663
        %v665 = vpop.f32.mrf.mxu0
        %v666 = vadd.f32 %v290, %v665
        %667 = vmatmul.bf16.gmra.mxu0 %v408
        %v668 = vpop.f32.mrf.mxu0
        %v669 = vadd.f32 %v290, %v668
        %v670 = vpop.f32.mrf.mxu0
        %v671 = vadd.f32 %v290, %v670
        %672 = vmatmul.bf16.gmra.mxu0 %v410
        %v673 = vpop.f32.mrf.mxu0
        %v674 = vadd.f32 %v290, %v673
        %v675 = vpop.f32.mrf.mxu0
        %v676 = vadd.f32 %v290, %v675
        %677 = vmatmul.bf16.gmra.mxu0 %v412
        %v678 = vpop.f32.mrf.mxu0
        %v679 = vadd.f32 %v290, %v678
        %v680 = vpop.f32.mrf.mxu0
        %v681 = vadd.f32 %v290, %v680
        %682 = vmatmul.bf16.gmra.mxu0 %v414
        %v683 = vpop.f32.mrf.mxu0
        %v684 = vadd.f32 %v290, %v683
        %v685 = vpop.f32.mrf.mxu0
        %v686 = vadd.f32 %v290, %v685
        %687 = vmatmul.bf16.gmra.mxu0 %v416
        %v688 = vpop.f32.mrf.mxu0
        %v689 = vadd.f32 %v290, %v688
        %v690 = vpop.f32.mrf.mxu0
        %v691 = vadd.f32 %v290, %v690
        %692 = vmatmul.bf16.gmra.mxu0 %v418
        %v693 = vpop.f32.mrf.mxu0
        %v694 = vadd.f32 %v290, %v693
        %v695 = vpop.f32.mrf.mxu0
        %v696 = vadd.f32 %v290, %v695
        %697 = vmatmul.bf16.gmra.mxu0 %v420
        %v698 = vpop.f32.mrf.mxu0
        %v699 = vadd.f32 %v290, %v698
        %v700 = vpop.f32.mrf.mxu0
        %v701 = vadd.f32 %v290, %v700
        %702 = vdwg.mxu0
        %703 = vmatpush.bf16.msra.mxu0 %v580
        %704 = vmatpush.bf16.msra.mxu0 %v578
        %705 = vmatpush.bf16.msra.mxu0 %v576
        %706 = vmatpush.bf16.msra.mxu0 %v574
        %707 = vmatpush.bf16.msra.mxu0 %v572
        %708 = vmatpush.bf16.msra.mxu0 %v570
        %709 = vmatpush.bf16.msra.mxu0 %v568
        %710 = vmatpush.bf16.msra.mxu0 %v566
        %711 = vmatmul.bf16.gmra.mxu0 %v391
        %v712 = vpop.f32.mrf.mxu0
        %v713 = vadd.f32 %v624, %v712
        %v714 = vpop.f32.mrf.mxu0
        %v715 = vadd.f32 %v626, %v714
        %716 = vmatmul.bf16.gmra.mxu0 %v393
        %v717 = vpop.f32.mrf.mxu0
        %v718 = vadd.f32 %v629, %v717
        %v719 = vpop.f32.mrf.mxu0
        %v720 = vadd.f32 %v631, %v719
        %721 = vmatmul.bf16.gmra.mxu0 %v395
        %v722 = vpop.f32.mrf.mxu0
        %v723 = vadd.f32 %v634, %v722
        %v724 = vpop.f32.mrf.mxu0
        %v725 = vadd.f32 %v636, %v724
        %726 = vmatmul.bf16.gmra.mxu0 %v397
        %v727 = vpop.f32.mrf.mxu0
        %v728 = vadd.f32 %v639, %v727
        %v729 = vpop.f32.mrf.mxu0
        %v730 = vadd.f32 %v641, %v729
        %731 = vmatmul.bf16.gmra.mxu0 %v399
        %v732 = vpop.f32.mrf.mxu0
        %v733 = vadd.f32 %v644, %v732
        %v734 = vpop.f32.mrf.mxu0
        %v735 = vadd.f32 %v646, %v734
        %736 = vmatmul.bf16.gmra.mxu0 %v401
        %v737 = vpop.f32.mrf.mxu0
        %v738 = vadd.f32 %v649, %v737
        %v739 = vpop.f32.mrf.mxu0
        %v740 = vadd.f32 %v651, %v739
        %741 = vmatmul.bf16.gmra.mxu0 %v403
        %v742 = vpop.f32.mrf.mxu0
        %v743 = vadd.f32 %v654, %v742
        %v744 = vpop.f32.mrf.mxu0
        %v745 = vadd.f32 %v656, %v744
        %746 = vmatmul.bf16.gmra.mxu0 %v405
        %v747 = vpop.f32.mrf.mxu0
        %v748 = vadd.f32 %v659, %v747
        %v749 = vpop.f32.mrf.mxu0
        %v750 = vadd.f32 %v661, %v749
        %751 = vmatmul.bf16.gmra.mxu0 %v407
        %v752 = vpop.f32.mrf.mxu0
        %v753 = vadd.f32 %v664, %v752
        %v754 = vpop.f32.mrf.mxu0
        %v755 = vadd.f32 %v666, %v754
        %756 = vmatmul.bf16.gmra.mxu0 %v409
        %v757 = vpop.f32.mrf.mxu0
        %v758 = vadd.f32 %v669, %v757
        %v759 = vpop.f32.mrf.mxu0
        %v760 = vadd.f32 %v671, %v759
        %761 = vmatmul.bf16.gmra.mxu0 %v411
        %v762 = vpop.f32.mrf.mxu0
        %v763 = vadd.f32 %v674, %v762
        %v764 = vpop.f32.mrf.mxu0
        %v765 = vadd.f32 %v676, %v764
        %766 = vmatmul.bf16.gmra.mxu0 %v413
        %v767 = vpop.f32.mrf.mxu0
        %v768 = vadd.f32 %v679, %v767
        %v769 = vpop.f32.mrf.mxu0
        %v770 = vadd.f32 %v681, %v769
        %771 = vmatmul.bf16.gmra.mxu0 %v415
        %v772 = vpop.f32.mrf.mxu0
        %v773 = vadd.f32 %v684, %v772
        %v774 = vpop.f32.mrf.mxu0
        %v775 = vadd.f32 %v686, %v774
        %776 = vmatmul.bf16.gmra.mxu0 %v417
        %v777 = vpop.f32.mrf.mxu0
        %v778 = vadd.f32 %v689, %v777
        %v779 = vpop.f32.mrf.mxu0
        %v780 = vadd.f32 %v691, %v779
        %781 = vmatmul.bf16.gmra.mxu0 %v419
        %v782 = vpop.f32.mrf.mxu0
        %v783 = vadd.f32 %v694, %v782
        %v784 = vpop.f32.mrf.mxu0
        %v785 = vadd.f32 %v696, %v784
        %786 = vmatmul.bf16.gmra.mxu0 %v421
        %v787 = vpop.f32.mrf.mxu0
        %v788 = vadd.f32 %v699, %v787
        %v789 = vpop.f32.mrf.mxu0
        %v790 = vadd.f32 %v701, %v789
        %791 = vdwg.mxu0
        %792 = vmatpush.bf16.msra.mxu0 %v565
        %793 = vmatpush.bf16.msra.mxu0 %v563
        %794 = vmatpush.bf16.msra.mxu0 %v561
        %795 = vmatpush.bf16.msra.mxu0 %v559
        %796 = vmatpush.bf16.msra.mxu0 %v557
        %797 = vmatpush.bf16.msra.mxu0 %v555
        %798 = vmatpush.bf16.msra.mxu0 %v553
        %799 = vmatpush.bf16.msra.mxu0 %v551
        %800 = vmatmul.bf16.gmra.mxu0 %v390
        %v801 = vpop.f32.mrf.mxu0
        %v802 = vadd.f32 %v291, %v801
        %v803 = vpop.f32.mrf.mxu0
        %v804 = vadd.f32 %v291, %v803
        %805 = vmatmul.bf16.gmra.mxu0 %v392
        %v806 = vpop.f32.mrf.mxu0
        %v807 = vadd.f32 %v291, %v806
        %v808 = vpop.f32.mrf.mxu0
        %v809 = vadd.f32 %v291, %v808
        %810 = vmatmul.bf16.gmra.mxu0 %v394
        %v811 = vpop.f32.mrf.mxu0
        %v812 = vadd.f32 %v291, %v811
        %v813 = vpop.f32.mrf.mxu0
        %v814 = vadd.f32 %v291, %v813
        %815 = vmatmul.bf16.gmra.mxu0 %v396
        %v816 = vpop.f32.mrf.mxu0
        %v817 = vadd.f32 %v291, %v816
        %v818 = vpop.f32.mrf.mxu0
        %v819 = vadd.f32 %v291, %v818
        %820 = vmatmul.bf16.gmra.mxu0 %v398
        %v821 = vpop.f32.mrf.mxu0
        %v822 = vadd.f32 %v291, %v821
        %v823 = vpop.f32.mrf.mxu0
        %v824 = vadd.f32 %v291, %v823
        %825 = vmatmul.bf16.gmra.mxu0 %v400
        %v826 = vpop.f32.mrf.mxu0
        %v827 = vadd.f32 %v291, %v826
        %v828 = vpop.f32.mrf.mxu0
        %v829 = vadd.f32 %v291, %v828
        %830 = vmatmul.bf16.gmra.mxu0 %v402
        %v831 = vpop.f32.mrf.mxu0
        %v832 = vadd.f32 %v291, %v831
        %v833 = vpop.f32.mrf.mxu0
        %v834 = vadd.f32 %v291, %v833
        %835 = vmatmul.bf16.gmra.mxu0 %v404
        %v836 = vpop.f32.mrf.mxu0
        %v837 = vadd.f32 %v291, %v836
        %v838 = vpop.f32.mrf.mxu0
        %v839 = vadd.f32 %v291, %v838
        %840 = vmatmul.bf16.gmra.mxu0 %v406
        %v841 = vpop.f32.mrf.mxu0
        %v842 = vadd.f32 %v291, %v841
        %v843 = vpop.f32.mrf.mxu0
        %v844 = vadd.f32 %v291, %v843
        %845 = vmatmul.bf16.gmra.mxu0 %v408
        %v846 = vpop.f32.mrf.mxu0
        %v847 = vadd.f32 %v291, %v846
        %v848 = vpop.f32.mrf.mxu0
        %v849 = vadd.f32 %v291, %v848
        %850 = vmatmul.bf16.gmra.mxu0 %v410
        %v851 = vpop.f32.mrf.mxu0
        %v852 = vadd.f32 %v291, %v851
        %v853 = vpop.f32.mrf.mxu0
        %v854 = vadd.f32 %v291, %v853
        %855 = vmatmul.bf16.gmra.mxu0 %v412
        %v856 = vpop.f32.mrf.mxu0
        %v857 = vadd.f32 %v291, %v856
        %v858 = vpop.f32.mrf.mxu0
        %v859 = vadd.f32 %v291, %v858
        %860 = vmatmul.bf16.gmra.mxu0 %v414
        %v861 = vpop.f32.mrf.mxu0
        %v862 = vadd.f32 %v291, %v861
        %v863 = vpop.f32.mrf.mxu0
        %v864 = vadd.f32 %v291, %v863
        %865 = vmatmul.bf16.gmra.mxu0 %v416
        %v866 = vpop.f32.mrf.mxu0
        %v867 = vadd.f32 %v291, %v866
        %v868 = vpop.f32.mrf.mxu0
        %v869 = vadd.f32 %v291, %v868
        %870 = vmatmul.bf16.gmra.mxu0 %v418
        %v871 = vpop.f32.mrf.mxu0
        %v872 = vadd.f32 %v291, %v871
        %v873 = vpop.f32.mrf.mxu0
        %v874 = vadd.f32 %v291, %v873
        %875 = vmatmul.bf16.gmra.mxu0 %v420
        %v876 = vpop.f32.mrf.mxu0
        %v877 = vadd.f32 %v291, %v876
        %v878 = vpop.f32.mrf.mxu0
        %v879 = vadd.f32 %v291, %v878
        %880 = vdwg.mxu0
        %881 = vmatpush.bf16.msra.mxu0 %v581
        %882 = vmatpush.bf16.msra.mxu0 %v579
        %883 = vmatpush.bf16.msra.mxu0 %v577
        %884 = vmatpush.bf16.msra.mxu0 %v575
        %885 = vmatpush.bf16.msra.mxu0 %v573
        %886 = vmatpush.bf16.msra.mxu0 %v571
        %887 = vmatpush.bf16.msra.mxu0 %v569
        %888 = vmatpush.bf16.msra.mxu0 %v567
        %889 = vmatmul.bf16.gmra.mxu0 %v391
        %v890 = vpop.f32.mrf.mxu0
        %v891 = vadd.f32 %v802, %v890
        %v892 = vpop.f32.mrf.mxu0
        %v893 = vadd.f32 %v804, %v892
        %894 = vmatmul.bf16.gmra.mxu0 %v393
        %v895 = vpop.f32.mrf.mxu0
        %v896 = vadd.f32 %v807, %v895
        %v897 = vpop.f32.mrf.mxu0
        %v898 = vadd.f32 %v809, %v897
        %899 = vmatmul.bf16.gmra.mxu0 %v395
        %v900 = vpop.f32.mrf.mxu0
        %v901 = vadd.f32 %v812, %v900
        %v902 = vpop.f32.mrf.mxu0
        %v903 = vadd.f32 %v814, %v902
        %904 = vmatmul.bf16.gmra.mxu0 %v397
        %v905 = vpop.f32.mrf.mxu0
        %v906 = vadd.f32 %v817, %v905
        %v907 = vpop.f32.mrf.mxu0
        %v908 = vadd.f32 %v819, %v907
        %909 = vmatmul.bf16.gmra.mxu0 %v399
        %v910 = vpop.f32.mrf.mxu0
        %v911 = vadd.f32 %v822, %v910
        %v912 = vpop.f32.mrf.mxu0
        %v913 = vadd.f32 %v824, %v912
        %914 = vmatmul.bf16.gmra.mxu0 %v401
        %v915 = vpop.f32.mrf.mxu0
        %v916 = vadd.f32 %v827, %v915
        %v917 = vpop.f32.mrf.mxu0
        %v918 = vadd.f32 %v829, %v917
        %919 = vmatmul.bf16.gmra.mxu0 %v403
        %v920 = vpop.f32.mrf.mxu0
        %v921 = vadd.f32 %v832, %v920
        %v922 = vpop.f32.mrf.mxu0
        %v923 = vadd.f32 %v834, %v922
        %924 = vmatmul.bf16.gmra.mxu0 %v405
        %v925 = vpop.f32.mrf.mxu0
        %v926 = vadd.f32 %v837, %v925
        %v927 = vpop.f32.mrf.mxu0
        %v928 = vadd.f32 %v839, %v927
        %929 = vmatmul.bf16.gmra.mxu0 %v407
        %v930 = vpop.f32.mrf.mxu0
        %v931 = vadd.f32 %v842, %v930
        %v932 = vpop.f32.mrf.mxu0
        %v933 = vadd.f32 %v844, %v932
        %934 = vmatmul.bf16.gmra.mxu0 %v409
        %v935 = vpop.f32.mrf.mxu0
        %v936 = vadd.f32 %v847, %v935
        %v937 = vpop.f32.mrf.mxu0
        %v938 = vadd.f32 %v849, %v937
        %939 = vmatmul.bf16.gmra.mxu0 %v411
        %v940 = vpop.f32.mrf.mxu0
        %v941 = vadd.f32 %v852, %v940
        %v942 = vpop.f32.mrf.mxu0
        %v943 = vadd.f32 %v854, %v942
        %944 = vmatmul.bf16.gmra.mxu0 %v413
        %v945 = vpop.f32.mrf.mxu0
        %v946 = vadd.f32 %v857, %v945
        %v947 = vpop.f32.mrf.mxu0
        %v948 = vadd.f32 %v859, %v947
        %949 = vmatmul.bf16.gmra.mxu0 %v415
        %v950 = vpop.f32.mrf.mxu0
        %v951 = vadd.f32 %v862, %v950
        %v952 = vpop.f32.mrf.mxu0
        %v953 = vadd.f32 %v864, %v952
        %954 = vmatmul.bf16.gmra.mxu0 %v417
        %v955 = vpop.f32.mrf.mxu0
        %v956 = vadd.f32 %v867, %v955
        %v957 = vpop.f32.mrf.mxu0
        %v958 = vadd.f32 %v869, %v957
        %959 = vmatmul.bf16.gmra.mxu0 %v419
        %v960 = vpop.f32.mrf.mxu0
        %v961 = vadd.f32 %v872, %v960
        %v962 = vpop.f32.mrf.mxu0
        %v963 = vadd.f32 %v874, %v962
        %964 = vmatmul.bf16.gmra.mxu0 %v421
        %v965 = vpop.f32.mrf.mxu0
        %v966 = vadd.f32 %v877, %v965
        %v967 = vpop.f32.mrf.mxu0
        %v968 = vadd.f32 %v879, %v967
        %969 = vdwg.mxu0
        %v970 = vpack.c.bf16 %v715, %v713
        %v971 = vpack.c.bf16 %v893, %v891
        %v972 = vpack.c.bf16 %v720, %v718
        %v973 = vpack.c.bf16 %v898, %v896
        %v974 = vpack.c.bf16 %v725, %v723
        %v975 = vpack.c.bf16 %v903, %v901
        %v976 = vpack.c.bf16 %v730, %v728
        %v977 = vpack.c.bf16 %v908, %v906
        %v978 = vpack.c.bf16 %v735, %v733
        %v979 = vpack.c.bf16 %v913, %v911
        %v980 = vpack.c.bf16 %v740, %v738
        %v981 = vpack.c.bf16 %v918, %v916
        %v982 = vpack.c.bf16 %v745, %v743
        %v983 = vpack.c.bf16 %v923, %v921
        %v984 = vpack.c.bf16 %v750, %v748
        %v985 = vpack.c.bf16 %v928, %v926
        %v986 = vpack.c.bf16 %v755, %v753
        %v987 = vpack.c.bf16 %v933, %v931
        %v988 = vpack.c.bf16 %v760, %v758
        %v989 = vpack.c.bf16 %v938, %v936
        %v990 = vpack.c.bf16 %v765, %v763
        %v991 = vpack.c.bf16 %v943, %v941
        %v992 = vpack.c.bf16 %v770, %v768
        %v993 = vpack.c.bf16 %v948, %v946
        %v994 = vpack.c.bf16 %v775, %v773
        %v995 = vpack.c.bf16 %v953, %v951
        %v996 = vpack.c.bf16 %v780, %v778
        %v997 = vpack.c.bf16 %v958, %v956
        %v998 = vpack.c.bf16 %v785, %v783
        %v999 = vpack.c.bf16 %v963, %v961
        %v1000 = vpack.c.bf16 %v790, %v788
        %v1001 = vpack.c.bf16 %v968, %v966
        %s1002 = scalar_lea.vmem [#allocation5], 256
        %v1003 = vld [vmem:[%s1002] sm:$0xff]
        %v1004 = vld [vmem:[%s1002 + $0x8] sm:$0xff]
        %v1005 = vld [vmem:[%s1002 + $0x10] sm:$0xff]
        %v1006 = vld [vmem:[%s1002 + $0x18] sm:$0xff]
        %v1007 = vld [vmem:[%s1002 + $0x20] sm:$0xff]
        %v1008 = vld [vmem:[%s1002 + $0x28] sm:$0xff]
        %v1009 = vld [vmem:[%s1002 + $0x30] sm:$0xff]
        %v1010 = vld [vmem:[%s1002 + $0x38] sm:$0xff]
        %v1011 = vld [vmem:[%s1002 + $0x40] sm:$0xff]
        %v1012 = vld [vmem:[%s1002 + $0x48] sm:$0xff]
        %v1013 = vld [vmem:[%s1002 + $0x50] sm:$0xff]
        %v1014 = vld [vmem:[%s1002 + $0x58] sm:$0xff]
        %v1015 = vld [vmem:[%s1002 + $0x60] sm:$0xff]
        %v1016 = vld [vmem:[%s1002 + $0x68] sm:$0xff]
        %v1017 = vld [vmem:[%s1002 + $0x70] sm:$0xff]
        %v1018 = vld [vmem:[%s1002 + $0x78] sm:$0xff]
        %v1019 = vld [vmem:[%s1002 + $0x80] sm:$0xff]
        %v1020 = vld [vmem:[%s1002 + $0x88] sm:$0xff]
        %v1021 = vld [vmem:[%s1002 + $0x90] sm:$0xff]
        %v1022 = vld [vmem:[%s1002 + $0x98] sm:$0xff]
        %v1023 = vld [vmem:[%s1002 + $0xa0] sm:$0xff]
        %v1024 = vld [vmem:[%s1002 + $0xa8] sm:$0xff]
        %v1025 = vld [vmem:[%s1002 + $0xb0] sm:$0xff]
        %v1026 = vld [vmem:[%s1002 + $0xb8] sm:$0xff]
        %v1027 = vld [vmem:[%s1002 + $0xc0] sm:$0xff]
        %v1028 = vld [vmem:[%s1002 + $0xc8] sm:$0xff]
        %v1029 = vld [vmem:[%s1002 + $0xd0] sm:$0xff]
        %v1030 = vld [vmem:[%s1002 + $0xd8] sm:$0xff]
        %v1031 = vld [vmem:[%s1002 + $0xe0] sm:$0xff]
        %v1032 = vld [vmem:[%s1002 + $0xe8] sm:$0xff]
        %v1033 = vld [vmem:[%s1002 + $0xf0] sm:$0xff]
        %v1034 = vld [vmem:[%s1002 + $0xf8] sm:$0xff]
        %s1035 = scalar_lea.vmem [#allocation7], 2
        %v1036 = vld [vmem:[%s1035] sm:$0x3]
        %v1038 = vperm.slane %v1036, 0
        %v1039 = vperm.slane %v1036, 1
        %v1074 = vunpack.c.l.b16 %v1003
        %v1075 = vunpack.c.h.b16 %v1003
        %v1076 = vunpack.c.l.b16 %v1004
        %v1077 = vunpack.c.h.b16 %v1004
        %v1078 = vunpack.c.l.b16 %v1005
        %v1079 = vunpack.c.h.b16 %v1005
        %v1080 = vunpack.c.l.b16 %v1006
        %v1081 = vunpack.c.h.b16 %v1006
        %v1082 = vunpack.c.l.b16 %v1007
        %v1083 = vunpack.c.h.b16 %v1007
        %v1084 = vunpack.c.l.b16 %v1008
        %v1085 = vunpack.c.h.b16 %v1008
        %v1086 = vunpack.c.l.b16 %v1009
        %v1087 = vunpack.c.h.b16 %v1009
        %v1088 = vunpack.c.l.b16 %v1010
        %v1089 = vunpack.c.h.b16 %v1010
        %v1090 = vunpack.c.l.b16 %v1011
        %v1091 = vunpack.c.h.b16 %v1011
        %v1092 = vunpack.c.l.b16 %v1012
        %v1093 = vunpack.c.h.b16 %v1012
        %v1094 = vunpack.c.l.b16 %v1013
        %v1095 = vunpack.c.h.b16 %v1013
        %v1096 = vunpack.c.l.b16 %v1014
        %v1097 = vunpack.c.h.b16 %v1014
        %v1098 = vunpack.c.l.b16 %v1015
        %v1099 = vunpack.c.h.b16 %v1015
        %v1100 = vunpack.c.l.b16 %v1016
        %v1101 = vunpack.c.h.b16 %v1016
        %v1102 = vunpack.c.l.b16 %v1017
        %v1103 = vunpack.c.h.b16 %v1017
        %v1104 = vunpack.c.l.b16 %v1018
        %v1105 = vunpack.c.h.b16 %v1018
        %v1106 = vunpack.c.l.b16 %v1019
        %v1107 = vunpack.c.h.b16 %v1019
        %v1108 = vunpack.c.l.b16 %v1020
        %v1109 = vunpack.c.h.b16 %v1020
        %v1110 = vunpack.c.l.b16 %v1021
        %v1111 = vunpack.c.h.b16 %v1021
        %v1112 = vunpack.c.l.b16 %v1022
        %v1113 = vunpack.c.h.b16 %v1022
        %v1114 = vunpack.c.l.b16 %v1023
        %v1115 = vunpack.c.h.b16 %v1023
        %v1116 = vunpack.c.l.b16 %v1024
        %v1117 = vunpack.c.h.b16 %v1024
        %v1118 = vunpack.c.l.b16 %v1025
        %v1119 = vunpack.c.h.b16 %v1025
        %v1120 = vunpack.c.l.b16 %v1026
        %v1121 = vunpack.c.h.b16 %v1026
        %v1122 = vunpack.c.l.b16 %v1027
        %v1123 = vunpack.c.h.b16 %v1027
        %v1124 = vunpack.c.l.b16 %v1028
        %v1125 = vunpack.c.h.b16 %v1028
        %v1126 = vunpack.c.l.b16 %v1029
        %v1127 = vunpack.c.h.b16 %v1029
        %v1128 = vunpack.c.l.b16 %v1030
        %v1129 = vunpack.c.h.b16 %v1030
        %v1130 = vunpack.c.l.b16 %v1031
        %v1131 = vunpack.c.h.b16 %v1031
        %v1132 = vunpack.c.l.b16 %v1032
        %v1133 = vunpack.c.h.b16 %v1032
        %v1134 = vunpack.c.l.b16 %v1033
        %v1135 = vunpack.c.h.b16 %v1033
        %v1136 = vunpack.c.l.b16 %v1034
        %v1137 = vunpack.c.h.b16 %v1034
        %v1138 = vpack.c.b16 %v1076, %v1074
        %v1139 = vpack.c.b16 %v1077, %v1075
        %v1140 = vpack.c.b16 %v1080, %v1078
        %v1141 = vpack.c.b16 %v1081, %v1079
        %v1142 = vpack.c.b16 %v1084, %v1082
        %v1143 = vpack.c.b16 %v1085, %v1083
        %v1144 = vpack.c.b16 %v1088, %v1086
        %v1145 = vpack.c.b16 %v1089, %v1087
        %v1146 = vpack.c.b16 %v1092, %v1090
        %v1147 = vpack.c.b16 %v1093, %v1091
        %v1148 = vpack.c.b16 %v1096, %v1094
        %v1149 = vpack.c.b16 %v1097, %v1095
        %v1150 = vpack.c.b16 %v1100, %v1098
        %v1151 = vpack.c.b16 %v1101, %v1099
        %v1152 = vpack.c.b16 %v1104, %v1102
        %v1153 = vpack.c.b16 %v1105, %v1103
        %v1154 = vpack.c.b16 %v1108, %v1106
        %v1155 = vpack.c.b16 %v1109, %v1107
        %v1156 = vpack.c.b16 %v1112, %v1110
        %v1157 = vpack.c.b16 %v1113, %v1111
        %v1158 = vpack.c.b16 %v1116, %v1114
        %v1159 = vpack.c.b16 %v1117, %v1115
        %v1160 = vpack.c.b16 %v1120, %v1118
        %v1161 = vpack.c.b16 %v1121, %v1119
        %v1162 = vpack.c.b16 %v1124, %v1122
        %v1163 = vpack.c.b16 %v1125, %v1123
        %v1164 = vpack.c.b16 %v1128, %v1126
        %v1165 = vpack.c.b16 %v1129, %v1127
        %v1166 = vpack.c.b16 %v1132, %v1130
        %v1167 = vpack.c.b16 %v1133, %v1131
        %v1168 = vpack.c.b16 %v1136, %v1134
        %v1169 = vpack.c.b16 %v1137, %v1135
        %1202 = vmatpush.bf16.msra.mxu0 %v1152
        %1203 = vmatpush.bf16.msra.mxu0 %v1150
        %1204 = vmatpush.bf16.msra.mxu0 %v1148
        %1205 = vmatpush.bf16.msra.mxu0 %v1146
        %1206 = vmatpush.bf16.msra.mxu0 %v1144
        %1207 = vmatpush.bf16.msra.mxu0 %v1142
        %1208 = vmatpush.bf16.msra.mxu0 %v1140
        %1209 = vmatpush.bf16.msra.mxu0 %v1138
        %1210 = vmatmul.bf16.gmra.mxu0 %v970
        %v1211 = vpop.f32.mrf.mxu0
        %v1212 = vadd.f32 %v1038, %v1211
        %v1213 = vpop.f32.mrf.mxu0
        %v1214 = vadd.f32 %v1038, %v1213
        %1215 = vmatmul.bf16.gmra.mxu0 %v972
        %v1216 = vpop.f32.mrf.mxu0
        %v1217 = vadd.f32 %v1038, %v1216
        %v1218 = vpop.f32.mrf.mxu0
        %v1219 = vadd.f32 %v1038, %v1218
        %1220 = vmatmul.bf16.gmra.mxu0 %v974
        %v1221 = vpop.f32.mrf.mxu0
        %v1222 = vadd.f32 %v1038, %v1221
        %v1223 = vpop.f32.mrf.mxu0
        %v1224 = vadd.f32 %v1038, %v1223
        %1225 = vmatmul.bf16.gmra.mxu0 %v976
        %v1226 = vpop.f32.mrf.mxu0
        %v1227 = vadd.f32 %v1038, %v1226
        %v1228 = vpop.f32.mrf.mxu0
        %v1229 = vadd.f32 %v1038, %v1228
        %1230 = vmatmul.bf16.gmra.mxu0 %v978
        %v1231 = vpop.f32.mrf.mxu0
        %v1232 = vpop.f32.mrf.mxu0
        %1233 = vmatmul.bf16.gmra.mxu0 %v980
        %v1234 = vpop.f32.mrf.mxu0
        %v1235 = vpop.f32.mrf.mxu0
        %1236 = vmatmul.bf16.gmra.mxu0 %v982
        %v1237 = vpop.f32.mrf.mxu0
        %v1238 = vpop.f32.mrf.mxu0
        %1239 = vmatmul.bf16.gmra.mxu0 %v984
        %v1240 = vpop.f32.mrf.mxu0
        %v1241 = vpop.f32.mrf.mxu0
        %1242 = vmatmul.bf16.gmra.mxu0 %v986
        %v1243 = vpop.f32.mrf.mxu0
        %v1244 = vpop.f32.mrf.mxu0
        %1245 = vmatmul.bf16.gmra.mxu0 %v988
        %v1246 = vpop.f32.mrf.mxu0
        %v1247 = vpop.f32.mrf.mxu0
        %1248 = vmatmul.bf16.gmra.mxu0 %v990
        %v1249 = vpop.f32.mrf.mxu0
        %v1250 = vpop.f32.mrf.mxu0
        %1251 = vmatmul.bf16.gmra.mxu0 %v992
        %v1252 = vpop.f32.mrf.mxu0
        %v1253 = vpop.f32.mrf.mxu0
        %1254 = vmatmul.bf16.gmra.mxu0 %v994
        %v1255 = vpop.f32.mrf.mxu0
        %v1256 = vpop.f32.mrf.mxu0
        %1257 = vmatmul.bf16.gmra.mxu0 %v996
        %v1258 = vpop.f32.mrf.mxu0
        %v1259 = vpop.f32.mrf.mxu0
        %1260 = vmatmul.bf16.gmra.mxu0 %v998
        %v1261 = vpop.f32.mrf.mxu0
        %v1262 = vpop.f32.mrf.mxu0
        %1263 = vmatmul.bf16.gmra.mxu0 %v1000
        %v1264 = vpop.f32.mrf.mxu0
        %v1265 = vpop.f32.mrf.mxu0
        %1266 = vdwg.mxu0
        %1267 = vmatpush.bf16.msra.mxu0 %v1168
        %1268 = vmatpush.bf16.msra.mxu0 %v1166
        %1269 = vmatpush.bf16.msra.mxu0 %v1164
        %1270 = vmatpush.bf16.msra.mxu0 %v1162
        %1271 = vmatpush.bf16.msra.mxu0 %v1160
        %1272 = vmatpush.bf16.msra.mxu0 %v1158
        %1273 = vmatpush.bf16.msra.mxu0 %v1156
        %1274 = vmatpush.bf16.msra.mxu0 %v1154
        %1275 = vmatmul.bf16.gmra.mxu0 %v971
        %v1276 = vpop.f32.mrf.mxu0
        %v1277 = vadd.f32 %v1212, %v1276
        %v1278 = vpop.f32.mrf.mxu0
        %v1279 = vadd.f32 %v1214, %v1278
        %1280 = vmatmul.bf16.gmra.mxu0 %v973
        %v1281 = vpop.f32.mrf.mxu0
        %v1282 = vadd.f32 %v1217, %v1281
        %v1283 = vpop.f32.mrf.mxu0
        %v1284 = vadd.f32 %v1219, %v1283
        %1285 = vmatmul.bf16.gmra.mxu0 %v975
        %v1286 = vpop.f32.mrf.mxu0
        %v1287 = vadd.f32 %v1222, %v1286
        %v1288 = vpop.f32.mrf.mxu0
        %v1289 = vadd.f32 %v1224, %v1288
        %1290 = vmatmul.bf16.gmra.mxu0 %v977
        %v1291 = vpop.f32.mrf.mxu0
        %v1292 = vadd.f32 %v1227, %v1291
        %v1293 = vpop.f32.mrf.mxu0
        %v1294 = vadd.f32 %v1229, %v1293
        %1295 = vmatmul.bf16.gmra.mxu0 %v979
        %v1296 = vpop.f32.mrf.mxu0
        %v1297 = vpop.f32.mrf.mxu0
        %1298 = vmatmul.bf16.gmra.mxu0 %v981
        %v1299 = vpop.f32.mrf.mxu0
        %v1300 = vpop.f32.mrf.mxu0
        %1301 = vmatmul.bf16.gmra.mxu0 %v983
        %v1302 = vpop.f32.mrf.mxu0
        %v1303 = vpop.f32.mrf.mxu0
        %1304 = vmatmul.bf16.gmra.mxu0 %v985
        %v1305 = vpop.f32.mrf.mxu0
        %v1306 = vpop.f32.mrf.mxu0
        %1307 = vmatmul.bf16.gmra.mxu0 %v987
        %v1308 = vpop.f32.mrf.mxu0
        %v1309 = vpop.f32.mrf.mxu0
        %1310 = vmatmul.bf16.gmra.mxu0 %v989
        %v1311 = vpop.f32.mrf.mxu0
        %v1312 = vpop.f32.mrf.mxu0
        %1313 = vmatmul.bf16.gmra.mxu0 %v991
        %v1314 = vpop.f32.mrf.mxu0
        %v1315 = vpop.f32.mrf.mxu0
        %1316 = vmatmul.bf16.gmra.mxu0 %v993
        %v1317 = vpop.f32.mrf.mxu0
        %v1318 = vpop.f32.mrf.mxu0
        %1319 = vmatmul.bf16.gmra.mxu0 %v995
        %v1320 = vpop.f32.mrf.mxu0
        %v1321 = vpop.f32.mrf.mxu0
        %1322 = vmatmul.bf16.gmra.mxu0 %v997
        %v1323 = vpop.f32.mrf.mxu0
        %v1324 = vpop.f32.mrf.mxu0
        %1325 = vmatmul.bf16.gmra.mxu0 %v999
        %v1326 = vpop.f32.mrf.mxu0
        %v1327 = vpop.f32.mrf.mxu0
        %1328 = vmatmul.bf16.gmra.mxu0 %v1001
        %v1329 = vpop.f32.mrf.mxu0
        %v1330 = vpop.f32.mrf.mxu0
        %1331 = vdwg.mxu0
        %1332 = vmatpush.bf16.msra.mxu0 %v1153
        %1333 = vmatpush.bf16.msra.mxu0 %v1151
        %1334 = vmatpush.bf16.msra.mxu0 %v1149
        %1335 = vmatpush.bf16.msra.mxu0 %v1147
        %1336 = vmatpush.bf16.msra.mxu0 %v1145
        %1337 = vmatpush.bf16.msra.mxu0 %v1143
        %1338 = vmatpush.bf16.msra.mxu0 %v1141
        %1339 = vmatpush.bf16.msra.mxu0 %v1139
        %1340 = vmatmul.bf16.gmra.mxu0 %v970
        %v1341 = vpop.f32.mrf.mxu0
        %v1342 = vadd.f32 %v1039, %v1341
        %v1343 = vpop.f32.mrf.mxu0
        %v1344 = vadd.f32 %v1039, %v1343
        %1345 = vmatmul.bf16.gmra.mxu0 %v972
        %v1346 = vpop.f32.mrf.mxu0
        %v1347 = vadd.f32 %v1039, %v1346
        %v1348 = vpop.f32.mrf.mxu0
        %v1349 = vadd.f32 %v1039, %v1348
        %1350 = vmatmul.bf16.gmra.mxu0 %v974
        %v1351 = vpop.f32.mrf.mxu0
        %v1352 = vadd.f32 %v1039, %v1351
        %v1353 = vpop.f32.mrf.mxu0
        %v1354 = vadd.f32 %v1039, %v1353
        %1355 = vmatmul.bf16.gmra.mxu0 %v976
        %v1356 = vpop.f32.mrf.mxu0
        %v1357 = vadd.f32 %v1039, %v1356
        %v1358 = vpop.f32.mrf.mxu0
        %v1359 = vadd.f32 %v1039, %v1358
        %1360 = vmatmul.bf16.gmra.mxu0 %v978
        %v1361 = vpop.f32.mrf.mxu0
        %v1362 = vpop.f32.mrf.mxu0
        %1363 = vmatmul.bf16.gmra.mxu0 %v980
        %v1364 = vpop.f32.mrf.mxu0
        %v1365 = vpop.f32.mrf.mxu0
        %1366 = vmatmul.bf16.gmra.mxu0 %v982
        %v1367 = vpop.f32.mrf.mxu0
        %v1368 = vpop.f32.mrf.mxu0
        %1369 = vmatmul.bf16.gmra.mxu0 %v984
        %v1370 = vpop.f32.mrf.mxu0
        %v1371 = vpop.f32.mrf.mxu0
        %1372 = vmatmul.bf16.gmra.mxu0 %v986
        %v1373 = vpop.f32.mrf.mxu0
        %v1374 = vpop.f32.mrf.mxu0
        %1375 = vmatmul.bf16.gmra.mxu0 %v988
        %v1376 = vpop.f32.mrf.mxu0
        %v1377 = vpop.f32.mrf.mxu0
        %1378 = vmatmul.bf16.gmra.mxu0 %v990
        %v1379 = vpop.f32.mrf.mxu0
        %v1380 = vpop.f32.mrf.mxu0
        %1381 = vmatmul.bf16.gmra.mxu0 %v992
        %v1382 = vpop.f32.mrf.mxu0
        %v1383 = vpop.f32.mrf.mxu0
        %1384 = vmatmul.bf16.gmra.mxu0 %v994
        %v1385 = vpop.f32.mrf.mxu0
        %v1386 = vpop.f32.mrf.mxu0
        %1387 = vmatmul.bf16.gmra.mxu0 %v996
        %v1388 = vpop.f32.mrf.mxu0
        %v1389 = vpop.f32.mrf.mxu0
        %1390 = vmatmul.bf16.gmra.mxu0 %v998
        %v1391 = vpop.f32.mrf.mxu0
        %v1392 = vpop.f32.mrf.mxu0
        %1393 = vmatmul.bf16.gmra.mxu0 %v1000
        %v1394 = vpop.f32.mrf.mxu0
        %v1395 = vpop.f32.mrf.mxu0
        %1396 = vdwg.mxu0
        %1397 = vmatpush.bf16.msra.mxu0 %v1169
        %1398 = vmatpush.bf16.msra.mxu0 %v1167
        %1399 = vmatpush.bf16.msra.mxu0 %v1165
        %1400 = vmatpush.bf16.msra.mxu0 %v1163
        %1401 = vmatpush.bf16.msra.mxu0 %v1161
        %1402 = vmatpush.bf16.msra.mxu0 %v1159
        %1403 = vmatpush.bf16.msra.mxu0 %v1157
        %1404 = vmatpush.bf16.msra.mxu0 %v1155
        %1405 = vmatmul.bf16.gmra.mxu0 %v971
        %v1406 = vpop.f32.mrf.mxu0
        %v1407 = vadd.f32 %v1342, %v1406
        %v1408 = vpop.f32.mrf.mxu0
        %v1409 = vadd.f32 %v1344, %v1408
        %1410 = vmatmul.bf16.gmra.mxu0 %v973
        %v1411 = vpop.f32.mrf.mxu0
        %v1412 = vadd.f32 %v1347, %v1411
        %v1413 = vpop.f32.mrf.mxu0
        %v1414 = vadd.f32 %v1349, %v1413
        %1415 = vmatmul.bf16.gmra.mxu0 %v975
        %v1416 = vpop.f32.mrf.mxu0
        %v1417 = vadd.f32 %v1352, %v1416
        %v1418 = vpop.f32.mrf.mxu0
        %v1419 = vadd.f32 %v1354, %v1418
        %1420 = vmatmul.bf16.gmra.mxu0 %v977
        %v1421 = vpop.f32.mrf.mxu0
        %v1422 = vadd.f32 %v1357, %v1421
        %v1423 = vpop.f32.mrf.mxu0
        %v1424 = vadd.f32 %v1359, %v1423
        %1425 = vmatmul.bf16.gmra.mxu0 %v979
        %v1426 = vpop.f32.mrf.mxu0
        %v1427 = vpop.f32.mrf.mxu0
        %1428 = vmatmul.bf16.gmra.mxu0 %v981
        %v1429 = vpop.f32.mrf.mxu0
        %v1430 = vpop.f32.mrf.mxu0
        %1431 = vmatmul.bf16.gmra.mxu0 %v983
        %v1432 = vpop.f32.mrf.mxu0
        %v1433 = vpop.f32.mrf.mxu0
        %1434 = vmatmul.bf16.gmra.mxu0 %v985
        %v1435 = vpop.f32.mrf.mxu0
        %v1436 = vpop.f32.mrf.mxu0
        %1437 = vmatmul.bf16.gmra.mxu0 %v987
        %v1438 = vpop.f32.mrf.mxu0
        %v1439 = vpop.f32.mrf.mxu0
        %1440 = vmatmul.bf16.gmra.mxu0 %v989
        %v1441 = vpop.f32.mrf.mxu0
        %v1442 = vpop.f32.mrf.mxu0
        %1443 = vmatmul.bf16.gmra.mxu0 %v991
        %v1444 = vpop.f32.mrf.mxu0
        %v1445 = vpop.f32.mrf.mxu0
        %1446 = vmatmul.bf16.gmra.mxu0 %v993
        %v1447 = vpop.f32.mrf.mxu0
        %v1448 = vpop.f32.mrf.mxu0
        %1449 = vmatmul.bf16.gmra.mxu0 %v995
        %v1450 = vpop.f32.mrf.mxu0
        %v1451 = vpop.f32.mrf.mxu0
        %1452 = vmatmul.bf16.gmra.mxu0 %v997
        %v1453 = vpop.f32.mrf.mxu0
        %v1454 = vpop.f32.mrf.mxu0
        %1455 = vmatmul.bf16.gmra.mxu0 %v999
        %v1456 = vpop.f32.mrf.mxu0
        %v1457 = vpop.f32.mrf.mxu0
        %1458 = vmatmul.bf16.gmra.mxu0 %v1001
        %v1459 = vpop.f32.mrf.mxu0
        %v1460 = vpop.f32.mrf.mxu0
        %1461 = vdwg.mxu0
        %v1462 = vmax.f32 %v1277, 0.0
        %v1463 = vmax.f32 %v1407, 0.0
        %v1464 = vmax.f32 %v1279, 0.0
        %v1465 = vmax.f32 %v1409, 0.0
        %v1466 = vmax.f32 %v1282, 0.0
        %v1467 = vmax.f32 %v1412, 0.0
        %v1468 = vmax.f32 %v1284, 0.0
        %v1469 = vmax.f32 %v1414, 0.0
        %v1470 = vmax.f32 %v1287, 0.0
        %v1471 = vmax.f32 %v1417, 0.0
        %v1472 = vmax.f32 %v1289, 0.0
        %v1473 = vmax.f32 %v1419, 0.0
        %v1474 = vmax.f32 %v1292, 0.0
        %v1475 = vmax.f32 %v1422, 0.0
        %v1476 = vmax.f32 %v1294, 0.0
        %v1477 = vmax.f32 %v1424, 0.0
        %v1478 = vpack.c.bf16 %v1464, %v1462
        %v1479 = vpack.c.bf16 %v1465, %v1463
        %v1480 = vpack.c.bf16 %v1468, %v1466
        %v1481 = vpack.c.bf16 %v1469, %v1467
        %v1482 = vpack.c.bf16 %v1472, %v1470
        %v1483 = vpack.c.bf16 %v1473, %v1471
        %v1484 = vpack.c.bf16 %v1476, %v1474
        %v1485 = vpack.c.bf16 %v1477, %v1475
        %s1486 = scalar_lea.vmem [#allocation5], 512
        %v1487 = vld [vmem:[%s1486] sm:$0xff]
        %v1488 = vld [vmem:[%s1486 + $0x8] sm:$0xff]
        %v1489 = vld [vmem:[%s1486 + $0x10] sm:$0xff]
        %v1490 = vld [vmem:[%s1486 + $0x18] sm:$0xff]
        %v1491 = vld [vmem:[%s1486 + $0x20] sm:$0xff]
        %v1492 = vld [vmem:[%s1486 + $0x28] sm:$0xff]
        %v1493 = vld [vmem:[%s1486 + $0x30] sm:$0xff]
        %v1494 = vld [vmem:[%s1486 + $0x38] sm:$0xff]
        %v1495 = vld [vmem:[%s1486 + $0x40] sm:$0xff]
        %v1496 = vld [vmem:[%s1486 + $0x48] sm:$0xff]
        %v1497 = vld [vmem:[%s1486 + $0x50] sm:$0xff]
        %v1498 = vld [vmem:[%s1486 + $0x58] sm:$0xff]
        %v1499 = vld [vmem:[%s1486 + $0x60] sm:$0xff]
        %v1500 = vld [vmem:[%s1486 + $0x68] sm:$0xff]
        %v1501 = vld [vmem:[%s1486 + $0x70] sm:$0xff]
        %v1502 = vld [vmem:[%s1486 + $0x78] sm:$0xff]
        %v1503 = vld [vmem:[%s1486 + $0x80] sm:$0xff]
        %v1504 = vld [vmem:[%s1486 + $0x88] sm:$0xff]
        %v1505 = vld [vmem:[%s1486 + $0x90] sm:$0xff]
        %v1506 = vld [vmem:[%s1486 + $0x98] sm:$0xff]
        %v1507 = vld [vmem:[%s1486 + $0xa0] sm:$0xff]
        %v1508 = vld [vmem:[%s1486 + $0xa8] sm:$0xff]
        %v1509 = vld [vmem:[%s1486 + $0xb0] sm:$0xff]
        %v1510 = vld [vmem:[%s1486 + $0xb8] sm:$0xff]
        %v1511 = vld [vmem:[%s1486 + $0xc0] sm:$0xff]
        %v1512 = vld [vmem:[%s1486 + $0xc8] sm:$0xff]
        %v1513 = vld [vmem:[%s1486 + $0xd0] sm:$0xff]
        %v1514 = vld [vmem:[%s1486 + $0xd8] sm:$0xff]
        %v1515 = vld [vmem:[%s1486 + $0xe0] sm:$0xff]
        %v1516 = vld [vmem:[%s1486 + $0xe8] sm:$0xff]
        %v1517 = vld [vmem:[%s1486 + $0xf0] sm:$0xff]
        %v1518 = vld [vmem:[%s1486 + $0xf8] sm:$0xff]
        %s1519 = scalar_lea.vmem [#allocation7], 4
        %v1520 = vld [vmem:[%s1519] sm:$0x3]
        %v1522 = vperm.slane %v1520, 0
        %v1523 = vperm.slane %v1520, 1
        %v1558 = vunpack.c.l.b16 %v1487
        %v1559 = vunpack.c.h.b16 %v1487
        %v1560 = vunpack.c.l.b16 %v1488
        %v1561 = vunpack.c.h.b16 %v1488
        %v1562 = vunpack.c.l.b16 %v1489
        %v1563 = vunpack.c.h.b16 %v1489
        %v1564 = vunpack.c.l.b16 %v1490
        %v1565 = vunpack.c.h.b16 %v1490
        %v1566 = vunpack.c.l.b16 %v1491
        %v1567 = vunpack.c.h.b16 %v1491
        %v1568 = vunpack.c.l.b16 %v1492
        %v1569 = vunpack.c.h.b16 %v1492
        %v1570 = vunpack.c.l.b16 %v1493
        %v1571 = vunpack.c.h.b16 %v1493
        %v1572 = vunpack.c.l.b16 %v1494
        %v1573 = vunpack.c.h.b16 %v1494
        %v1574 = vunpack.c.l.b16 %v1495
        %v1575 = vunpack.c.h.b16 %v1495
        %v1576 = vunpack.c.l.b16 %v1496
        %v1577 = vunpack.c.h.b16 %v1496
        %v1578 = vunpack.c.l.b16 %v1497
        %v1579 = vunpack.c.h.b16 %v1497
        %v1580 = vunpack.c.l.b16 %v1498
        %v1581 = vunpack.c.h.b16 %v1498
        %v1582 = vunpack.c.l.b16 %v1499
        %v1583 = vunpack.c.h.b16 %v1499
        %v1584 = vunpack.c.l.b16 %v1500
        %v1585 = vunpack.c.h.b16 %v1500
        %v1586 = vunpack.c.l.b16 %v1501
        %v1587 = vunpack.c.h.b16 %v1501
        %v1588 = vunpack.c.l.b16 %v1502
        %v1589 = vunpack.c.h.b16 %v1502
        %v1590 = vunpack.c.l.b16 %v1503
        %v1591 = vunpack.c.h.b16 %v1503
        %v1592 = vunpack.c.l.b16 %v1504
        %v1593 = vunpack.c.h.b16 %v1504
        %v1594 = vunpack.c.l.b16 %v1505
        %v1595 = vunpack.c.h.b16 %v1505
        %v1596 = vunpack.c.l.b16 %v1506
        %v1597 = vunpack.c.h.b16 %v1506
        %v1598 = vunpack.c.l.b16 %v1507
        %v1599 = vunpack.c.h.b16 %v1507
        %v1600 = vunpack.c.l.b16 %v1508
        %v1601 = vunpack.c.h.b16 %v1508
        %v1602 = vunpack.c.l.b16 %v1509
        %v1603 = vunpack.c.h.b16 %v1509
        %v1604 = vunpack.c.l.b16 %v1510
        %v1605 = vunpack.c.h.b16 %v1510
        %v1606 = vunpack.c.l.b16 %v1511
        %v1607 = vunpack.c.h.b16 %v1511
        %v1608 = vunpack.c.l.b16 %v1512
        %v1609 = vunpack.c.h.b16 %v1512
        %v1610 = vunpack.c.l.b16 %v1513
        %v1611 = vunpack.c.h.b16 %v1513
        %v1612 = vunpack.c.l.b16 %v1514
        %v1613 = vunpack.c.h.b16 %v1514
        %v1614 = vunpack.c.l.b16 %v1515
        %v1615 = vunpack.c.h.b16 %v1515
        %v1616 = vunpack.c.l.b16 %v1516
        %v1617 = vunpack.c.h.b16 %v1516
        %v1618 = vunpack.c.l.b16 %v1517
        %v1619 = vunpack.c.h.b16 %v1517
        %v1620 = vunpack.c.l.b16 %v1518
        %v1621 = vunpack.c.h.b16 %v1518
        %v1622 = vpack.c.b16 %v1560, %v1558
        %v1623 = vpack.c.b16 %v1561, %v1559
        %v1624 = vpack.c.b16 %v1564, %v1562
        %v1625 = vpack.c.b16 %v1565, %v1563
        %v1626 = vpack.c.b16 %v1568, %v1566
        %v1627 = vpack.c.b16 %v1569, %v1567
        %v1628 = vpack.c.b16 %v1572, %v1570
        %v1629 = vpack.c.b16 %v1573, %v1571
        %v1630 = vpack.c.b16 %v1576, %v1574
        %v1631 = vpack.c.b16 %v1577, %v1575
        %v1632 = vpack.c.b16 %v1580, %v1578
        %v1633 = vpack.c.b16 %v1581, %v1579
        %v1634 = vpack.c.b16 %v1584, %v1582
        %v1635 = vpack.c.b16 %v1585, %v1583
        %v1636 = vpack.c.b16 %v1588, %v1586
        %v1637 = vpack.c.b16 %v1589, %v1587
        %v1638 = vpack.c.b16 %v1592, %v1590
        %v1639 = vpack.c.b16 %v1593, %v1591
        %v1640 = vpack.c.b16 %v1596, %v1594
        %v1641 = vpack.c.b16 %v1597, %v1595
        %v1642 = vpack.c.b16 %v1600, %v1598
        %v1643 = vpack.c.b16 %v1601, %v1599
        %v1644 = vpack.c.b16 %v1604, %v1602
        %v1645 = vpack.c.b16 %v1605, %v1603
        %v1646 = vpack.c.b16 %v1608, %v1606
        %v1647 = vpack.c.b16 %v1609, %v1607
        %v1648 = vpack.c.b16 %v1612, %v1610
        %v1649 = vpack.c.b16 %v1613, %v1611
        %v1650 = vpack.c.b16 %v1616, %v1614
        %v1651 = vpack.c.b16 %v1617, %v1615
        %v1652 = vpack.c.b16 %v1620, %v1618
        %v1653 = vpack.c.b16 %v1621, %v1619
        %1686 = vmatpush.bf16.msra.mxu0 %v1636
        %1687 = vmatpush.bf16.msra.mxu0 %v1634
        %1688 = vmatpush.bf16.msra.mxu0 %v1632
        %1689 = vmatpush.bf16.msra.mxu0 %v1630
        %1690 = vmatpush.bf16.msra.mxu0 %v1628
        %1691 = vmatpush.bf16.msra.mxu0 %v1626
        %1692 = vmatpush.bf16.msra.mxu0 %v1624
        %1693 = vmatpush.bf16.msra.mxu0 %v1622
        %1694 = vmatmul.bf16.gmra.mxu0 %v1478
        %v1695 = vpop.f32.mrf.mxu0
        %v1696 = vadd.f32 %v1522, %v1695
        %v1697 = vpop.f32.mrf.mxu0
        %v1698 = vadd.f32 %v1522, %v1697
        %1699 = vmatmul.bf16.gmra.mxu0 %v1480
        %v1700 = vpop.f32.mrf.mxu0
        %v1701 = vadd.f32 %v1522, %v1700
        %v1702 = vpop.f32.mrf.mxu0
        %v1703 = vadd.f32 %v1522, %v1702
        %1704 = vmatmul.bf16.gmra.mxu0 %v1482
        %v1705 = vpop.f32.mrf.mxu0
        %v1706 = vadd.f32 %v1522, %v1705
        %v1707 = vpop.f32.mrf.mxu0
        %v1708 = vadd.f32 %v1522, %v1707
        %1709 = vmatmul.bf16.gmra.mxu0 %v1484
        %v1710 = vpop.f32.mrf.mxu0
        %v1711 = vadd.f32 %v1522, %v1710
        %v1712 = vpop.f32.mrf.mxu0
        %v1713 = vadd.f32 %v1522, %v1712
        %1714 = vdwg.mxu0
        %1715 = vmatpush.bf16.msra.mxu0 %v1652
        %1716 = vmatpush.bf16.msra.mxu0 %v1650
        %1717 = vmatpush.bf16.msra.mxu0 %v1648
        %1718 = vmatpush.bf16.msra.mxu0 %v1646
        %1719 = vmatpush.bf16.msra.mxu0 %v1644
        %1720 = vmatpush.bf16.msra.mxu0 %v1642
        %1721 = vmatpush.bf16.msra.mxu0 %v1640
        %1722 = vmatpush.bf16.msra.mxu0 %v1638
        %1723 = vmatmul.bf16.gmra.mxu0 %v1479
        %v1724 = vpop.f32.mrf.mxu0
        %v1725 = vadd.f32 %v1696, %v1724
        %v1726 = vpop.f32.mrf.mxu0
        %v1727 = vadd.f32 %v1698, %v1726
        %1728 = vmatmul.bf16.gmra.mxu0 %v1481
        %v1729 = vpop.f32.mrf.mxu0
        %v1730 = vadd.f32 %v1701, %v1729
        %v1731 = vpop.f32.mrf.mxu0
        %v1732 = vadd.f32 %v1703, %v1731
        %1733 = vmatmul.bf16.gmra.mxu0 %v1483
        %v1734 = vpop.f32.mrf.mxu0
        %v1735 = vadd.f32 %v1706, %v1734
        %v1736 = vpop.f32.mrf.mxu0
        %v1737 = vadd.f32 %v1708, %v1736
        %1738 = vmatmul.bf16.gmra.mxu0 %v1485
        %v1739 = vpop.f32.mrf.mxu0
        %v1740 = vadd.f32 %v1711, %v1739
        %v1741 = vpop.f32.mrf.mxu0
        %v1742 = vadd.f32 %v1713, %v1741
        %1743 = vdwg.mxu0
        %1744 = vmatpush.bf16.msra.mxu0 %v1637
        %1745 = vmatpush.bf16.msra.mxu0 %v1635
        %1746 = vmatpush.bf16.msra.mxu0 %v1633
        %1747 = vmatpush.bf16.msra.mxu0 %v1631
        %1748 = vmatpush.bf16.msra.mxu0 %v1629
        %1749 = vmatpush.bf16.msra.mxu0 %v1627
        %1750 = vmatpush.bf16.msra.mxu0 %v1625
        %1751 = vmatpush.bf16.msra.mxu0 %v1623
        %1752 = vmatmul.bf16.gmra.mxu0 %v1478
        %v1753 = vpop.f32.mrf.mxu0
        %v1754 = vadd.f32 %v1523, %v1753
        %v1755 = vpop.f32.mrf.mxu0
        %v1756 = vadd.f32 %v1523, %v1755
        %1757 = vmatmul.bf16.gmra.mxu0 %v1480
        %v1758 = vpop.f32.mrf.mxu0
        %v1759 = vadd.f32 %v1523, %v1758
        %v1760 = vpop.f32.mrf.mxu0
        %v1761 = vadd.f32 %v1523, %v1760
        %1762 = vmatmul.bf16.gmra.mxu0 %v1482
        %v1763 = vpop.f32.mrf.mxu0
        %v1764 = vadd.f32 %v1523, %v1763
        %v1765 = vpop.f32.mrf.mxu0
        %v1766 = vadd.f32 %v1523, %v1765
        %1767 = vmatmul.bf16.gmra.mxu0 %v1484
        %v1768 = vpop.f32.mrf.mxu0
        %v1769 = vadd.f32 %v1523, %v1768
        %v1770 = vpop.f32.mrf.mxu0
        %v1771 = vadd.f32 %v1523, %v1770
        %1772 = vdwg.mxu0
        %1773 = vmatpush.bf16.msra.mxu0 %v1653
        %1774 = vmatpush.bf16.msra.mxu0 %v1651
        %1775 = vmatpush.bf16.msra.mxu0 %v1649
        %1776 = vmatpush.bf16.msra.mxu0 %v1647
        %1777 = vmatpush.bf16.msra.mxu0 %v1645
        %1778 = vmatpush.bf16.msra.mxu0 %v1643
        %1779 = vmatpush.bf16.msra.mxu0 %v1641
        %1780 = vmatpush.bf16.msra.mxu0 %v1639
        %1781 = vmatmul.bf16.gmra.mxu0 %v1479
        %v1782 = vpop.f32.mrf.mxu0
        %v1783 = vadd.f32 %v1754, %v1782
        %v1784 = vpop.f32.mrf.mxu0
        %v1785 = vadd.f32 %v1756, %v1784
        %1786 = vmatmul.bf16.gmra.mxu0 %v1481
        %v1787 = vpop.f32.mrf.mxu0
        %v1788 = vadd.f32 %v1759, %v1787
        %v1789 = vpop.f32.mrf.mxu0
        %v1790 = vadd.f32 %v1761, %v1789
        %1791 = vmatmul.bf16.gmra.mxu0 %v1483
        %v1792 = vpop.f32.mrf.mxu0
        %v1793 = vadd.f32 %v1764, %v1792
        %v1794 = vpop.f32.mrf.mxu0
        %v1795 = vadd.f32 %v1766, %v1794
        %1796 = vmatmul.bf16.gmra.mxu0 %v1485
        %v1797 = vpop.f32.mrf.mxu0
        %v1798 = vadd.f32 %v1769, %v1797
        %v1799 = vpop.f32.mrf.mxu0
        %v1800 = vadd.f32 %v1771, %v1799
        %1801 = vdwg.mxu0
        %v1802 = vmax.f32 %v1725, 0.0
        %v1803 = vmax.f32 %v1783, 0.0
        %v1804 = vmax.f32 %v1727, 0.0
        %v1805 = vmax.f32 %v1785, 0.0
        %v1806 = vmax.f32 %v1730, 0.0
        %v1807 = vmax.f32 %v1788, 0.0
        %v1808 = vmax.f32 %v1732, 0.0
        %v1809 = vmax.f32 %v1790, 0.0
        %v1810 = vmax.f32 %v1735, 0.0
        %v1811 = vmax.f32 %v1793, 0.0
        %v1812 = vmax.f32 %v1737, 0.0
        %v1813 = vmax.f32 %v1795, 0.0
        %v1814 = vmax.f32 %v1740, 0.0
        %v1815 = vmax.f32 %v1798, 0.0
        %v1816 = vmax.f32 %v1742, 0.0
        %v1817 = vmax.f32 %v1800, 0.0
        %v1818 = vpack.c.bf16 %v1804, %v1802
        %v1819 = vpack.c.bf16 %v1805, %v1803
        %v1820 = vpack.c.bf16 %v1808, %v1806
        %v1821 = vpack.c.bf16 %v1809, %v1807
        %v1822 = vpack.c.bf16 %v1812, %v1810
        %v1823 = vpack.c.bf16 %v1813, %v1811
        %v1824 = vpack.c.bf16 %v1816, %v1814
        %v1825 = vpack.c.bf16 %v1817, %v1815
        %s1826 = scalar_lea.vmem [#allocation5], 768
        %v1827 = vld [vmem:[%s1826] sm:$0xff]
        %v1828 = vld [vmem:[%s1826 + $0x8] sm:$0xff]
        %v1829 = vld [vmem:[%s1826 + $0x10] sm:$0xff]
        %v1830 = vld [vmem:[%s1826 + $0x18] sm:$0xff]
        %v1831 = vld [vmem:[%s1826 + $0x20] sm:$0xff]
        %v1832 = vld [vmem:[%s1826 + $0x28] sm:$0xff]
        %v1833 = vld [vmem:[%s1826 + $0x30] sm:$0xff]
        %v1834 = vld [vmem:[%s1826 + $0x38] sm:$0xff]
        %v1835 = vld [vmem:[%s1826 + $0x40] sm:$0xff]
        %v1836 = vld [vmem:[%s1826 + $0x48] sm:$0xff]
        %v1837 = vld [vmem:[%s1826 + $0x50] sm:$0xff]
        %v1838 = vld [vmem:[%s1826 + $0x58] sm:$0xff]
        %v1839 = vld [vmem:[%s1826 + $0x60] sm:$0xff]
        %v1840 = vld [vmem:[%s1826 + $0x68] sm:$0xff]
        %v1841 = vld [vmem:[%s1826 + $0x70] sm:$0xff]
        %v1842 = vld [vmem:[%s1826 + $0x78] sm:$0xff]
        %v1843 = vld [vmem:[%s1826 + $0x80] sm:$0xff]
        %v1844 = vld [vmem:[%s1826 + $0x88] sm:$0xff]
        %v1845 = vld [vmem:[%s1826 + $0x90] sm:$0xff]
        %v1846 = vld [vmem:[%s1826 + $0x98] sm:$0xff]
        %v1847 = vld [vmem:[%s1826 + $0xa0] sm:$0xff]
        %v1848 = vld [vmem:[%s1826 + $0xa8] sm:$0xff]
        %v1849 = vld [vmem:[%s1826 + $0xb0] sm:$0xff]
        %v1850 = vld [vmem:[%s1826 + $0xb8] sm:$0xff]
        %v1851 = vld [vmem:[%s1826 + $0xc0] sm:$0xff]
        %v1852 = vld [vmem:[%s1826 + $0xc8] sm:$0xff]
        %v1853 = vld [vmem:[%s1826 + $0xd0] sm:$0xff]
        %v1854 = vld [vmem:[%s1826 + $0xd8] sm:$0xff]
        %v1855 = vld [vmem:[%s1826 + $0xe0] sm:$0xff]
        %v1856 = vld [vmem:[%s1826 + $0xe8] sm:$0xff]
        %v1857 = vld [vmem:[%s1826 + $0xf0] sm:$0xff]
        %v1858 = vld [vmem:[%s1826 + $0xf8] sm:$0xff]
        %s1859 = scalar_lea.vmem [#allocation7], 6
        %v1860 = vld [vmem:[%s1859] sm:$0x3]
        %v1862 = vperm.slane %v1860, 0
        %v1863 = vperm.slane %v1860, 1
        %v1898 = vunpack.c.l.b16 %v1827
        %v1899 = vunpack.c.h.b16 %v1827
        %v1900 = vunpack.c.l.b16 %v1828
        %v1901 = vunpack.c.h.b16 %v1828
        %v1902 = vunpack.c.l.b16 %v1829
        %v1903 = vunpack.c.h.b16 %v1829
        %v1904 = vunpack.c.l.b16 %v1830
        %v1905 = vunpack.c.h.b16 %v1830
        %v1906 = vunpack.c.l.b16 %v1831
        %v1907 = vunpack.c.h.b16 %v1831
        %v1908 = vunpack.c.l.b16 %v1832
        %v1909 = vunpack.c.h.b16 %v1832
        %v1910 = vunpack.c.l.b16 %v1833
        %v1911 = vunpack.c.h.b16 %v1833
        %v1912 = vunpack.c.l.b16 %v1834
        %v1913 = vunpack.c.h.b16 %v1834
        %v1914 = vunpack.c.l.b16 %v1835
        %v1915 = vunpack.c.h.b16 %v1835
        %v1916 = vunpack.c.l.b16 %v1836
        %v1917 = vunpack.c.h.b16 %v1836
        %v1918 = vunpack.c.l.b16 %v1837
        %v1919 = vunpack.c.h.b16 %v1837
        %v1920 = vunpack.c.l.b16 %v1838
        %v1921 = vunpack.c.h.b16 %v1838
        %v1922 = vunpack.c.l.b16 %v1839
        %v1923 = vunpack.c.h.b16 %v1839
        %v1924 = vunpack.c.l.b16 %v1840
        %v1925 = vunpack.c.h.b16 %v1840
        %v1926 = vunpack.c.l.b16 %v1841
        %v1927 = vunpack.c.h.b16 %v1841
        %v1928 = vunpack.c.l.b16 %v1842
        %v1929 = vunpack.c.h.b16 %v1842
        %v1930 = vunpack.c.l.b16 %v1843
        %v1931 = vunpack.c.h.b16 %v1843
        %v1932 = vunpack.c.l.b16 %v1844
        %v1933 = vunpack.c.h.b16 %v1844
        %v1934 = vunpack.c.l.b16 %v1845
        %v1935 = vunpack.c.h.b16 %v1845
        %v1936 = vunpack.c.l.b16 %v1846
        %v1937 = vunpack.c.h.b16 %v1846
        %v1938 = vunpack.c.l.b16 %v1847
        %v1939 = vunpack.c.h.b16 %v1847
        %v1940 = vunpack.c.l.b16 %v1848
        %v1941 = vunpack.c.h.b16 %v1848
        %v1942 = vunpack.c.l.b16 %v1849
        %v1943 = vunpack.c.h.b16 %v1849
        %v1944 = vunpack.c.l.b16 %v1850
        %v1945 = vunpack.c.h.b16 %v1850
        %v1946 = vunpack.c.l.b16 %v1851
        %v1947 = vunpack.c.h.b16 %v1851
        %v1948 = vunpack.c.l.b16 %v1852
        %v1949 = vunpack.c.h.b16 %v1852
        %v1950 = vunpack.c.l.b16 %v1853
        %v1951 = vunpack.c.h.b16 %v1853
        %v1952 = vunpack.c.l.b16 %v1854
        %v1953 = vunpack.c.h.b16 %v1854
        %v1954 = vunpack.c.l.b16 %v1855
        %v1955 = vunpack.c.h.b16 %v1855
        %v1956 = vunpack.c.l.b16 %v1856
        %v1957 = vunpack.c.h.b16 %v1856
        %v1958 = vunpack.c.l.b16 %v1857
        %v1959 = vunpack.c.h.b16 %v1857
        %v1960 = vunpack.c.l.b16 %v1858
        %v1961 = vunpack.c.h.b16 %v1858
        %v1962 = vpack.c.b16 %v1900, %v1898
        %v1963 = vpack.c.b16 %v1901, %v1899
        %v1964 = vpack.c.b16 %v1904, %v1902
        %v1965 = vpack.c.b16 %v1905, %v1903
        %v1966 = vpack.c.b16 %v1908, %v1906
        %v1967 = vpack.c.b16 %v1909, %v1907
        %v1968 = vpack.c.b16 %v1912, %v1910
        %v1969 = vpack.c.b16 %v1913, %v1911
        %v1970 = vpack.c.b16 %v1916, %v1914
        %v1971 = vpack.c.b16 %v1917, %v1915
        %v1972 = vpack.c.b16 %v1920, %v1918
        %v1973 = vpack.c.b16 %v1921, %v1919
        %v1974 = vpack.c.b16 %v1924, %v1922
        %v1975 = vpack.c.b16 %v1925, %v1923
        %v1976 = vpack.c.b16 %v1928, %v1926
        %v1977 = vpack.c.b16 %v1929, %v1927
        %v1978 = vpack.c.b16 %v1932, %v1930
        %v1979 = vpack.c.b16 %v1933, %v1931
        %v1980 = vpack.c.b16 %v1936, %v1934
        %v1981 = vpack.c.b16 %v1937, %v1935
        %v1982 = vpack.c.b16 %v1940, %v1938
        %v1983 = vpack.c.b16 %v1941, %v1939
        %v1984 = vpack.c.b16 %v1944, %v1942
        %v1985 = vpack.c.b16 %v1945, %v1943
        %v1986 = vpack.c.b16 %v1948, %v1946
        %v1987 = vpack.c.b16 %v1949, %v1947
        %v1988 = vpack.c.b16 %v1952, %v1950
        %v1989 = vpack.c.b16 %v1953, %v1951
        %v1990 = vpack.c.b16 %v1956, %v1954
        %v1991 = vpack.c.b16 %v1957, %v1955
        %v1992 = vpack.c.b16 %v1960, %v1958
        %v1993 = vpack.c.b16 %v1961, %v1959
        %2026 = vmatpush.bf16.msra.mxu0 %v1976
        %2027 = vmatpush.bf16.msra.mxu0 %v1974
        %2028 = vmatpush.bf16.msra.mxu0 %v1972
        %2029 = vmatpush.bf16.msra.mxu0 %v1970
        %2030 = vmatpush.bf16.msra.mxu0 %v1968
        %2031 = vmatpush.bf16.msra.mxu0 %v1966
        %2032 = vmatpush.bf16.msra.mxu0 %v1964
        %2033 = vmatpush.bf16.msra.mxu0 %v1962
        %2034 = vmatmul.bf16.gmra.mxu0 %v1818
        %v2035 = vpop.f32.mrf.mxu0
        %v2036 = vadd.f32 %v1862, %v2035
        %v2037 = vpop.f32.mrf.mxu0
        %v2038 = vadd.f32 %v1862, %v2037
        %2039 = vmatmul.bf16.gmra.mxu0 %v1820
        %v2040 = vpop.f32.mrf.mxu0
        %v2041 = vpop.f32.mrf.mxu0
        %2042 = vmatmul.bf16.gmra.mxu0 %v1822
        %v2043 = vpop.f32.mrf.mxu0
        %v2044 = vpop.f32.mrf.mxu0
        %2045 = vmatmul.bf16.gmra.mxu0 %v1824
        %v2046 = vpop.f32.mrf.mxu0
        %v2047 = vpop.f32.mrf.mxu0
        %2048 = vdwg.mxu0
        %2049 = vmatpush.bf16.msra.mxu0 %v1992
        %2050 = vmatpush.bf16.msra.mxu0 %v1990
        %2051 = vmatpush.bf16.msra.mxu0 %v1988
        %2052 = vmatpush.bf16.msra.mxu0 %v1986
        %2053 = vmatpush.bf16.msra.mxu0 %v1984
        %2054 = vmatpush.bf16.msra.mxu0 %v1982
        %2055 = vmatpush.bf16.msra.mxu0 %v1980
        %2056 = vmatpush.bf16.msra.mxu0 %v1978
        %2057 = vmatmul.bf16.gmra.mxu0 %v1819
        %v2058 = vpop.f32.mrf.mxu0
        %v2059 = vadd.f32 %v2036, %v2058
        %v2060 = vpop.f32.mrf.mxu0
        %v2061 = vadd.f32 %v2038, %v2060
        %2062 = vmatmul.bf16.gmra.mxu0 %v1821
        %v2063 = vpop.f32.mrf.mxu0
        %v2064 = vpop.f32.mrf.mxu0
        %2065 = vmatmul.bf16.gmra.mxu0 %v1823
        %v2066 = vpop.f32.mrf.mxu0
        %v2067 = vpop.f32.mrf.mxu0
        %2068 = vmatmul.bf16.gmra.mxu0 %v1825
        %v2069 = vpop.f32.mrf.mxu0
        %v2070 = vpop.f32.mrf.mxu0
        %2071 = vdwg.mxu0
        %2072 = vmatpush.bf16.msra.mxu0 %v1977
        %2073 = vmatpush.bf16.msra.mxu0 %v1975
        %2074 = vmatpush.bf16.msra.mxu0 %v1973
        %2075 = vmatpush.bf16.msra.mxu0 %v1971
        %2076 = vmatpush.bf16.msra.mxu0 %v1969
        %2077 = vmatpush.bf16.msra.mxu0 %v1967
        %2078 = vmatpush.bf16.msra.mxu0 %v1965
        %2079 = vmatpush.bf16.msra.mxu0 %v1963
        %2080 = vmatmul.bf16.gmra.mxu0 %v1818
        %v2081 = vpop.f32.mrf.mxu0
        %v2082 = vadd.f32 %v1863, %v2081
        %v2083 = vpop.f32.mrf.mxu0
        %v2084 = vadd.f32 %v1863, %v2083
        %2085 = vmatmul.bf16.gmra.mxu0 %v1820
        %v2086 = vpop.f32.mrf.mxu0
        %v2087 = vpop.f32.mrf.mxu0
        %2088 = vmatmul.bf16.gmra.mxu0 %v1822
        %v2089 = vpop.f32.mrf.mxu0
        %v2090 = vpop.f32.mrf.mxu0
        %2091 = vmatmul.bf16.gmra.mxu0 %v1824
        %v2092 = vpop.f32.mrf.mxu0
        %v2093 = vpop.f32.mrf.mxu0
        %2094 = vdwg.mxu0
        %2095 = vmatpush.bf16.msra.mxu0 %v1993
        %2096 = vmatpush.bf16.msra.mxu0 %v1991
        %2097 = vmatpush.bf16.msra.mxu0 %v1989
        %2098 = vmatpush.bf16.msra.mxu0 %v1987
        %2099 = vmatpush.bf16.msra.mxu0 %v1985
        %2100 = vmatpush.bf16.msra.mxu0 %v1983
        %2101 = vmatpush.bf16.msra.mxu0 %v1981
        %2102 = vmatpush.bf16.msra.mxu0 %v1979
        %2103 = vmatmul.bf16.gmra.mxu0 %v1819
        %v2104 = vpop.f32.mrf.mxu0
        %v2105 = vadd.f32 %v2082, %v2104
        %v2106 = vpop.f32.mrf.mxu0
        %v2107 = vadd.f32 %v2084, %v2106
        %2108 = vmatmul.bf16.gmra.mxu0 %v1821
        %v2109 = vpop.f32.mrf.mxu0
        %v2110 = vpop.f32.mrf.mxu0
        %2111 = vmatmul.bf16.gmra.mxu0 %v1823
        %v2112 = vpop.f32.mrf.mxu0
        %v2113 = vpop.f32.mrf.mxu0
        %2114 = vmatmul.bf16.gmra.mxu0 %v1825
        %v2115 = vpop.f32.mrf.mxu0
        %v2116 = vpop.f32.mrf.mxu0
        %2117 = vdwg.mxu0
        %v2118 = vmax.f32 %v2059, 0.0
        %v2119 = vmax.f32 %v2105, 0.0
        %v2120 = vmax.f32 %v2061, 0.0
        %v2121 = vmax.f32 %v2107, 0.0
        %v2122 = vpack.c.bf16 %v2120, %v2118
        %v2123 = vpack.c.bf16 %v2121, %v2119
        %s2124 = scalar_lea.vmem [#allocation5], 1024
        %v2125 = vld [vmem:[%s2124] sm:$0xff]
        %v2126 = vld [vmem:[%s2124 + $0x8] sm:$0xff]
        %v2127 = vld [vmem:[%s2124 + $0x10] sm:$0xff]
        %v2128 = vld [vmem:[%s2124 + $0x18] sm:$0xff]
        %v2129 = vld [vmem:[%s2124 + $0x20] sm:$0xff]
        %v2130 = vld [vmem:[%s2124 + $0x28] sm:$0xff]
        %v2131 = vld [vmem:[%s2124 + $0x30] sm:$0xff]
        %v2132 = vld [vmem:[%s2124 + $0x38] sm:$0xff]
        %v2133 = vld [vmem:[%s2124 + $0x40] sm:$0xff]
        %v2134 = vld [vmem:[%s2124 + $0x48] sm:$0xff]
        %v2135 = vld [vmem:[%s2124 + $0x50] sm:$0xff]
        %v2136 = vld [vmem:[%s2124 + $0x58] sm:$0xff]
        %v2137 = vld [vmem:[%s2124 + $0x60] sm:$0xff]
        %v2138 = vld [vmem:[%s2124 + $0x68] sm:$0xff]
        %v2139 = vld [vmem:[%s2124 + $0x70] sm:$0xff]
        %v2140 = vld [vmem:[%s2124 + $0x78] sm:$0xff]
        %v2141 = vld [vmem:[%s2124 + $0x80] sm:$0xff]
        %v2142 = vld [vmem:[%s2124 + $0x88] sm:$0xff]
        %v2143 = vld [vmem:[%s2124 + $0x90] sm:$0xff]
        %v2144 = vld [vmem:[%s2124 + $0x98] sm:$0xff]
        %v2145 = vld [vmem:[%s2124 + $0xa0] sm:$0xff]
        %v2146 = vld [vmem:[%s2124 + $0xa8] sm:$0xff]
        %v2147 = vld [vmem:[%s2124 + $0xb0] sm:$0xff]
        %v2148 = vld [vmem:[%s2124 + $0xb8] sm:$0xff]
        %v2149 = vld [vmem:[%s2124 + $0xc0] sm:$0xff]
        %v2150 = vld [vmem:[%s2124 + $0xc8] sm:$0xff]
        %v2151 = vld [vmem:[%s2124 + $0xd0] sm:$0xff]
        %v2152 = vld [vmem:[%s2124 + $0xd8] sm:$0xff]
        %v2153 = vld [vmem:[%s2124 + $0xe0] sm:$0xff]
        %v2154 = vld [vmem:[%s2124 + $0xe8] sm:$0xff]
        %v2155 = vld [vmem:[%s2124 + $0xf0] sm:$0xff]
        %v2156 = vld [vmem:[%s2124 + $0xf8] sm:$0xff]
        %s2157 = scalar_lea.vmem [#allocation7], 8
        %v2158 = vld [vmem:[%s2157] sm:$0x3]
        %v2160 = vperm.slane %v2158, 0
        %v2161 = vperm.slane %v2158, 1
        %v2196 = vunpack.c.l.b16 %v2125
        %v2197 = vunpack.c.h.b16 %v2125
        %v2198 = vunpack.c.l.b16 %v2126
        %v2199 = vunpack.c.h.b16 %v2126
        %v2200 = vunpack.c.l.b16 %v2127
        %v2201 = vunpack.c.h.b16 %v2127
        %v2202 = vunpack.c.l.b16 %v2128
        %v2203 = vunpack.c.h.b16 %v2128
        %v2204 = vunpack.c.l.b16 %v2129
        %v2205 = vunpack.c.h.b16 %v2129
        %v2206 = vunpack.c.l.b16 %v2130
        %v2207 = vunpack.c.h.b16 %v2130
        %v2208 = vunpack.c.l.b16 %v2131
        %v2209 = vunpack.c.h.b16 %v2131
        %v2210 = vunpack.c.l.b16 %v2132
        %v2211 = vunpack.c.h.b16 %v2132
        %v2212 = vunpack.c.l.b16 %v2133
        %v2213 = vunpack.c.h.b16 %v2133
        %v2214 = vunpack.c.l.b16 %v2134
        %v2215 = vunpack.c.h.b16 %v2134
        %v2216 = vunpack.c.l.b16 %v2135
        %v2217 = vunpack.c.h.b16 %v2135
        %v2218 = vunpack.c.l.b16 %v2136
        %v2219 = vunpack.c.h.b16 %v2136
        %v2220 = vunpack.c.l.b16 %v2137
        %v2221 = vunpack.c.h.b16 %v2137
        %v2222 = vunpack.c.l.b16 %v2138
        %v2223 = vunpack.c.h.b16 %v2138
        %v2224 = vunpack.c.l.b16 %v2139
        %v2225 = vunpack.c.h.b16 %v2139
        %v2226 = vunpack.c.l.b16 %v2140
        %v2227 = vunpack.c.h.b16 %v2140
        %v2228 = vunpack.c.l.b16 %v2141
        %v2229 = vunpack.c.h.b16 %v2141
        %v2230 = vunpack.c.l.b16 %v2142
        %v2231 = vunpack.c.h.b16 %v2142
        %v2232 = vunpack.c.l.b16 %v2143
        %v2233 = vunpack.c.h.b16 %v2143
        %v2234 = vunpack.c.l.b16 %v2144
        %v2235 = vunpack.c.h.b16 %v2144
        %v2236 = vunpack.c.l.b16 %v2145
        %v2237 = vunpack.c.h.b16 %v2145
        %v2238 = vunpack.c.l.b16 %v2146
        %v2239 = vunpack.c.h.b16 %v2146
        %v2240 = vunpack.c.l.b16 %v2147
        %v2241 = vunpack.c.h.b16 %v2147
        %v2242 = vunpack.c.l.b16 %v2148
        %v2243 = vunpack.c.h.b16 %v2148
        %v2244 = vunpack.c.l.b16 %v2149
        %v2245 = vunpack.c.h.b16 %v2149
        %v2246 = vunpack.c.l.b16 %v2150
        %v2247 = vunpack.c.h.b16 %v2150
        %v2248 = vunpack.c.l.b16 %v2151
        %v2249 = vunpack.c.h.b16 %v2151
        %v2250 = vunpack.c.l.b16 %v2152
        %v2251 = vunpack.c.h.b16 %v2152
        %v2252 = vunpack.c.l.b16 %v2153
        %v2253 = vunpack.c.h.b16 %v2153
        %v2254 = vunpack.c.l.b16 %v2154
        %v2255 = vunpack.c.h.b16 %v2154
        %v2256 = vunpack.c.l.b16 %v2155
        %v2257 = vunpack.c.h.b16 %v2155
        %v2258 = vunpack.c.l.b16 %v2156
        %v2259 = vunpack.c.h.b16 %v2156
        %v2260 = vpack.c.b16 %v2198, %v2196
        %v2261 = vpack.c.b16 %v2199, %v2197
        %v2262 = vpack.c.b16 %v2202, %v2200
        %v2263 = vpack.c.b16 %v2203, %v2201
        %v2264 = vpack.c.b16 %v2206, %v2204
        %v2265 = vpack.c.b16 %v2207, %v2205
        %v2266 = vpack.c.b16 %v2210, %v2208
        %v2267 = vpack.c.b16 %v2211, %v2209
        %v2268 = vpack.c.b16 %v2214, %v2212
        %v2269 = vpack.c.b16 %v2215, %v2213
        %v2270 = vpack.c.b16 %v2218, %v2216
        %v2271 = vpack.c.b16 %v2219, %v2217
        %v2272 = vpack.c.b16 %v2222, %v2220
        %v2273 = vpack.c.b16 %v2223, %v2221
        %v2274 = vpack.c.b16 %v2226, %v2224
        %v2275 = vpack.c.b16 %v2227, %v2225
        %v2276 = vpack.c.b16 %v2230, %v2228
        %v2277 = vpack.c.b16 %v2231, %v2229
        %v2278 = vpack.c.b16 %v2234, %v2232
        %v2279 = vpack.c.b16 %v2235, %v2233
        %v2280 = vpack.c.b16 %v2238, %v2236
        %v2281 = vpack.c.b16 %v2239, %v2237
        %v2282 = vpack.c.b16 %v2242, %v2240
        %v2283 = vpack.c.b16 %v2243, %v2241
        %v2284 = vpack.c.b16 %v2246, %v2244
        %v2285 = vpack.c.b16 %v2247, %v2245
        %v2286 = vpack.c.b16 %v2250, %v2248
        %v2287 = vpack.c.b16 %v2251, %v2249
        %v2288 = vpack.c.b16 %v2254, %v2252
        %v2289 = vpack.c.b16 %v2255, %v2253
        %v2290 = vpack.c.b16 %v2258, %v2256
        %v2291 = vpack.c.b16 %v2259, %v2257
        %2324 = vmatpush.bf16.msra.mxu0 %v2274
        %2325 = vmatpush.bf16.msra.mxu0 %v2272
        %2326 = vmatpush.bf16.msra.mxu0 %v2270
        %2327 = vmatpush.bf16.msra.mxu0 %v2268
        %2328 = vmatpush.bf16.msra.mxu0 %v2266
        %2329 = vmatpush.bf16.msra.mxu0 %v2264
        %2330 = vmatpush.bf16.msra.mxu0 %v2262
        %2331 = vmatpush.bf16.msra.mxu0 %v2260
        %2332 = vmatmul.bf16.gmra.mxu0 %v2122
        %v2333 = vpop.f32.mrf.mxu0
        %v2334 = vadd.f32 %v2160, %v2333
        %v2335 = vpop.f32.mrf.mxu0
        %v2336 = vadd.f32 %v2160, %v2335
        %2337 = vdwg.mxu0
        %2338 = vmatpush.bf16.msra.mxu0 %v2290
        %2339 = vmatpush.bf16.msra.mxu0 %v2288
        %2340 = vmatpush.bf16.msra.mxu0 %v2286
        %2341 = vmatpush.bf16.msra.mxu0 %v2284
        %2342 = vmatpush.bf16.msra.mxu0 %v2282
        %2343 = vmatpush.bf16.msra.mxu0 %v2280
        %2344 = vmatpush.bf16.msra.mxu0 %v2278
        %2345 = vmatpush.bf16.msra.mxu0 %v2276
        %2346 = vmatmul.bf16.gmra.mxu0 %v2123
        %v2347 = vpop.f32.mrf.mxu0
        %v2348 = vadd.f32 %v2334, %v2347
        %v2349 = vpop.f32.mrf.mxu0
        %v2350 = vadd.f32 %v2336, %v2349
        %2351 = vdwg.mxu0
        %2352 = vmatpush.bf16.msra.mxu0 %v2275
        %2353 = vmatpush.bf16.msra.mxu0 %v2273
        %2354 = vmatpush.bf16.msra.mxu0 %v2271
        %2355 = vmatpush.bf16.msra.mxu0 %v2269
        %2356 = vmatpush.bf16.msra.mxu0 %v2267
        %2357 = vmatpush.bf16.msra.mxu0 %v2265
        %2358 = vmatpush.bf16.msra.mxu0 %v2263
        %2359 = vmatpush.bf16.msra.mxu0 %v2261
        %2360 = vmatmul.bf16.gmra.mxu0 %v2122
        %v2361 = vpop.f32.mrf.mxu0
        %v2362 = vadd.f32 %v2161, %v2361
        %v2363 = vpop.f32.mrf.mxu0
        %v2364 = vadd.f32 %v2161, %v2363
        %2365 = vdwg.mxu0
        %2366 = vmatpush.bf16.msra.mxu0 %v2291
        %2367 = vmatpush.bf16.msra.mxu0 %v2289
        %2368 = vmatpush.bf16.msra.mxu0 %v2287
        %2369 = vmatpush.bf16.msra.mxu0 %v2285
        %2370 = vmatpush.bf16.msra.mxu0 %v2283
        %2371 = vmatpush.bf16.msra.mxu0 %v2281
        %2372 = vmatpush.bf16.msra.mxu0 %v2279
        %2373 = vmatpush.bf16.msra.mxu0 %v2277
        %2374 = vmatmul.bf16.gmra.mxu0 %v2123
        %v2375 = vpop.f32.mrf.mxu0
        %v2376 = vadd.f32 %v2362, %v2375
        %v2377 = vpop.f32.mrf.mxu0
        %v2378 = vadd.f32 %v2364, %v2377
        %2379 = vdwg.mxu0
        %v2380 = vmax.f32 %v2348, 0.0
        %v2381 = vmax.f32 %v2376, 0.0
        %v2382 = vmax.f32 %v2350, 0.0
        %v2383 = vmax.f32 %v2378, 0.0
        %v2384 = vpack.c.bf16 %v2382, %v2380
        %v2385 = vpack.c.bf16 %v2383, %v2381
        %s2386 = scalar_lea.vmem [#allocation5], 1280
        %v2387 = vld [vmem:[%s2386] sm:$0xff]
        %v2388 = vld [vmem:[%s2386 + $0x8] sm:$0xff]
        %v2389 = vld [vmem:[%s2386 + $0x10] sm:$0xff]
        %v2390 = vld [vmem:[%s2386 + $0x18] sm:$0xff]
        %v2391 = vld [vmem:[%s2386 + $0x20] sm:$0xff]
        %v2392 = vld [vmem:[%s2386 + $0x28] sm:$0xff]
        %v2393 = vld [vmem:[%s2386 + $0x30] sm:$0xff]
        %v2394 = vld [vmem:[%s2386 + $0x38] sm:$0xff]
        %v2395 = vld [vmem:[%s2386 + $0x40] sm:$0xff]
        %v2396 = vld [vmem:[%s2386 + $0x48] sm:$0xff]
        %v2397 = vld [vmem:[%s2386 + $0x50] sm:$0xff]
        %v2398 = vld [vmem:[%s2386 + $0x58] sm:$0xff]
        %v2399 = vld [vmem:[%s2386 + $0x60] sm:$0xff]
        %v2400 = vld [vmem:[%s2386 + $0x68] sm:$0xff]
        %v2401 = vld [vmem:[%s2386 + $0x70] sm:$0xff]
        %v2402 = vld [vmem:[%s2386 + $0x78] sm:$0xff]
        %v2403 = vld [vmem:[%s2386 + $0x80] sm:$0xff]
        %v2404 = vld [vmem:[%s2386 + $0x88] sm:$0xff]
        %v2405 = vld [vmem:[%s2386 + $0x90] sm:$0xff]
        %v2406 = vld [vmem:[%s2386 + $0x98] sm:$0xff]
        %v2407 = vld [vmem:[%s2386 + $0xa0] sm:$0xff]
        %v2408 = vld [vmem:[%s2386 + $0xa8] sm:$0xff]
        %v2409 = vld [vmem:[%s2386 + $0xb0] sm:$0xff]
        %v2410 = vld [vmem:[%s2386 + $0xb8] sm:$0xff]
        %v2411 = vld [vmem:[%s2386 + $0xc0] sm:$0xff]
        %v2412 = vld [vmem:[%s2386 + $0xc8] sm:$0xff]
        %v2413 = vld [vmem:[%s2386 + $0xd0] sm:$0xff]
        %v2414 = vld [vmem:[%s2386 + $0xd8] sm:$0xff]
        %v2415 = vld [vmem:[%s2386 + $0xe0] sm:$0xff]
        %v2416 = vld [vmem:[%s2386 + $0xe8] sm:$0xff]
        %v2417 = vld [vmem:[%s2386 + $0xf0] sm:$0xff]
        %v2418 = vld [vmem:[%s2386 + $0xf8] sm:$0xff]
        %s2419 = scalar_lea.vmem [#allocation7], 10
        %v2420 = vld [vmem:[%s2419] sm:$0x3]
        %v2422 = vperm.slane %v2420, 0
        %v2423 = vperm.slane %v2420, 1
        %v2458 = vunpack.c.l.b16 %v2387
        %v2459 = vunpack.c.h.b16 %v2387
        %v2460 = vunpack.c.l.b16 %v2388
        %v2461 = vunpack.c.h.b16 %v2388
        %v2462 = vunpack.c.l.b16 %v2389
        %v2463 = vunpack.c.h.b16 %v2389
        %v2464 = vunpack.c.l.b16 %v2390
        %v2465 = vunpack.c.h.b16 %v2390
        %v2466 = vunpack.c.l.b16 %v2391
        %v2467 = vunpack.c.h.b16 %v2391
        %v2468 = vunpack.c.l.b16 %v2392
        %v2469 = vunpack.c.h.b16 %v2392
        %v2470 = vunpack.c.l.b16 %v2393
        %v2471 = vunpack.c.h.b16 %v2393
        %v2472 = vunpack.c.l.b16 %v2394
        %v2473 = vunpack.c.h.b16 %v2394
        %v2474 = vunpack.c.l.b16 %v2395
        %v2475 = vunpack.c.h.b16 %v2395
        %v2476 = vunpack.c.l.b16 %v2396
        %v2477 = vunpack.c.h.b16 %v2396
        %v2478 = vunpack.c.l.b16 %v2397
        %v2479 = vunpack.c.h.b16 %v2397
        %v2480 = vunpack.c.l.b16 %v2398
        %v2481 = vunpack.c.h.b16 %v2398
        %v2482 = vunpack.c.l.b16 %v2399
        %v2483 = vunpack.c.h.b16 %v2399
        %v2484 = vunpack.c.l.b16 %v2400
        %v2485 = vunpack.c.h.b16 %v2400
        %v2486 = vunpack.c.l.b16 %v2401
        %v2487 = vunpack.c.h.b16 %v2401
        %v2488 = vunpack.c.l.b16 %v2402
        %v2489 = vunpack.c.h.b16 %v2402
        %v2490 = vunpack.c.l.b16 %v2403
        %v2491 = vunpack.c.h.b16 %v2403
        %v2492 = vunpack.c.l.b16 %v2404
        %v2493 = vunpack.c.h.b16 %v2404
        %v2494 = vunpack.c.l.b16 %v2405
        %v2495 = vunpack.c.h.b16 %v2405
        %v2496 = vunpack.c.l.b16 %v2406
        %v2497 = vunpack.c.h.b16 %v2406
        %v2498 = vunpack.c.l.b16 %v2407
        %v2499 = vunpack.c.h.b16 %v2407
        %v2500 = vunpack.c.l.b16 %v2408
        %v2501 = vunpack.c.h.b16 %v2408
        %v2502 = vunpack.c.l.b16 %v2409
        %v2503 = vunpack.c.h.b16 %v2409
        %v2504 = vunpack.c.l.b16 %v2410
        %v2505 = vunpack.c.h.b16 %v2410
        %v2506 = vunpack.c.l.b16 %v2411
        %v2507 = vunpack.c.h.b16 %v2411
        %v2508 = vunpack.c.l.b16 %v2412
        %v2509 = vunpack.c.h.b16 %v2412
        %v2510 = vunpack.c.l.b16 %v2413
        %v2511 = vunpack.c.h.b16 %v2413
        %v2512 = vunpack.c.l.b16 %v2414
        %v2513 = vunpack.c.h.b16 %v2414
        %v2514 = vunpack.c.l.b16 %v2415
        %v2515 = vunpack.c.h.b16 %v2415
        %v2516 = vunpack.c.l.b16 %v2416
        %v2517 = vunpack.c.h.b16 %v2416
        %v2518 = vunpack.c.l.b16 %v2417
        %v2519 = vunpack.c.h.b16 %v2417
        %v2520 = vunpack.c.l.b16 %v2418
        %v2521 = vunpack.c.h.b16 %v2418
        %v2522 = vpack.c.b16 %v2460, %v2458
        %v2523 = vpack.c.b16 %v2461, %v2459
        %v2524 = vpack.c.b16 %v2464, %v2462
        %v2525 = vpack.c.b16 %v2465, %v2463
        %v2526 = vpack.c.b16 %v2468, %v2466
        %v2527 = vpack.c.b16 %v2469, %v2467
        %v2528 = vpack.c.b16 %v2472, %v2470
        %v2529 = vpack.c.b16 %v2473, %v2471
        %v2530 = vpack.c.b16 %v2476, %v2474
        %v2531 = vpack.c.b16 %v2477, %v2475
        %v2532 = vpack.c.b16 %v2480, %v2478
        %v2533 = vpack.c.b16 %v2481, %v2479
        %v2534 = vpack.c.b16 %v2484, %v2482
        %v2535 = vpack.c.b16 %v2485, %v2483
        %v2536 = vpack.c.b16 %v2488, %v2486
        %v2537 = vpack.c.b16 %v2489, %v2487
        %v2538 = vpack.c.b16 %v2492, %v2490
        %v2539 = vpack.c.b16 %v2493, %v2491
        %v2540 = vpack.c.b16 %v2496, %v2494
        %v2541 = vpack.c.b16 %v2497, %v2495
        %v2542 = vpack.c.b16 %v2500, %v2498
        %v2543 = vpack.c.b16 %v2501, %v2499
        %v2544 = vpack.c.b16 %v2504, %v2502
        %v2545 = vpack.c.b16 %v2505, %v2503
        %v2546 = vpack.c.b16 %v2508, %v2506
        %v2547 = vpack.c.b16 %v2509, %v2507
        %v2548 = vpack.c.b16 %v2512, %v2510
        %v2549 = vpack.c.b16 %v2513, %v2511
        %v2550 = vpack.c.b16 %v2516, %v2514
        %v2551 = vpack.c.b16 %v2517, %v2515
        %v2552 = vpack.c.b16 %v2520, %v2518
        %v2553 = vpack.c.b16 %v2521, %v2519
        %2586 = vmatpush.bf16.msra.mxu0 %v2536
        %2587 = vmatpush.bf16.msra.mxu0 %v2534
        %2588 = vmatpush.bf16.msra.mxu0 %v2532
        %2589 = vmatpush.bf16.msra.mxu0 %v2530
        %2590 = vmatpush.bf16.msra.mxu0 %v2528
        %2591 = vmatpush.bf16.msra.mxu0 %v2526
        %2592 = vmatpush.bf16.msra.mxu0 %v2524
        %2593 = vmatpush.bf16.msra.mxu0 %v2522
        %2594 = vmatmul.bf16.gmra.mxu0 %v2384
        %v2595 = vpop.f32.mrf.mxu0
        %v2596 = vadd.f32 %v2422, %v2595
        %v2597 = vpop.f32.mrf.mxu0
        %2598 = vdwg.mxu0
        %2599 = vmatpush.bf16.msra.mxu0 %v2552
        %2600 = vmatpush.bf16.msra.mxu0 %v2550
        %2601 = vmatpush.bf16.msra.mxu0 %v2548
        %2602 = vmatpush.bf16.msra.mxu0 %v2546
        %2603 = vmatpush.bf16.msra.mxu0 %v2544
        %2604 = vmatpush.bf16.msra.mxu0 %v2542
        %2605 = vmatpush.bf16.msra.mxu0 %v2540
        %2606 = vmatpush.bf16.msra.mxu0 %v2538
        %2607 = vmatmul.bf16.gmra.mxu0 %v2385
        %v2608 = vpop.f32.mrf.mxu0
        %v2609 = vadd.f32 %v2596, %v2608
        %v2610 = vpop.f32.mrf.mxu0
        %2611 = vdwg.mxu0
        %2612 = vmatpush.bf16.msra.mxu0 %v2537
        %2613 = vmatpush.bf16.msra.mxu0 %v2535
        %2614 = vmatpush.bf16.msra.mxu0 %v2533
        %2615 = vmatpush.bf16.msra.mxu0 %v2531
        %2616 = vmatpush.bf16.msra.mxu0 %v2529
        %2617 = vmatpush.bf16.msra.mxu0 %v2527
        %2618 = vmatpush.bf16.msra.mxu0 %v2525
        %2619 = vmatpush.bf16.msra.mxu0 %v2523
        %2620 = vmatmul.bf16.gmra.mxu0 %v2384
        %v2621 = vpop.f32.mrf.mxu0
        %v2622 = vadd.f32 %v2423, %v2621
        %v2623 = vpop.f32.mrf.mxu0
        %2624 = vdwg.mxu0
        %2625 = vmatpush.bf16.msra.mxu0 %v2553
        %2626 = vmatpush.bf16.msra.mxu0 %v2551
        %2627 = vmatpush.bf16.msra.mxu0 %v2549
        %2628 = vmatpush.bf16.msra.mxu0 %v2547
        %2629 = vmatpush.bf16.msra.mxu0 %v2545
        %2630 = vmatpush.bf16.msra.mxu0 %v2543
        %2631 = vmatpush.bf16.msra.mxu0 %v2541
        %2632 = vmatpush.bf16.msra.mxu0 %v2539
        %2633 = vmatmul.bf16.gmra.mxu0 %v2385
        %v2634 = vpop.f32.mrf.mxu0
        %v2635 = vadd.f32 %v2622, %v2634
        %v2636 = vpop.f32.mrf.mxu0
        %2637 = vdwg.mxu0
        %v2638 = vmax.f32 %v2609, 0.0
        %v2639 = vmax.f32 %v2635, 0.0
        %v2640 = vpack.c.bf16 %v2638, %v2638
        %v2641 = vpack.c.bf16 %v2639, %v2639
        %s2642 = scalar_lea.vmem [#allocation5], 1536
        %v2643 = vld [vmem:[%s2642] sm:$0xff]
        %v2644 = vld [vmem:[%s2642 + $0x8] sm:$0xff]
        %v2645 = vld [vmem:[%s2642 + $0x10] sm:$0xff]
        %v2646 = vld [vmem:[%s2642 + $0x18] sm:$0xff]
        %v2647 = vld [vmem:[%s2642 + $0x20] sm:$0xff]
        %v2648 = vld [vmem:[%s2642 + $0x28] sm:$0xff]
        %v2649 = vld [vmem:[%s2642 + $0x30] sm:$0xff]
        %v2650 = vld [vmem:[%s2642 + $0x38] sm:$0xff]
        %v2651 = vld [vmem:[%s2642 + $0x40] sm:$0xff]
        %v2652 = vld [vmem:[%s2642 + $0x48] sm:$0xff]
        %v2653 = vld [vmem:[%s2642 + $0x50] sm:$0xff]
        %v2654 = vld [vmem:[%s2642 + $0x58] sm:$0xff]
        %v2655 = vld [vmem:[%s2642 + $0x60] sm:$0xff]
        %v2656 = vld [vmem:[%s2642 + $0x68] sm:$0xff]
        %v2657 = vld [vmem:[%s2642 + $0x70] sm:$0xff]
        %v2658 = vld [vmem:[%s2642 + $0x78] sm:$0xff]
        %v2659 = vld [vmem:[%s2642 + $0x80] sm:$0xff]
        %v2660 = vld [vmem:[%s2642 + $0x88] sm:$0xff]
        %v2661 = vld [vmem:[%s2642 + $0x90] sm:$0xff]
        %v2662 = vld [vmem:[%s2642 + $0x98] sm:$0xff]
        %v2663 = vld [vmem:[%s2642 + $0xa0] sm:$0xff]
        %v2664 = vld [vmem:[%s2642 + $0xa8] sm:$0xff]
        %v2665 = vld [vmem:[%s2642 + $0xb0] sm:$0xff]
        %v2666 = vld [vmem:[%s2642 + $0xb8] sm:$0xff]
        %v2667 = vld [vmem:[%s2642 + $0xc0] sm:$0xff]
        %v2668 = vld [vmem:[%s2642 + $0xc8] sm:$0xff]
        %v2669 = vld [vmem:[%s2642 + $0xd0] sm:$0xff]
        %v2670 = vld [vmem:[%s2642 + $0xd8] sm:$0xff]
        %v2671 = vld [vmem:[%s2642 + $0xe0] sm:$0xff]
        %v2672 = vld [vmem:[%s2642 + $0xe8] sm:$0xff]
        %v2673 = vld [vmem:[%s2642 + $0xf0] sm:$0xff]
        %v2674 = vld [vmem:[%s2642 + $0xf8] sm:$0xff]
        %s2675 = scalar_lea.vmem [#allocation7], 12
        %v2676 = vld [vmem:[%s2675] sm:$0x3]
        %v2678 = vperm.slane %v2676, 0
        %v2679 = vperm.slane %v2676, 1
        %v2714 = vunpack.c.l.b16 %v2643
        %v2715 = vunpack.c.h.b16 %v2643
        %v2716 = vunpack.c.l.b16 %v2644
        %v2717 = vunpack.c.h.b16 %v2644
        %v2718 = vunpack.c.l.b16 %v2645
        %v2719 = vunpack.c.h.b16 %v2645
        %v2720 = vunpack.c.l.b16 %v2646
        %v2721 = vunpack.c.h.b16 %v2646
        %v2722 = vunpack.c.l.b16 %v2647
        %v2723 = vunpack.c.h.b16 %v2647
        %v2724 = vunpack.c.l.b16 %v2648
        %v2725 = vunpack.c.h.b16 %v2648
        %v2726 = vunpack.c.l.b16 %v2649
        %v2727 = vunpack.c.h.b16 %v2649
        %v2728 = vunpack.c.l.b16 %v2650
        %v2729 = vunpack.c.h.b16 %v2650
        %v2730 = vunpack.c.l.b16 %v2651
        %v2731 = vunpack.c.h.b16 %v2651
        %v2732 = vunpack.c.l.b16 %v2652
        %v2733 = vunpack.c.h.b16 %v2652
        %v2734 = vunpack.c.l.b16 %v2653
        %v2735 = vunpack.c.h.b16 %v2653
        %v2736 = vunpack.c.l.b16 %v2654
        %v2737 = vunpack.c.h.b16 %v2654
        %v2738 = vunpack.c.l.b16 %v2655
        %v2739 = vunpack.c.h.b16 %v2655
        %v2740 = vunpack.c.l.b16 %v2656
        %v2741 = vunpack.c.h.b16 %v2656
        %v2742 = vunpack.c.l.b16 %v2657
        %v2743 = vunpack.c.h.b16 %v2657
        %v2744 = vunpack.c.l.b16 %v2658
        %v2745 = vunpack.c.h.b16 %v2658
        %v2746 = vunpack.c.l.b16 %v2659
        %v2747 = vunpack.c.h.b16 %v2659
        %v2748 = vunpack.c.l.b16 %v2660
        %v2749 = vunpack.c.h.b16 %v2660
        %v2750 = vunpack.c.l.b16 %v2661
        %v2751 = vunpack.c.h.b16 %v2661
        %v2752 = vunpack.c.l.b16 %v2662
        %v2753 = vunpack.c.h.b16 %v2662
        %v2754 = vunpack.c.l.b16 %v2663
        %v2755 = vunpack.c.h.b16 %v2663
        %v2756 = vunpack.c.l.b16 %v2664
        %v2757 = vunpack.c.h.b16 %v2664
        %v2758 = vunpack.c.l.b16 %v2665
        %v2759 = vunpack.c.h.b16 %v2665
        %v2760 = vunpack.c.l.b16 %v2666
        %v2761 = vunpack.c.h.b16 %v2666
        %v2762 = vunpack.c.l.b16 %v2667
        %v2763 = vunpack.c.h.b16 %v2667
        %v2764 = vunpack.c.l.b16 %v2668
        %v2765 = vunpack.c.h.b16 %v2668
        %v2766 = vunpack.c.l.b16 %v2669
        %v2767 = vunpack.c.h.b16 %v2669
        %v2768 = vunpack.c.l.b16 %v2670
        %v2769 = vunpack.c.h.b16 %v2670
        %v2770 = vunpack.c.l.b16 %v2671
        %v2771 = vunpack.c.h.b16 %v2671
        %v2772 = vunpack.c.l.b16 %v2672
        %v2773 = vunpack.c.h.b16 %v2672
        %v2774 = vunpack.c.l.b16 %v2673
        %v2775 = vunpack.c.h.b16 %v2673
        %v2776 = vunpack.c.l.b16 %v2674
        %v2777 = vunpack.c.h.b16 %v2674
        %v2778 = vpack.c.b16 %v2716, %v2714
        %v2779 = vpack.c.b16 %v2717, %v2715
        %v2780 = vpack.c.b16 %v2720, %v2718
        %v2781 = vpack.c.b16 %v2721, %v2719
        %v2782 = vpack.c.b16 %v2724, %v2722
        %v2783 = vpack.c.b16 %v2725, %v2723
        %v2784 = vpack.c.b16 %v2728, %v2726
        %v2785 = vpack.c.b16 %v2729, %v2727
        %v2786 = vpack.c.b16 %v2732, %v2730
        %v2787 = vpack.c.b16 %v2733, %v2731
        %v2788 = vpack.c.b16 %v2736, %v2734
        %v2789 = vpack.c.b16 %v2737, %v2735
        %v2790 = vpack.c.b16 %v2740, %v2738
        %v2791 = vpack.c.b16 %v2741, %v2739
        %v2792 = vpack.c.b16 %v2744, %v2742
        %v2793 = vpack.c.b16 %v2745, %v2743
        %v2794 = vpack.c.b16 %v2748, %v2746
        %v2795 = vpack.c.b16 %v2749, %v2747
        %v2796 = vpack.c.b16 %v2752, %v2750
        %v2797 = vpack.c.b16 %v2753, %v2751
        %v2798 = vpack.c.b16 %v2756, %v2754
        %v2799 = vpack.c.b16 %v2757, %v2755
        %v2800 = vpack.c.b16 %v2760, %v2758
        %v2801 = vpack.c.b16 %v2761, %v2759
        %v2802 = vpack.c.b16 %v2764, %v2762
        %v2803 = vpack.c.b16 %v2765, %v2763
        %v2804 = vpack.c.b16 %v2768, %v2766
        %v2805 = vpack.c.b16 %v2769, %v2767
        %v2806 = vpack.c.b16 %v2772, %v2770
        %v2807 = vpack.c.b16 %v2773, %v2771
        %v2808 = vpack.c.b16 %v2776, %v2774
        %v2809 = vpack.c.b16 %v2777, %v2775
        %2842 = vmatpush.bf16.msra.mxu0 %v2792
        %2843 = vmatpush.bf16.msra.mxu0 %v2790
        %2844 = vmatpush.bf16.msra.mxu0 %v2788
        %2845 = vmatpush.bf16.msra.mxu0 %v2786
        %2846 = vmatpush.bf16.msra.mxu0 %v2784
        %2847 = vmatpush.bf16.msra.mxu0 %v2782
        %2848 = vmatpush.bf16.msra.mxu0 %v2780
        %2849 = vmatpush.bf16.msra.mxu0 %v2778
        %2850 = vmatmul.bf16.gmra.mxu0 %v2640
        %v2851 = vpop.f32.mrf.mxu0
        %v2852 = vadd.f32 %v2678, %v2851
        %v2853 = vpop.f32.mrf.mxu0
        %2854 = vdwg.mxu0
        %2855 = vmatpush.bf16.msra.mxu0 %v2808
        %2856 = vmatpush.bf16.msra.mxu0 %v2806
        %2857 = vmatpush.bf16.msra.mxu0 %v2804
        %2858 = vmatpush.bf16.msra.mxu0 %v2802
        %2859 = vmatpush.bf16.msra.mxu0 %v2800
        %2860 = vmatpush.bf16.msra.mxu0 %v2798
        %2861 = vmatpush.bf16.msra.mxu0 %v2796
        %2862 = vmatpush.bf16.msra.mxu0 %v2794
        %2863 = vmatmul.bf16.gmra.mxu0 %v2641
        %v2864 = vpop.f32.mrf.mxu0
        %v2865 = vadd.f32 %v2852, %v2864
        %v2866 = vpop.f32.mrf.mxu0
        %2867 = vdwg.mxu0
        %2868 = vmatpush.bf16.msra.mxu0 %v2793
        %2869 = vmatpush.bf16.msra.mxu0 %v2791
        %2870 = vmatpush.bf16.msra.mxu0 %v2789
        %2871 = vmatpush.bf16.msra.mxu0 %v2787
        %2872 = vmatpush.bf16.msra.mxu0 %v2785
        %2873 = vmatpush.bf16.msra.mxu0 %v2783
        %2874 = vmatpush.bf16.msra.mxu0 %v2781
        %2875 = vmatpush.bf16.msra.mxu0 %v2779
        %2876 = vmatmul.bf16.gmra.mxu0 %v2640
        %v2877 = vpop.f32.mrf.mxu0
        %v2878 = vadd.f32 %v2679, %v2877
        %v2879 = vpop.f32.mrf.mxu0
        %2880 = vdwg.mxu0
        %2881 = vmatpush.bf16.msra.mxu0 %v2809
        %2882 = vmatpush.bf16.msra.mxu0 %v2807
        %2883 = vmatpush.bf16.msra.mxu0 %v2805
        %2884 = vmatpush.bf16.msra.mxu0 %v2803
        %2885 = vmatpush.bf16.msra.mxu0 %v2801
        %2886 = vmatpush.bf16.msra.mxu0 %v2799
        %2887 = vmatpush.bf16.msra.mxu0 %v2797
        %2888 = vmatpush.bf16.msra.mxu0 %v2795
        %2889 = vmatmul.bf16.gmra.mxu0 %v2641
        %v2890 = vpop.f32.mrf.mxu0
        %v2891 = vadd.f32 %v2878, %v2890
        %v2892 = vpop.f32.mrf.mxu0
        %2893 = vdwg.mxu0
        %v2894 = vmax.f32 %v2865, 0.0
        %v2895 = vmax.f32 %v2891, 0.0
        %v2896 = vpack.c.bf16 %v2894, %v2894
        %v2897 = vpack.c.bf16 %v2895, %v2895
        %s2898 = scalar_lea.vmem [#allocation5], 1792
        %v2899 = vld [vmem:[%s2898] sm:$0xff]
        %v2900 = vld [vmem:[%s2898 + $0x8] sm:$0xff]
        %v2901 = vld [vmem:[%s2898 + $0x10] sm:$0xff]
        %v2902 = vld [vmem:[%s2898 + $0x18] sm:$0xff]
        %v2903 = vld [vmem:[%s2898 + $0x20] sm:$0xff]
        %v2904 = vld [vmem:[%s2898 + $0x28] sm:$0xff]
        %v2905 = vld [vmem:[%s2898 + $0x30] sm:$0xff]
        %v2906 = vld [vmem:[%s2898 + $0x38] sm:$0xff]
        %v2907 = vld [vmem:[%s2898 + $0x40] sm:$0xff]
        %v2908 = vld [vmem:[%s2898 + $0x48] sm:$0xff]
        %v2909 = vld [vmem:[%s2898 + $0x50] sm:$0xff]
        %v2910 = vld [vmem:[%s2898 + $0x58] sm:$0xff]
        %v2911 = vld [vmem:[%s2898 + $0x60] sm:$0xff]
        %v2912 = vld [vmem:[%s2898 + $0x68] sm:$0xff]
        %v2913 = vld [vmem:[%s2898 + $0x70] sm:$0xff]
        %v2914 = vld [vmem:[%s2898 + $0x78] sm:$0xff]
        %v2915 = vld [vmem:[%s2898 + $0x80] sm:$0xff]
        %v2916 = vld [vmem:[%s2898 + $0x88] sm:$0xff]
        %v2917 = vld [vmem:[%s2898 + $0x90] sm:$0xff]
        %v2918 = vld [vmem:[%s2898 + $0x98] sm:$0xff]
        %v2919 = vld [vmem:[%s2898 + $0xa0] sm:$0xff]
        %v2920 = vld [vmem:[%s2898 + $0xa8] sm:$0xff]
        %v2921 = vld [vmem:[%s2898 + $0xb0] sm:$0xff]
        %v2922 = vld [vmem:[%s2898 + $0xb8] sm:$0xff]
        %v2923 = vld [vmem:[%s2898 + $0xc0] sm:$0xff]
        %v2924 = vld [vmem:[%s2898 + $0xc8] sm:$0xff]
        %v2925 = vld [vmem:[%s2898 + $0xd0] sm:$0xff]
        %v2926 = vld [vmem:[%s2898 + $0xd8] sm:$0xff]
        %v2927 = vld [vmem:[%s2898 + $0xe0] sm:$0xff]
        %v2928 = vld [vmem:[%s2898 + $0xe8] sm:$0xff]
        %v2929 = vld [vmem:[%s2898 + $0xf0] sm:$0xff]
        %v2930 = vld [vmem:[%s2898 + $0xf8] sm:$0xff]
        %s2931 = scalar_lea.vmem [#allocation7], 14
        %v2932 = vld [vmem:[%s2931] sm:$0x3]
        %v2934 = vperm.slane %v2932, 0
        %v2935 = vperm.slane %v2932, 1
        %v2970 = vunpack.c.l.b16 %v2899
        %v2971 = vunpack.c.h.b16 %v2899
        %v2972 = vunpack.c.l.b16 %v2900
        %v2973 = vunpack.c.h.b16 %v2900
        %v2974 = vunpack.c.l.b16 %v2901
        %v2975 = vunpack.c.h.b16 %v2901
        %v2976 = vunpack.c.l.b16 %v2902
        %v2977 = vunpack.c.h.b16 %v2902
        %v2978 = vunpack.c.l.b16 %v2903
        %v2979 = vunpack.c.h.b16 %v2903
        %v2980 = vunpack.c.l.b16 %v2904
        %v2981 = vunpack.c.h.b16 %v2904
        %v2982 = vunpack.c.l.b16 %v2905
        %v2983 = vunpack.c.h.b16 %v2905
        %v2984 = vunpack.c.l.b16 %v2906
        %v2985 = vunpack.c.h.b16 %v2906
        %v2986 = vunpack.c.l.b16 %v2907
        %v2987 = vunpack.c.h.b16 %v2907
        %v2988 = vunpack.c.l.b16 %v2908
        %v2989 = vunpack.c.h.b16 %v2908
        %v2990 = vunpack.c.l.b16 %v2909
        %v2991 = vunpack.c.h.b16 %v2909
        %v2992 = vunpack.c.l.b16 %v2910
        %v2993 = vunpack.c.h.b16 %v2910
        %v2994 = vunpack.c.l.b16 %v2911
        %v2995 = vunpack.c.h.b16 %v2911
        %v2996 = vunpack.c.l.b16 %v2912
        %v2997 = vunpack.c.h.b16 %v2912
        %v2998 = vunpack.c.l.b16 %v2913
        %v2999 = vunpack.c.h.b16 %v2913
        %v3000 = vunpack.c.l.b16 %v2914
        %v3001 = vunpack.c.h.b16 %v2914
        %v3002 = vunpack.c.l.b16 %v2915
        %v3003 = vunpack.c.h.b16 %v2915
        %v3004 = vunpack.c.l.b16 %v2916
        %v3005 = vunpack.c.h.b16 %v2916
        %v3006 = vunpack.c.l.b16 %v2917
        %v3007 = vunpack.c.h.b16 %v2917
        %v3008 = vunpack.c.l.b16 %v2918
        %v3009 = vunpack.c.h.b16 %v2918
        %v3010 = vunpack.c.l.b16 %v2919
        %v3011 = vunpack.c.h.b16 %v2919
        %v3012 = vunpack.c.l.b16 %v2920
        %v3013 = vunpack.c.h.b16 %v2920
        %v3014 = vunpack.c.l.b16 %v2921
        %v3015 = vunpack.c.h.b16 %v2921
        %v3016 = vunpack.c.l.b16 %v2922
        %v3017 = vunpack.c.h.b16 %v2922
        %v3018 = vunpack.c.l.b16 %v2923
        %v3019 = vunpack.c.h.b16 %v2923
        %v3020 = vunpack.c.l.b16 %v2924
        %v3021 = vunpack.c.h.b16 %v2924
        %v3022 = vunpack.c.l.b16 %v2925
        %v3023 = vunpack.c.h.b16 %v2925
        %v3024 = vunpack.c.l.b16 %v2926
        %v3025 = vunpack.c.h.b16 %v2926
        %v3026 = vunpack.c.l.b16 %v2927
        %v3027 = vunpack.c.h.b16 %v2927
        %v3028 = vunpack.c.l.b16 %v2928
        %v3029 = vunpack.c.h.b16 %v2928
        %v3030 = vunpack.c.l.b16 %v2929
        %v3031 = vunpack.c.h.b16 %v2929
        %v3032 = vunpack.c.l.b16 %v2930
        %v3033 = vunpack.c.h.b16 %v2930
        %v3034 = vpack.c.b16 %v2972, %v2970
        %v3035 = vpack.c.b16 %v2973, %v2971
        %v3036 = vpack.c.b16 %v2976, %v2974
        %v3037 = vpack.c.b16 %v2977, %v2975
        %v3038 = vpack.c.b16 %v2980, %v2978
        %v3039 = vpack.c.b16 %v2981, %v2979
        %v3040 = vpack.c.b16 %v2984, %v2982
        %v3041 = vpack.c.b16 %v2985, %v2983
        %v3042 = vpack.c.b16 %v2988, %v2986
        %v3043 = vpack.c.b16 %v2989, %v2987
        %v3044 = vpack.c.b16 %v2992, %v2990
        %v3045 = vpack.c.b16 %v2993, %v2991
        %v3046 = vpack.c.b16 %v2996, %v2994
        %v3047 = vpack.c.b16 %v2997, %v2995
        %v3048 = vpack.c.b16 %v3000, %v2998
        %v3049 = vpack.c.b16 %v3001, %v2999
        %v3050 = vpack.c.b16 %v3004, %v3002
        %v3051 = vpack.c.b16 %v3005, %v3003
        %v3052 = vpack.c.b16 %v3008, %v3006
        %v3053 = vpack.c.b16 %v3009, %v3007
        %v3054 = vpack.c.b16 %v3012, %v3010
        %v3055 = vpack.c.b16 %v3013, %v3011
        %v3056 = vpack.c.b16 %v3016, %v3014
        %v3057 = vpack.c.b16 %v3017, %v3015
        %v3058 = vpack.c.b16 %v3020, %v3018
        %v3059 = vpack.c.b16 %v3021, %v3019
        %v3060 = vpack.c.b16 %v3024, %v3022
        %v3061 = vpack.c.b16 %v3025, %v3023
        %v3062 = vpack.c.b16 %v3028, %v3026
        %v3063 = vpack.c.b16 %v3029, %v3027
        %v3064 = vpack.c.b16 %v3032, %v3030
        %v3065 = vpack.c.b16 %v3033, %v3031
        %3098 = vmatpush.bf16.msra.mxu0 %v3048
        %3099 = vmatpush.bf16.msra.mxu0 %v3046
        %3100 = vmatpush.bf16.msra.mxu0 %v3044
        %3101 = vmatpush.bf16.msra.mxu0 %v3042
        %3102 = vmatpush.bf16.msra.mxu0 %v3040
        %3103 = vmatpush.bf16.msra.mxu0 %v3038
        %3104 = vmatpush.bf16.msra.mxu0 %v3036
        %3105 = vmatpush.bf16.msra.mxu0 %v3034
        %3106 = vmatmul.bf16.gmra.mxu0 %v2896
        %v3107 = vpop.f32.mrf.mxu0
        %v3108 = vadd.f32 %v2934, %v3107
        %v3109 = vpop.f32.mrf.mxu0
        %3110 = vdwg.mxu0
        %3111 = vmatpush.bf16.msra.mxu0 %v3064
        %3112 = vmatpush.bf16.msra.mxu0 %v3062
        %3113 = vmatpush.bf16.msra.mxu0 %v3060
        %3114 = vmatpush.bf16.msra.mxu0 %v3058
        %3115 = vmatpush.bf16.msra.mxu0 %v3056
        %3116 = vmatpush.bf16.msra.mxu0 %v3054
        %3117 = vmatpush.bf16.msra.mxu0 %v3052
        %3118 = vmatpush.bf16.msra.mxu0 %v3050
        %3119 = vmatmul.bf16.gmra.mxu0 %v2897
        %v3120 = vpop.f32.mrf.mxu0
        %v3121 = vadd.f32 %v3108, %v3120
        %v3122 = vpop.f32.mrf.mxu0
        %3123 = vdwg.mxu0
        %3124 = vmatpush.bf16.msra.mxu0 %v3049
        %3125 = vmatpush.bf16.msra.mxu0 %v3047
        %3126 = vmatpush.bf16.msra.mxu0 %v3045
        %3127 = vmatpush.bf16.msra.mxu0 %v3043
        %3128 = vmatpush.bf16.msra.mxu0 %v3041
        %3129 = vmatpush.bf16.msra.mxu0 %v3039
        %3130 = vmatpush.bf16.msra.mxu0 %v3037
        %3131 = vmatpush.bf16.msra.mxu0 %v3035
        %3132 = vmatmul.bf16.gmra.mxu0 %v2896
        %v3133 = vpop.f32.mrf.mxu0
        %v3134 = vadd.f32 %v2935, %v3133
        %v3135 = vpop.f32.mrf.mxu0
        %3136 = vdwg.mxu0
        %3137 = vmatpush.bf16.msra.mxu0 %v3065
        %3138 = vmatpush.bf16.msra.mxu0 %v3063
        %3139 = vmatpush.bf16.msra.mxu0 %v3061
        %3140 = vmatpush.bf16.msra.mxu0 %v3059
        %3141 = vmatpush.bf16.msra.mxu0 %v3057
        %3142 = vmatpush.bf16.msra.mxu0 %v3055
        %3143 = vmatpush.bf16.msra.mxu0 %v3053
        %3144 = vmatpush.bf16.msra.mxu0 %v3051
        %3145 = vmatmul.bf16.gmra.mxu0 %v2897
        %v3146 = vpop.f32.mrf.mxu0
        %v3147 = vadd.f32 %v3134, %v3146
        %v3148 = vpop.f32.mrf.mxu0
        %3149 = vdwg.mxu0
        %v3150 = vmax.f32 %v3121, 0.0
        %v3151 = vmax.f32 %v3147, 0.0
        %v3152 = vpack.c.bf16 %v3150, %v3150
        %v3153 = vpack.c.bf16 %v3151, %v3151
        %s3154 = scalar_lea.vmem [#allocation5], 2048
        %v3155 = vld [vmem:[%s3154] sm:$0xff]
        %v3156 = vld [vmem:[%s3154 + $0x8] sm:$0xff]
        %v3157 = vld [vmem:[%s3154 + $0x10] sm:$0xff]
        %v3158 = vld [vmem:[%s3154 + $0x18] sm:$0xff]
        %v3159 = vld [vmem:[%s3154 + $0x20] sm:$0xff]
        %v3160 = vld [vmem:[%s3154 + $0x28] sm:$0xff]
        %v3161 = vld [vmem:[%s3154 + $0x30] sm:$0xff]
        %v3162 = vld [vmem:[%s3154 + $0x38] sm:$0xff]
        %v3163 = vld [vmem:[%s3154 + $0x40] sm:$0xff]
        %v3164 = vld [vmem:[%s3154 + $0x48] sm:$0xff]
        %v3165 = vld [vmem:[%s3154 + $0x50] sm:$0xff]
        %v3166 = vld [vmem:[%s3154 + $0x58] sm:$0xff]
        %v3167 = vld [vmem:[%s3154 + $0x60] sm:$0xff]
        %v3168 = vld [vmem:[%s3154 + $0x68] sm:$0xff]
        %v3169 = vld [vmem:[%s3154 + $0x70] sm:$0xff]
        %v3170 = vld [vmem:[%s3154 + $0x78] sm:$0xff]
        %v3171 = vld [vmem:[%s3154 + $0x80] sm:$0xff]
        %v3172 = vld [vmem:[%s3154 + $0x88] sm:$0xff]
        %v3173 = vld [vmem:[%s3154 + $0x90] sm:$0xff]
        %v3174 = vld [vmem:[%s3154 + $0x98] sm:$0xff]
        %v3175 = vld [vmem:[%s3154 + $0xa0] sm:$0xff]
        %v3176 = vld [vmem:[%s3154 + $0xa8] sm:$0xff]
        %v3177 = vld [vmem:[%s3154 + $0xb0] sm:$0xff]
        %v3178 = vld [vmem:[%s3154 + $0xb8] sm:$0xff]
        %v3179 = vld [vmem:[%s3154 + $0xc0] sm:$0xff]
        %v3180 = vld [vmem:[%s3154 + $0xc8] sm:$0xff]
        %v3181 = vld [vmem:[%s3154 + $0xd0] sm:$0xff]
        %v3182 = vld [vmem:[%s3154 + $0xd8] sm:$0xff]
        %v3183 = vld [vmem:[%s3154 + $0xe0] sm:$0xff]
        %v3184 = vld [vmem:[%s3154 + $0xe8] sm:$0xff]
        %v3185 = vld [vmem:[%s3154 + $0xf0] sm:$0xff]
        %v3186 = vld [vmem:[%s3154 + $0xf8] sm:$0xff]
        %s3187 = scalar_lea.vmem [#allocation7], 16
        %v3188 = vld [vmem:[%s3187] sm:$0x3]
        %v3221 = vunpack.c.l.b16 %v3155
        %v3222 = vunpack.c.h.b16 %v3155
        %v3223 = vunpack.c.l.b16 %v3156
        %v3224 = vunpack.c.h.b16 %v3156
        %v3225 = vunpack.c.l.b16 %v3157
        %v3226 = vunpack.c.h.b16 %v3157
        %v3227 = vunpack.c.l.b16 %v3158
        %v3228 = vunpack.c.h.b16 %v3158
        %v3229 = vunpack.c.l.b16 %v3159
        %v3230 = vunpack.c.h.b16 %v3159
        %v3231 = vunpack.c.l.b16 %v3160
        %v3232 = vunpack.c.h.b16 %v3160
        %v3233 = vunpack.c.l.b16 %v3161
        %v3234 = vunpack.c.h.b16 %v3161
        %v3235 = vunpack.c.l.b16 %v3162
        %v3236 = vunpack.c.h.b16 %v3162
        %v3237 = vunpack.c.l.b16 %v3163
        %v3238 = vunpack.c.h.b16 %v3163
        %v3239 = vunpack.c.l.b16 %v3164
        %v3240 = vunpack.c.h.b16 %v3164
        %v3241 = vunpack.c.l.b16 %v3165
        %v3242 = vunpack.c.h.b16 %v3165
        %v3243 = vunpack.c.l.b16 %v3166
        %v3244 = vunpack.c.h.b16 %v3166
        %v3245 = vunpack.c.l.b16 %v3167
        %v3246 = vunpack.c.h.b16 %v3167
        %v3247 = vunpack.c.l.b16 %v3168
        %v3248 = vunpack.c.h.b16 %v3168
        %v3249 = vunpack.c.l.b16 %v3169
        %v3250 = vunpack.c.h.b16 %v3169
        %v3251 = vunpack.c.l.b16 %v3170
        %v3252 = vunpack.c.h.b16 %v3170
        %v3253 = vunpack.c.l.b16 %v3171
        %v3254 = vunpack.c.h.b16 %v3171
        %v3255 = vunpack.c.l.b16 %v3172
        %v3256 = vunpack.c.h.b16 %v3172
        %v3257 = vunpack.c.l.b16 %v3173
        %v3258 = vunpack.c.h.b16 %v3173
        %v3259 = vunpack.c.l.b16 %v3174
        %v3260 = vunpack.c.h.b16 %v3174
        %v3261 = vunpack.c.l.b16 %v3175
        %v3262 = vunpack.c.h.b16 %v3175
        %v3263 = vunpack.c.l.b16 %v3176
        %v3264 = vunpack.c.h.b16 %v3176
        %v3265 = vunpack.c.l.b16 %v3177
        %v3266 = vunpack.c.h.b16 %v3177
        %v3267 = vunpack.c.l.b16 %v3178
        %v3268 = vunpack.c.h.b16 %v3178
        %v3269 = vunpack.c.l.b16 %v3179
        %v3270 = vunpack.c.h.b16 %v3179
        %v3271 = vunpack.c.l.b16 %v3180
        %v3272 = vunpack.c.h.b16 %v3180
        %v3273 = vunpack.c.l.b16 %v3181
        %v3274 = vunpack.c.h.b16 %v3181
        %v3275 = vunpack.c.l.b16 %v3182
        %v3276 = vunpack.c.h.b16 %v3182
        %v3277 = vunpack.c.l.b16 %v3183
        %v3278 = vunpack.c.h.b16 %v3183
        %v3279 = vunpack.c.l.b16 %v3184
        %v3280 = vunpack.c.h.b16 %v3184
        %v3281 = vunpack.c.l.b16 %v3185
        %v3282 = vunpack.c.h.b16 %v3185
        %v3283 = vunpack.c.l.b16 %v3186
        %v3284 = vunpack.c.h.b16 %v3186
        %v3285 = vpack.c.b16 %v3223, %v3221
        %v3286 = vpack.c.b16 %v3224, %v3222
        %v3287 = vpack.c.b16 %v3227, %v3225
        %v3288 = vpack.c.b16 %v3228, %v3226
        %v3289 = vpack.c.b16 %v3231, %v3229
        %v3290 = vpack.c.b16 %v3232, %v3230
        %v3291 = vpack.c.b16 %v3235, %v3233
        %v3292 = vpack.c.b16 %v3236, %v3234
        %v3293 = vpack.c.b16 %v3239, %v3237
        %v3294 = vpack.c.b16 %v3240, %v3238
        %v3295 = vpack.c.b16 %v3243, %v3241
        %v3296 = vpack.c.b16 %v3244, %v3242
        %v3297 = vpack.c.b16 %v3247, %v3245
        %v3298 = vpack.c.b16 %v3248, %v3246
        %v3299 = vpack.c.b16 %v3251, %v3249
        %v3300 = vpack.c.b16 %v3252, %v3250
        %v3301 = vpack.c.b16 %v3255, %v3253
        %v3302 = vpack.c.b16 %v3256, %v3254
        %v3303 = vpack.c.b16 %v3259, %v3257
        %v3304 = vpack.c.b16 %v3260, %v3258
        %v3305 = vpack.c.b16 %v3263, %v3261
        %v3306 = vpack.c.b16 %v3264, %v3262
        %v3307 = vpack.c.b16 %v3267, %v3265
        %v3308 = vpack.c.b16 %v3268, %v3266
        %v3309 = vpack.c.b16 %v3271, %v3269
        %v3310 = vpack.c.b16 %v3272, %v3270
        %v3311 = vpack.c.b16 %v3275, %v3273
        %v3312 = vpack.c.b16 %v3276, %v3274
        %v3313 = vpack.c.b16 %v3279, %v3277
        %v3314 = vpack.c.b16 %v3280, %v3278
        %v3315 = vpack.c.b16 %v3283, %v3281
        %v3316 = vpack.c.b16 %v3284, %v3282
        %v3350 = vperm.slane %v3188, 0
        %v3351 = vperm.slane %v3188, 1
        %3354 = vmatpush.bf16.msra.mxu0 %v3299
        %3355 = vmatpush.bf16.msra.mxu0 %v3297
        %3356 = vmatpush.bf16.msra.mxu0 %v3295
        %3357 = vmatpush.bf16.msra.mxu0 %v3293
        %3358 = vmatpush.bf16.msra.mxu0 %v3291
        %3359 = vmatpush.bf16.msra.mxu0 %v3289
        %3360 = vmatpush.bf16.msra.mxu0 %v3287
        %3361 = vmatpush.bf16.msra.mxu0 %v3285
        %3362 = vmatmul.bf16.gmra.mxu0 %v3152
        %v3363 = vpop.f32.mrf.mxu0
        %v3364 = vadd.f32 %v3350, %v3363
        %v3365 = vpop.f32.mrf.mxu0
        %3366 = vdwg.mxu0
        %3367 = vmatpush.bf16.msra.mxu0 %v3315
        %3368 = vmatpush.bf16.msra.mxu0 %v3313
        %3369 = vmatpush.bf16.msra.mxu0 %v3311
        %3370 = vmatpush.bf16.msra.mxu0 %v3309
        %3371 = vmatpush.bf16.msra.mxu0 %v3307
        %3372 = vmatpush.bf16.msra.mxu0 %v3305
        %3373 = vmatpush.bf16.msra.mxu0 %v3303
        %3374 = vmatpush.bf16.msra.mxu0 %v3301
        %3375 = vmatmul.bf16.gmra.mxu0 %v3153
        %v3376 = vpop.f32.mrf.mxu0
        %v3377 = vadd.f32 %v3364, %v3376
        %v3378 = vpop.f32.mrf.mxu0
        %3379 = vdwg.mxu0
        %3380 = vmatpush.bf16.msra.mxu0 %v3300
        %3381 = vmatpush.bf16.msra.mxu0 %v3298
        %3382 = vmatpush.bf16.msra.mxu0 %v3296
        %3383 = vmatpush.bf16.msra.mxu0 %v3294
        %3384 = vmatpush.bf16.msra.mxu0 %v3292
        %3385 = vmatpush.bf16.msra.mxu0 %v3290
        %3386 = vmatpush.bf16.msra.mxu0 %v3288
        %3387 = vmatpush.bf16.msra.mxu0 %v3286
        %3388 = vmatmul.bf16.gmra.mxu0 %v3152
        %v3389 = vpop.f32.mrf.mxu0
        %v3390 = vadd.f32 %v3351, %v3389
        %v3391 = vpop.f32.mrf.mxu0
        %3392 = vdwg.mxu0
        %3393 = vmatpush.bf16.msra.mxu0 %v3316
        %3394 = vmatpush.bf16.msra.mxu0 %v3314
        %3395 = vmatpush.bf16.msra.mxu0 %v3312
        %3396 = vmatpush.bf16.msra.mxu0 %v3310
        %3397 = vmatpush.bf16.msra.mxu0 %v3308
        %3398 = vmatpush.bf16.msra.mxu0 %v3306
        %3399 = vmatpush.bf16.msra.mxu0 %v3304
        %3400 = vmatpush.bf16.msra.mxu0 %v3302
        %3401 = vmatmul.bf16.gmra.mxu0 %v3153
        %v3402 = vpop.f32.mrf.mxu0
        %v3403 = vadd.f32 %v3390, %v3402
        %v3404 = vpop.f32.mrf.mxu0
        %3405 = vdwg.mxu0
        %v3406 = vmax.f32 %v3377, 0.0
        %v3407 = vmax.f32 %v3403, 0.0
        %v3408 = vadd.f32 %v3406, 0.0
        %v3409 = vadd.f32 %v3407, 0.0
        %v3410 = vpack.c.bf16 %v3408, %v3408
        %v3411 = vpack.c.bf16 %v3409, %v3409
        %s3412 = scalar_lea.vmem [#allocation5], 2304
        %v3413 = vld [vmem:[%s3412] sm:$0xff]
        %v3414 = vld [vmem:[%s3412 + $0x8] sm:$0xff]
        %v3415 = vld [vmem:[%s3412 + $0x10] sm:$0xff]
        %v3416 = vld [vmem:[%s3412 + $0x18] sm:$0xff]
        %v3417 = vld [vmem:[%s3412 + $0x20] sm:$0xff]
        %v3418 = vld [vmem:[%s3412 + $0x28] sm:$0xff]
        %v3419 = vld [vmem:[%s3412 + $0x30] sm:$0xff]
        %v3420 = vld [vmem:[%s3412 + $0x38] sm:$0xff]
        %v3421 = vld [vmem:[%s3412 + $0x40] sm:$0xff]
        %v3422 = vld [vmem:[%s3412 + $0x48] sm:$0xff]
        %v3423 = vld [vmem:[%s3412 + $0x50] sm:$0xff]
        %v3424 = vld [vmem:[%s3412 + $0x58] sm:$0xff]
        %v3425 = vld [vmem:[%s3412 + $0x60] sm:$0xff]
        %v3426 = vld [vmem:[%s3412 + $0x68] sm:$0xff]
        %v3427 = vld [vmem:[%s3412 + $0x70] sm:$0xff]
        %v3428 = vld [vmem:[%s3412 + $0x78] sm:$0xff]
        %v3429 = vld [vmem:[%s3412 + $0x80] sm:$0xff]
        %v3430 = vld [vmem:[%s3412 + $0x88] sm:$0xff]
        %v3431 = vld [vmem:[%s3412 + $0x90] sm:$0xff]
        %v3432 = vld [vmem:[%s3412 + $0x98] sm:$0xff]
        %v3433 = vld [vmem:[%s3412 + $0xa0] sm:$0xff]
        %v3434 = vld [vmem:[%s3412 + $0xa8] sm:$0xff]
        %v3435 = vld [vmem:[%s3412 + $0xb0] sm:$0xff]
        %v3436 = vld [vmem:[%s3412 + $0xb8] sm:$0xff]
        %v3437 = vld [vmem:[%s3412 + $0xc0] sm:$0xff]
        %v3438 = vld [vmem:[%s3412 + $0xc8] sm:$0xff]
        %v3439 = vld [vmem:[%s3412 + $0xd0] sm:$0xff]
        %v3440 = vld [vmem:[%s3412 + $0xd8] sm:$0xff]
        %v3441 = vld [vmem:[%s3412 + $0xe0] sm:$0xff]
        %v3442 = vld [vmem:[%s3412 + $0xe8] sm:$0xff]
        %v3443 = vld [vmem:[%s3412 + $0xf0] sm:$0xff]
        %v3444 = vld [vmem:[%s3412 + $0xf8] sm:$0xff]
        %s3445 = scalar_lea.vmem [#allocation7], 18
        %v3446 = vld [vmem:[%s3445] sm:$0x3]
        %v3479 = vunpack.c.l.b16 %v3413
        %v3480 = vunpack.c.h.b16 %v3413
        %v3481 = vunpack.c.l.b16 %v3414
        %v3482 = vunpack.c.h.b16 %v3414
        %v3483 = vunpack.c.l.b16 %v3415
        %v3484 = vunpack.c.h.b16 %v3415
        %v3485 = vunpack.c.l.b16 %v3416
        %v3486 = vunpack.c.h.b16 %v3416
        %v3487 = vunpack.c.l.b16 %v3417
        %v3488 = vunpack.c.h.b16 %v3417
        %v3489 = vunpack.c.l.b16 %v3418
        %v3490 = vunpack.c.h.b16 %v3418
        %v3491 = vunpack.c.l.b16 %v3419
        %v3492 = vunpack.c.h.b16 %v3419
        %v3493 = vunpack.c.l.b16 %v3420
        %v3494 = vunpack.c.h.b16 %v3420
        %v3495 = vunpack.c.l.b16 %v3421
        %v3496 = vunpack.c.h.b16 %v3421
        %v3497 = vunpack.c.l.b16 %v3422
        %v3498 = vunpack.c.h.b16 %v3422
        %v3499 = vunpack.c.l.b16 %v3423
        %v3500 = vunpack.c.h.b16 %v3423
        %v3501 = vunpack.c.l.b16 %v3424
        %v3502 = vunpack.c.h.b16 %v3424
        %v3503 = vunpack.c.l.b16 %v3425
        %v3504 = vunpack.c.h.b16 %v3425
        %v3505 = vunpack.c.l.b16 %v3426
        %v3506 = vunpack.c.h.b16 %v3426
        %v3507 = vunpack.c.l.b16 %v3427
        %v3508 = vunpack.c.h.b16 %v3427
        %v3509 = vunpack.c.l.b16 %v3428
        %v3510 = vunpack.c.h.b16 %v3428
        %v3511 = vunpack.c.l.b16 %v3429
        %v3512 = vunpack.c.h.b16 %v3429
        %v3513 = vunpack.c.l.b16 %v3430
        %v3514 = vunpack.c.h.b16 %v3430
        %v3515 = vunpack.c.l.b16 %v3431
        %v3516 = vunpack.c.h.b16 %v3431
        %v3517 = vunpack.c.l.b16 %v3432
        %v3518 = vunpack.c.h.b16 %v3432
        %v3519 = vunpack.c.l.b16 %v3433
        %v3520 = vunpack.c.h.b16 %v3433
        %v3521 = vunpack.c.l.b16 %v3434
        %v3522 = vunpack.c.h.b16 %v3434
        %v3523 = vunpack.c.l.b16 %v3435
        %v3524 = vunpack.c.h.b16 %v3435
        %v3525 = vunpack.c.l.b16 %v3436
        %v3526 = vunpack.c.h.b16 %v3436
        %v3527 = vunpack.c.l.b16 %v3437
        %v3528 = vunpack.c.h.b16 %v3437
        %v3529 = vunpack.c.l.b16 %v3438
        %v3530 = vunpack.c.h.b16 %v3438
        %v3531 = vunpack.c.l.b16 %v3439
        %v3532 = vunpack.c.h.b16 %v3439
        %v3533 = vunpack.c.l.b16 %v3440
        %v3534 = vunpack.c.h.b16 %v3440
        %v3535 = vunpack.c.l.b16 %v3441
        %v3536 = vunpack.c.h.b16 %v3441
        %v3537 = vunpack.c.l.b16 %v3442
        %v3538 = vunpack.c.h.b16 %v3442
        %v3539 = vunpack.c.l.b16 %v3443
        %v3540 = vunpack.c.h.b16 %v3443
        %v3541 = vunpack.c.l.b16 %v3444
        %v3542 = vunpack.c.h.b16 %v3444
        %v3543 = vpack.c.b16 %v3481, %v3479
        %v3544 = vpack.c.b16 %v3482, %v3480
        %v3545 = vpack.c.b16 %v3485, %v3483
        %v3546 = vpack.c.b16 %v3486, %v3484
        %v3547 = vpack.c.b16 %v3489, %v3487
        %v3548 = vpack.c.b16 %v3490, %v3488
        %v3549 = vpack.c.b16 %v3493, %v3491
        %v3550 = vpack.c.b16 %v3494, %v3492
        %v3551 = vpack.c.b16 %v3497, %v3495
        %v3552 = vpack.c.b16 %v3498, %v3496
        %v3553 = vpack.c.b16 %v3501, %v3499
        %v3554 = vpack.c.b16 %v3502, %v3500
        %v3555 = vpack.c.b16 %v3505, %v3503
        %v3556 = vpack.c.b16 %v3506, %v3504
        %v3557 = vpack.c.b16 %v3509, %v3507
        %v3558 = vpack.c.b16 %v3510, %v3508
        %v3559 = vpack.c.b16 %v3513, %v3511
        %v3560 = vpack.c.b16 %v3514, %v3512
        %v3561 = vpack.c.b16 %v3517, %v3515
        %v3562 = vpack.c.b16 %v3518, %v3516
        %v3563 = vpack.c.b16 %v3521, %v3519
        %v3564 = vpack.c.b16 %v3522, %v3520
        %v3565 = vpack.c.b16 %v3525, %v3523
        %v3566 = vpack.c.b16 %v3526, %v3524
        %v3567 = vpack.c.b16 %v3529, %v3527
        %v3568 = vpack.c.b16 %v3530, %v3528
        %v3569 = vpack.c.b16 %v3533, %v3531
        %v3570 = vpack.c.b16 %v3534, %v3532
        %v3571 = vpack.c.b16 %v3537, %v3535
        %v3572 = vpack.c.b16 %v3538, %v3536
        %v3573 = vpack.c.b16 %v3541, %v3539
        %v3574 = vpack.c.b16 %v3542, %v3540
        %v3608 = vperm.slane %v3446, 0
        %v3609 = vperm.slane %v3446, 1
        %3612 = vmatpush.bf16.msra.mxu0 %v3557
        %3613 = vmatpush.bf16.msra.mxu0 %v3555
        %3614 = vmatpush.bf16.msra.mxu0 %v3553
        %3615 = vmatpush.bf16.msra.mxu0 %v3551
        %3616 = vmatpush.bf16.msra.mxu0 %v3549
        %3617 = vmatpush.bf16.msra.mxu0 %v3547
        %3618 = vmatpush.bf16.msra.mxu0 %v3545
        %3619 = vmatpush.bf16.msra.mxu0 %v3543
        %3620 = vmatmul.bf16.gmra.mxu0 %v3410
        %v3621 = vpop.f32.mrf.mxu0
        %v3622 = vadd.f32 %v3608, %v3621
        %v3623 = vpop.f32.mrf.mxu0
        %3624 = vdwg.mxu0
        %3625 = vmatpush.bf16.msra.mxu0 %v3573
        %3626 = vmatpush.bf16.msra.mxu0 %v3571
        %3627 = vmatpush.bf16.msra.mxu0 %v3569
        %3628 = vmatpush.bf16.msra.mxu0 %v3567
        %3629 = vmatpush.bf16.msra.mxu0 %v3565
        %3630 = vmatpush.bf16.msra.mxu0 %v3563
        %3631 = vmatpush.bf16.msra.mxu0 %v3561
        %3632 = vmatpush.bf16.msra.mxu0 %v3559
        %3633 = vmatmul.bf16.gmra.mxu0 %v3411
        %v3634 = vpop.f32.mrf.mxu0
        %v3635 = vadd.f32 %v3622, %v3634
        %v3636 = vpop.f32.mrf.mxu0
        %3637 = vdwg.mxu0
        %3638 = vmatpush.bf16.msra.mxu0 %v3558
        %3639 = vmatpush.bf16.msra.mxu0 %v3556
        %3640 = vmatpush.bf16.msra.mxu0 %v3554
        %3641 = vmatpush.bf16.msra.mxu0 %v3552
        %3642 = vmatpush.bf16.msra.mxu0 %v3550
        %3643 = vmatpush.bf16.msra.mxu0 %v3548
        %3644 = vmatpush.bf16.msra.mxu0 %v3546
        %3645 = vmatpush.bf16.msra.mxu0 %v3544
        %3646 = vmatmul.bf16.gmra.mxu0 %v3410
        %v3647 = vpop.f32.mrf.mxu0
        %v3648 = vadd.f32 %v3609, %v3647
        %v3649 = vpop.f32.mrf.mxu0
        %3650 = vdwg.mxu0
        %3651 = vmatpush.bf16.msra.mxu0 %v3574
        %3652 = vmatpush.bf16.msra.mxu0 %v3572
        %3653 = vmatpush.bf16.msra.mxu0 %v3570
        %3654 = vmatpush.bf16.msra.mxu0 %v3568
        %3655 = vmatpush.bf16.msra.mxu0 %v3566
        %3656 = vmatpush.bf16.msra.mxu0 %v3564
        %3657 = vmatpush.bf16.msra.mxu0 %v3562
        %3658 = vmatpush.bf16.msra.mxu0 %v3560
        %3659 = vmatmul.bf16.gmra.mxu0 %v3411
        %v3660 = vpop.f32.mrf.mxu0
        %v3661 = vadd.f32 %v3648, %v3660
        %v3662 = vpop.f32.mrf.mxu0
        %3663 = vdwg.mxu0
        %v3664 = vxor.u32 %v3635, 2147483648
        %v3665 = vxor.u32 %v3661, 2147483648
        %v3666 = vmul.f32 %v3664, 1.442695
        %v3667 = vpow.pop %v3666
        %v3668 = vmul.f32 %v3665, 1.442695
        %v3669 = vpow.pop %v3668
        %v3670 = vadd.f32 %v3667, 1.0
        %v3671 = vadd.f32 %v3669, 1.0
        %v3672 = vrcp.pop %v3670
        %v3673 = vmul.f32 %v3670, %v3672
        %v3674 = vsub.f32 1.0, %v3673
        %v3675 = vmul.f32 %v3672, %v3674
        %v3676 = vadd.f32 %v3672, %v3675
        %vm3677 = vweird.f32 %v3670
        %vm3678 = vweird.f32 %v3672
        %vm3679 = vmor %vm3677, %vm3678
        %v3680 = vsel %vm3679, %v3672, %v3676
        %v3681 = vand.u32 2147483647, %v3670
        %vm3682 = vcmp.eq.f32.partialorder %v3681, 8.507059e+37
        %v3683 = vand.u32 %v3670, 2147483648
        %v3684 = vor.u32 1.1754944e-38, %v3683
        %v3685 = vsel %vm3682, %v3684, %v3680
        %v3686 = vmul.f32 1.0, %v3685
        %v3687 = vrcp.pop %v3671
        %v3688 = vmul.f32 %v3671, %v3687
        %v3689 = vsub.f32 1.0, %v3688
        %v3690 = vmul.f32 %v3687, %v3689
        %v3691 = vadd.f32 %v3687, %v3690
        %vm3692 = vweird.f32 %v3671
        %vm3693 = vweird.f32 %v3687
        %vm3694 = vmor %vm3692, %vm3693
        %v3695 = vsel %vm3694, %v3687, %v3691
        %v3696 = vand.u32 2147483647, %v3671
        %vm3697 = vcmp.eq.f32.partialorder %v3696, 8.507059e+37
        %v3698 = vand.u32 %v3671, 2147483648
        %v3699 = vor.u32 1.1754944e-38, %v3698
        %v3700 = vsel %vm3697, %v3699, %v3695
        %v3701 = vmul.f32 1.0, %v3700
        %v3702 = vperm.slane %v3686, 0
        %v3703 = vperm.slane %v3701, 0
        %3704 = vst [vmem:[%s223] sm:$0xff] %v3702
        %3705 = vst [vmem:[%s223 + $0x8] sm:$0xff] %v3703
        %s3706 = sand.u32 %s97, 1
        %s3707 = scalar_lea.sflag [#allocation4], %s3706
        %s3708 = sand.u32 %s97, 1
        %s3709 = smul.addr %s3708, 16
        %s3710 = scalar_lea.vmem [#allocation8], %s3709
        // Predicated region
        $region45: #{tpu_custom_call.1} parent=31 // pred_check
          %p3711 = pneg %p107
        $region46: #{tpu_custom_call.1} parent=31 // pred_check_branch
          %3713 = sbr.rel (%p3711) target = $region48
        $region47: #{tpu_custom_call.1} parent=31 // pred_region
          %3715 = vsyncadd %s3707, 0
          %s3716 = smul.addr %s21, 2
          %s3717 = smul.addr %s3716, 8
          %s3718 = scalar_lea.hbm %s3, %s3717
          %s3720 = sshll.u32 %s3710, 4
          %s3721 = int_to_ptr.vmem [resolvable:$true] %s3720
          %s3722 = sshll.u32 %s3718, 4
          %s3723 = int_to_ptr.hbm [resolvable:$true] %s3722
          %3725 = dma.vmem_to_hbm [thread:$0]  %s3721, 256, %s3723, %s3707
        $region48: #{tpu_custom_call.1} parent=31 // pred_fallthru
          _
      $region32: #{tpu_custom_call.1} parent=5 // pred_fallthru
        _
      %p3726 = scmp.le.s32.totalorder 2, %s16
      // Predicated region
      $region49: #{tpu_custom_call.1} parent=5 // pred_check
        %p3727 = pneg %p3726
      $region50: #{tpu_custom_call.1} parent=5 // pred_check_branch
        %3729 = sbr.rel (%p3727) target = $region52
      $region51: #{tpu_custom_call.1} parent=5 // pred_region
        %s3730 = ssub.s32 %s16, 2
        // Predicated region
        $region53: #{tpu_custom_call.1} parent=51 // pred_check
          %p3731 = pneg %p113
        $region54: #{tpu_custom_call.1} parent=51 // pred_check_branch
          %3733 = sbr.rel (%p3731) target = $region56
        $region55: #{tpu_custom_call.1} parent=51 // pred_region
          %s3734 = sand.u32 %s98, 1
          %s3735 = scalar_lea.sflag [#allocation4], %s3734
          %s3736 = sand.u32 %s98, 1
          %s3737 = smul.addr %s3736, 16
          %s3738 = scalar_lea.vmem [#allocation8], %s3737
          %3740 = dma.done %s3735, 256
        $region56: #{tpu_custom_call.1} parent=51 // pred_fallthru
          _
      $region52: #{tpu_custom_call.1} parent=5 // pred_fallthru
        _
    $region6: #{tpu_custom_call.1} parent=1 // loop_footer
      %s20 = sadd.s32 1, %s16
    $region7: #{tpu_custom_call.1} parent=1 // loop_footer_branch
      %15 = sbr.rel target = $region3
    $region8: #{tpu_custom_call.1} parent=1 // loop_exit
      _
    %3741 = vsyncpa [#allocation3], 1
    %s3742 = scalar_lea.sflag [#allocation3], 1
    %3743 = vsyncpa %s3742, 1
    %3744 = vsyncpa [#allocation6], 1
    %3745 = vsyncpa [#allocation4], 1
    %s3746 = scalar_lea.sflag [#allocation4], 1
    %3747 = vsyncpa %s3746, 1

</llo_original>
